<compile_context>
chip_gen: v7x
topology: tpu7x:2x2x1
jax: 0.10.0
libtpu: 0.0.40
codegen_flags: <defaults>
</compile_context>

<pallas_src>
import jax
import jax.numpy as jnp
from jax import lax
from jax.experimental import pallas as pl
from jax.experimental.pallas import tpu as pltpu

# ---------------- model config ----------------
IN_CH = 1
NODE_DIM = 64
L0 = 128          # input signal length (must be divisible by 16 for the 4 maxpools)
BATCH = 4

# (cin, cout, kernel, pad) for the 4 conv layers
LAYERS = [(IN_CH, 8, 7, 3), (8, 16, 5, 2), (16, 32, 3, 1), (32, 64, 3, 1)]

W_LANES = 64      # lane width of the packed weight slab (max contraction dim = 64)
BIAS_COLS = 8     # bias slab columns (4 conv layers + projection, padded to 8)


def _round8(n):
    return ((n + 7) // 8) * 8


# Row offset of tap t of layer l inside the packed weight slab. Each tap owns a
# (cout, cin) block stacked along sublanes (all couts are multiples of 8, so
# every slice offset stays 8-aligned).
_W_TAP_OFFS = []
_off = 0
for (_cin, _cout, _k, _pad) in LAYERS:
    _W_TAP_OFFS.append([_off + _t * _cout for _t in range(_k)])
    _off += _k * _cout
_WP_OFF = _off        # projection weight rows start here


# ---------------- kernel ----------------
def _make_kernel(rows_per_step, node_dim):
    """Kernel closure: processes `rows_per_step` batch rows per grid step."""
    out_rows = _round8(node_dim)
    n_layers = len(LAYERS)

    def kernel(x_ref, w_ref, b_ref, sel_ref, o_ref):
        f32 = jnp.float32
        width = x_ref.shape[2]                                     # constant lane width
        col = lax.broadcasted_iota(jnp.int32, (1, width), 1)       # lane index row
        sel = sel_ref[...]                                         # (width, width)
        wp = w_ref[_WP_OFF:_WP_OFF + out_rows, 0:64].astype(f32)   # (out_rows, 64)
        bp = b_ref[0:out_rows, n_layers:n_layers + 1]              # (out_rows, 1)

        def conv_relu(h, layer_idx, live):
            cin, cout, k, pad = LAYERS[layer_idx]
            acc = None
            for t in range(k):
                s = pad - t            # tap value: x[:, i + t - pad] == roll by s
                if s == 0:
                    xt = h
                else:
                    xt = pltpu.roll(h, shift=s % width, axis=1)
                    if s > 0:          # zero the wrapped-in head lanes (conv zero pad)
                        xt = jnp.where(col >= s, xt, 0.0)
                    else:              # zero the wrapped-in tail lanes
                        xt = jnp.where(col < live + s, xt, 0.0)
                off = _W_TAP_OFFS[layer_idx][t]
                wt = w_ref[off:off + cout, 0:cin].astype(f32)      # (cout, cin)
                if cin == 1:           # rank-1 tap: broadcast FMA on the VPU
                    term = wt * xt
                else:
                    term = jnp.dot(wt, xt, preferred_element_type=f32)
                acc = term if acc is None else acc + term
            bias = b_ref[0:cout, layer_idx:layer_idx + 1]          # (cout, 1)
            return jnp.maximum(acc + bias, 0.0)

        for r in range(rows_per_step):
            h = x_ref[r].astype(f32)                               # (IN_CH, width)
            live = width                                           # valid lane prefix
            for l in range(n_layers):
                h = conv_relu(h, l, live)
                # MaxPool1d(2): pairwise max, then compact even lanes with one
                # selection matmul. Lane `width-1` (roll wraparound) is odd and
                # never selected; lanes >= live hold finite junk and are never
                # selected into the live prefix either.
                m = jnp.maximum(h, pltpu.roll(h, shift=width - 1, axis=1))
                h = jnp.dot(m, sel, preferred_element_type=f32)    # live -> live // 2
                live //= 2
            # AdaptiveAvgPool1d(1) + Linear, folded: Wp @ mean(h) == mean(Wp @ h).
            hm = jnp.where(col < live, h, 0.0)                     # drop dead lanes
            proj = jnp.dot(wp, hm, preferred_element_type=f32)     # (out_rows, width)
            out = jnp.sum(proj, axis=1, keepdims=True) * (1.0 / live) + bp
            o_ref[r] = out.astype(o_ref.dtype)

    return kernel


# ---------------- parameter packing ----------------
def _pack_params(params, node_dim):
    """Pack conv/proj weights into one bf16 (rows, 64) slab; biases into f32 (64, 8)."""
    out_rows = _round8(node_dim)
    w_slab = jnp.zeros((_WP_OFF + out_rows, W_LANES), jnp.float32)
    b_slab = jnp.zeros((max(64, out_rows), BIAS_COLS), jnp.float32)
    for l, ((cin, cout, k, _pad), (w, b)) in enumerate(zip(LAYERS, params[:4])):
        for t in range(k):
            off = _W_TAP_OFFS[l][t]
            w_slab = w_slab.at[off:off + cout, :cin].set(w[:, :, t])   # (cout, cin)
        b_slab = b_slab.at[:cout, l].set(b)
    wp, bp = params[4]
    w_slab = w_slab.at[_WP_OFF:_WP_OFF + node_dim, :64].set(wp)
    b_slab = b_slab.at[:node_dim, len(LAYERS)].set(bp)
    return w_slab.astype(jnp.bfloat16), b_slab


def _even_lane_selector(length):
    """(L, L) matrix S with S[2j, j] = 1: right-multiplying keeps the even lanes."""
    i = jnp.arange(length)[:, None]
    j = jnp.arange(length)[None, :]
    return (i == 2 * j).astype(jnp.float32)


# ---------------- wrapper ----------------
def lead_encoder_forward(x_ncw, params, node_dim=NODE_DIM, rows_per_step=None):
    """x_ncw: (B, IN_CH, L) float32 (PyTorch NCW layout). Returns (B, node_dim)."""
    b_dim, c_in, length = x_ncw.shape
    assert c_in == IN_CH
    assert length % 16 == 0, "length must survive 4 MaxPool1d(2) stages"
    out_rows = _round8(node_dim)

    if rows_per_step is None:
        # At most 2 grid steps: keeps both v7x TensorCores busy (when B >= 2)
        # while paying near-minimal per-step overhead on single-core v5e/v6e.
        rows_per_step = b_dim // 2 if (b_dim >= 2 and b_dim % 2 == 0) else 1
    assert b_dim % rows_per_step == 0
    grid = (b_dim // rows_per_step,)

    x = x_ncw.astype(jnp.float32)
    w_slab, b_slab = _pack_params(params, node_dim)
    sel = _even_lane_selector(length)

    out = pl.pallas_call(
        _make_kernel(rows_per_step, node_dim),
        out_shape=jax.ShapeDtypeStruct((b_dim, out_rows, 1), jnp.float32),
        grid_spec=pltpu.PrefetchScalarGridSpec(
            num_scalar_prefetch=0,
            grid=grid,
            in_specs=[
                pl.BlockSpec((rows_per_step, IN_CH, length), lambda i: (i, 0, 0)),
                pl.BlockSpec(w_slab.shape, lambda i: (0, 0)),    # resident weights
                pl.BlockSpec(b_slab.shape, lambda i: (0, 0)),    # resident biases
                pl.BlockSpec(sel.shape, lambda i: (0, 0)),       # resident selector
            ],
            out_specs=pl.BlockSpec((rows_per_step, out_rows, 1),
                                   lambda i: (i, 0, 0))),
        compiler_params=pltpu.CompilerParams(
            dimension_semantics=("parallel",)),
    )(x, w_slab, b_slab, sel)
    return out[:, :node_dim, 0]


# ---------------- deterministic parameter init (PyTorch-style uniform) ----------------
def init_params(key, node_dim=NODE_DIM):
    params = []
    for (cin, cout, k, _pad) in LAYERS:
        key, kw, kb = jax.random.split(key, 3)
        scale = 1.0 / (cin * k) ** 0.5
        w = jax.random.uniform(kw, (cout, cin, k), jnp.float32, -scale, scale)
        b = jax.random.uniform(kb, (cout,), jnp.float32, -scale, scale)
        params.append((w, b))
    key, kw, kb = jax.random.split(key, 3)
    scale = 1.0 / 64 ** 0.5
    wp = jax.random.uniform(kw, (node_dim, 64), jnp.float32, -scale, scale)
    bp = jax.random.uniform(kb, (node_dim,), jnp.float32, -scale, scale)
    params.append((wp, bp))
    return params


# ---------------- pure-JAX reference (mirrors the PyTorch forward) ----------------
def reference_forward(x_ncw, params):
    out = x_ncw.astype(jnp.float32)
    for (w, b), (_cin, _cout, _k, pad) in zip(params[:4], LAYERS):
        w = w.astype(jnp.bfloat16).astype(jnp.float32)   # kernel stores weights in bf16
        out = lax.conv_general_dilated(
            out, w, window_strides=(1,), padding=[(pad, pad)],
            dimension_numbers=('NCH', 'OIH', 'NCH'),
            precision=lax.Precision.HIGHEST)
        out = jnp.maximum(out + b[None, :, None], 0.0)
        out = lax.reduce_window(out, -jnp.inf, lax.max,
                                (1, 1, 2), (1, 1, 2), 'VALID')
    out = jnp.mean(out, axis=-1)            # AdaptiveAvgPool1d(1) + squeeze
    wp, bp = params[4]
    wp = wp.astype(jnp.bfloat16).astype(jnp.float32)
    return jnp.dot(out, wp.T, precision=lax.Precision.HIGHEST) + bp


if __name__ == "__main__":
    key = jax.random.PRNGKey(0)
    key, kx = jax.random.split(key)
    x = jax.random.normal(kx, (BATCH, IN_CH, L0), jnp.float32)
    params = init_params(jax.random.PRNGKey(1))

    out = lead_encoder_forward(x, params)
    out = jax.block_until_ready(out)

    ref = reference_forward(x, params)
    assert out.shape == (BATCH, NODE_DIM)
    max_err = float(jnp.max(jnp.abs(out - ref)))
    assert max_err < 1e-3, f"mismatch vs reference: {max_err}"
    print("KERNEL_OK")
</pallas_src>

<mosaic_0001>
module attributes {stable_mosaic.version = 11 : i64} {
  func.func @kernel(%arg0: i32, %arg1: memref<2x1x128xf32, #tpu.memory_space<vmem>>, %arg2: memref<488x64xbf16, #tpu.memory_space<vmem>>, %arg3: memref<64x8xf32, #tpu.memory_space<vmem>>, %arg4: memref<128x128xf32, #tpu.memory_space<vmem>>, %arg5: memref<2x64x1xf32, #tpu.memory_space<vmem>>) attributes {dimension_semantics = [#tpu.dimension_semantics<parallel>], iteration_bounds = array<i64: 2>, scalar_prefetch = 0 : i64, scratch_operands = 0 : i64, tpu.core_type = #tpu.core_type<tc>, window_params = [{transform_indices = @transform_0, window_bounds = array<i64: 2, 1, 128>}, {pipeline_mode = #tpu.pipeline_mode<synchronous>, transform_indices = @transform_1, window_bounds = array<i64: 488, 64>}, {pipeline_mode = #tpu.pipeline_mode<synchronous>, transform_indices = @transform_2, window_bounds = array<i64: 64, 8>}, {pipeline_mode = #tpu.pipeline_mode<synchronous>, transform_indices = @transform_3, window_bounds = array<i64: 128, 128>}, {transform_indices = @transform_4, window_bounds = array<i64: 2, 64, 1>}]} {
    %0 = tpu.iota {dimensions = array<i32: 1>} : vector<1x128xi32>
    %c0 = arith.constant 0 : index
    %c0_0 = arith.constant 0 : index
    %1 = vector.load %arg4[%c0, %c0_0] : memref<128x128xf32, #tpu.memory_space<vmem>>, vector<128x128xf32>
    %c424 = arith.constant 424 : index
    %c0_1 = arith.constant 0 : index
    %2 = vector.load %arg2[%c424, %c0_1] : memref<488x64xbf16, #tpu.memory_space<vmem>>, vector<64x64xbf16>
    %3 = arith.extf %2 : vector<64x64xbf16> to vector<64x64xf32>
    %c0_2 = arith.constant 0 : index
    %c4 = arith.constant 4 : index
    %4 = vector.load %arg3[%c0_2, %c4] : memref<64x8xf32, #tpu.memory_space<vmem>>, vector<64x1xf32>
    %c0_3 = arith.constant 0 : index
    %c0_4 = arith.constant 0 : index
    %c0_5 = arith.constant 0 : index
    %5 = vector.load %arg1[%c0_3, %c0_4, %c0_5] : memref<2x1x128xf32, #tpu.memory_space<vmem>>, vector<1x1x128xf32>
    %6 = vector.shape_cast %5 : vector<1x1x128xf32> to vector<1x128xf32>
    %c3_i32 = arith.constant 3 : i32
    %7 = tpu.dynamic_rotate %6 by %c3_i32 dim 1 : vector<1x128xf32>, i32 -> vector<1x128xf32>
    %c3_i32_6 = arith.constant 3 : i32
    %8 = vector.broadcast %c3_i32_6 : i32 to vector<1x128xi32>
    %9 = arith.cmpi sge, %0, %8 : vector<1x128xi32>
    %cst = arith.constant 0.000000e+00 : f32
    %10 = vector.broadcast %cst : f32 to vector<1x128xf32>
    %11 = arith.select %9, %7, %10 : vector<1x128xi1>, vector<1x128xf32>
    %c0_7 = arith.constant 0 : index
    %c0_8 = arith.constant 0 : index
    %12 = vector.load %arg2[%c0_7, %c0_8] : memref<488x64xbf16, #tpu.memory_space<vmem>>, vector<8x1xbf16>
    %13 = arith.extf %12 : vector<8x1xbf16> to vector<8x1xf32>
    %14 = vector.broadcast %13 : vector<8x1xf32> to vector<8x128xf32>
    %15 = vector.broadcast %11 : vector<1x128xf32> to vector<8x128xf32>
    %16 = arith.mulf %14, %15 : vector<8x128xf32>
    %c2_i32 = arith.constant 2 : i32
    %17 = tpu.dynamic_rotate %6 by %c2_i32 dim 1 : vector<1x128xf32>, i32 -> vector<1x128xf32>
    %c2_i32_9 = arith.constant 2 : i32
    %18 = vector.broadcast %c2_i32_9 : i32 to vector<1x128xi32>
    %19 = arith.cmpi sge, %0, %18 : vector<1x128xi32>
    %cst_10 = arith.constant 0.000000e+00 : f32
    %20 = vector.broadcast %cst_10 : f32 to vector<1x128xf32>
    %21 = arith.select %19, %17, %20 : vector<1x128xi1>, vector<1x128xf32>
    %c8 = arith.constant 8 : index
    %c0_11 = arith.constant 0 : index
    %22 = vector.load %arg2[%c8, %c0_11] : memref<488x64xbf16, #tpu.memory_space<vmem>>, vector<8x1xbf16>
    %23 = arith.extf %22 : vector<8x1xbf16> to vector<8x1xf32>
    %24 = vector.broadcast %23 : vector<8x1xf32> to vector<8x128xf32>
    %25 = vector.broadcast %21 : vector<1x128xf32> to vector<8x128xf32>
    %26 = arith.mulf %24, %25 : vector<8x128xf32>
    %27 = arith.addf %16, %26 : vector<8x128xf32>
    %c1_i32 = arith.constant 1 : i32
    %28 = tpu.dynamic_rotate %6 by %c1_i32 dim 1 : vector<1x128xf32>, i32 -> vector<1x128xf32>
    %c1_i32_12 = arith.constant 1 : i32
    %29 = vector.broadcast %c1_i32_12 : i32 to vector<1x128xi32>
    %30 = arith.cmpi sge, %0, %29 : vector<1x128xi32>
    %cst_13 = arith.constant 0.000000e+00 : f32
    %31 = vector.broadcast %cst_13 : f32 to vector<1x128xf32>
    %32 = arith.select %30, %28, %31 : vector<1x128xi1>, vector<1x128xf32>
    %c16 = arith.constant 16 : index
    %c0_14 = arith.constant 0 : index
    %33 = vector.load %arg2[%c16, %c0_14] : memref<488x64xbf16, #tpu.memory_space<vmem>>, vector<8x1xbf16>
    %34 = arith.extf %33 : vector<8x1xbf16> to vector<8x1xf32>
    %35 = vector.broadcast %34 : vector<8x1xf32> to vector<8x128xf32>
    %36 = vector.broadcast %32 : vector<1x128xf32> to vector<8x128xf32>
    %37 = arith.mulf %35, %36 : vector<8x128xf32>
    %38 = arith.addf %27, %37 : vector<8x128xf32>
    %c24 = arith.constant 24 : index
    %c0_15 = arith.constant 0 : index
    %39 = vector.load %arg2[%c24, %c0_15] : memref<488x64xbf16, #tpu.memory_space<vmem>>, vector<8x1xbf16>
    %40 = arith.extf %39 : vector<8x1xbf16> to vector<8x1xf32>
    %41 = vector.broadcast %40 : vector<8x1xf32> to vector<8x128xf32>
    %42 = vector.broadcast %6 : vector<1x128xf32> to vector<8x128xf32>
    %43 = arith.mulf %41, %42 : vector<8x128xf32>
    %44 = arith.addf %38, %43 : vector<8x128xf32>
    %c127_i32 = arith.constant 127 : i32
    %45 = tpu.dynamic_rotate %6 by %c127_i32 dim 1 : vector<1x128xf32>, i32 -> vector<1x128xf32>
    %c127_i32_16 = arith.constant 127 : i32
    %46 = vector.broadcast %c127_i32_16 : i32 to vector<1x128xi32>
    %47 = arith.cmpi slt, %0, %46 : vector<1x128xi32>
    %cst_17 = arith.constant 0.000000e+00 : f32
    %48 = vector.broadcast %cst_17 : f32 to vector<1x128xf32>
    %49 = arith.select %47, %45, %48 : vector<1x128xi1>, vector<1x128xf32>
    %c32 = arith.constant 32 : index
    %c0_18 = arith.constant 0 : index
    %50 = vector.load %arg2[%c32, %c0_18] : memref<488x64xbf16, #tpu.memory_space<vmem>>, vector<8x1xbf16>
    %51 = arith.extf %50 : vector<8x1xbf16> to vector<8x1xf32>
    %52 = vector.broadcast %51 : vector<8x1xf32> to vector<8x128xf32>
    %53 = vector.broadcast %49 : vector<1x128xf32> to vector<8x128xf32>
    %54 = arith.mulf %52, %53 : vector<8x128xf32>
    %55 = arith.addf %44, %54 : vector<8x128xf32>
    %c126_i32 = arith.constant 126 : i32
    %56 = tpu.dynamic_rotate %6 by %c126_i32 dim 1 : vector<1x128xf32>, i32 -> vector<1x128xf32>
    %c126_i32_19 = arith.constant 126 : i32
    %57 = vector.broadcast %c126_i32_19 : i32 to vector<1x128xi32>
    %58 = arith.cmpi slt, %0, %57 : vector<1x128xi32>
    %cst_20 = arith.constant 0.000000e+00 : f32
    %59 = vector.broadcast %cst_20 : f32 to vector<1x128xf32>
    %60 = arith.select %58, %56, %59 : vector<1x128xi1>, vector<1x128xf32>
    %c40 = arith.constant 40 : index
    %c0_21 = arith.constant 0 : index
    %61 = vector.load %arg2[%c40, %c0_21] : memref<488x64xbf16, #tpu.memory_space<vmem>>, vector<8x1xbf16>
    %62 = arith.extf %61 : vector<8x1xbf16> to vector<8x1xf32>
    %63 = vector.broadcast %62 : vector<8x1xf32> to vector<8x128xf32>
    %64 = vector.broadcast %60 : vector<1x128xf32> to vector<8x128xf32>
    %65 = arith.mulf %63, %64 : vector<8x128xf32>
    %66 = arith.addf %55, %65 : vector<8x128xf32>
    %c125_i32 = arith.constant 125 : i32
    %67 = tpu.dynamic_rotate %6 by %c125_i32 dim 1 : vector<1x128xf32>, i32 -> vector<1x128xf32>
    %c125_i32_22 = arith.constant 125 : i32
    %68 = vector.broadcast %c125_i32_22 : i32 to vector<1x128xi32>
    %69 = arith.cmpi slt, %0, %68 : vector<1x128xi32>
    %cst_23 = arith.constant 0.000000e+00 : f32
    %70 = vector.broadcast %cst_23 : f32 to vector<1x128xf32>
    %71 = arith.select %69, %67, %70 : vector<1x128xi1>, vector<1x128xf32>
    %c48 = arith.constant 48 : index
    %c0_24 = arith.constant 0 : index
    %72 = vector.load %arg2[%c48, %c0_24] : memref<488x64xbf16, #tpu.memory_space<vmem>>, vector<8x1xbf16>
    %73 = arith.extf %72 : vector<8x1xbf16> to vector<8x1xf32>
    %74 = vector.broadcast %73 : vector<8x1xf32> to vector<8x128xf32>
    %75 = vector.broadcast %71 : vector<1x128xf32> to vector<8x128xf32>
    %76 = arith.mulf %74, %75 : vector<8x128xf32>
    %77 = arith.addf %66, %76 : vector<8x128xf32>
    %c0_25 = arith.constant 0 : index
    %c0_26 = arith.constant 0 : index
    %78 = vector.load %arg3[%c0_25, %c0_26] : memref<64x8xf32, #tpu.memory_space<vmem>>, vector<8x1xf32>
    %79 = vector.broadcast %78 : vector<8x1xf32> to vector<8x128xf32>
    %80 = arith.addf %77, %79 : vector<8x128xf32>
    %cst_27 = arith.constant 0.000000e+00 : f32
    %81 = vector.broadcast %cst_27 : f32 to vector<8x128xf32>
    %82 = arith.maximumf %80, %81 : vector<8x128xf32>
    %c127_i32_28 = arith.constant 127 : i32
    %83 = tpu.dynamic_rotate %82 by %c127_i32_28 dim 1 : vector<8x128xf32>, i32 -> vector<8x128xf32>
    %84 = arith.maximumf %82, %83 : vector<8x128xf32>
    %cst_29 = arith.constant dense<0.000000e+00> : vector<8x128xf32>
    %85 = tpu.matmul %84, %1, %cst_29 {dimension_numbers = #tpu.dot_dimension_numbers<[1], [0], [0], [1], [0, 0, 1, 1], [], []>} : vector<8x128xf32>, vector<128x128xf32>, vector<8x128xf32> -> vector<8x128xf32>
    %c2_i32_30 = arith.constant 2 : i32
    %86 = tpu.dynamic_rotate %85 by %c2_i32_30 dim 1 : vector<8x128xf32>, i32 -> vector<8x128xf32>
    %c2_i32_31 = arith.constant 2 : i32
    %87 = vector.broadcast %c2_i32_31 : i32 to vector<1x128xi32>
    %88 = arith.cmpi sge, %0, %87 : vector<1x128xi32>
    %cst_32 = arith.constant 0.000000e+00 : f32
    %89 = vector.shape_cast %88 : vector<1x128xi1> to vector<1x128xi1>
    %90 = vector.broadcast %89 : vector<1x128xi1> to vector<8x128xi1>
    %91 = vector.broadcast %cst_32 : f32 to vector<8x128xf32>
    %92 = arith.select %90, %86, %91 : vector<8x128xi1>, vector<8x128xf32>
    %c56 = arith.constant 56 : index
    %c0_33 = arith.constant 0 : index
    %93 = vector.load %arg2[%c56, %c0_33] : memref<488x64xbf16, #tpu.memory_space<vmem>>, vector<16x8xbf16>
    %94 = arith.extf %93 : vector<16x8xbf16> to vector<16x8xf32>
    %cst_34 = arith.constant dense<0.000000e+00> : vector<16x128xf32>
    %95 = tpu.matmul %94, %92, %cst_34 {dimension_numbers = #tpu.dot_dimension_numbers<[1], [0], [0], [1], [0, 0, 1, 1], [], []>} : vector<16x8xf32>, vector<8x128xf32>, vector<16x128xf32> -> vector<16x128xf32>
    %c1_i32_35 = arith.constant 1 : i32
    %96 = tpu.dynamic_rotate %85 by %c1_i32_35 dim 1 : vector<8x128xf32>, i32 -> vector<8x128xf32>
    %c1_i32_36 = arith.constant 1 : i32
    %97 = vector.broadcast %c1_i32_36 : i32 to vector<1x128xi32>
    %98 = arith.cmpi sge, %0, %97 : vector<1x128xi32>
    %cst_37 = arith.constant 0.000000e+00 : f32
    %99 = vector.shape_cast %98 : vector<1x128xi1> to vector<1x128xi1>
    %100 = vector.broadcast %99 : vector<1x128xi1> to vector<8x128xi1>
    %101 = vector.broadcast %cst_37 : f32 to vector<8x128xf32>
    %102 = arith.select %100, %96, %101 : vector<8x128xi1>, vector<8x128xf32>
    %c72 = arith.constant 72 : index
    %c0_38 = arith.constant 0 : index
    %103 = vector.load %arg2[%c72, %c0_38] : memref<488x64xbf16, #tpu.memory_space<vmem>>, vector<16x8xbf16>
    %104 = arith.extf %103 : vector<16x8xbf16> to vector<16x8xf32>
    %cst_39 = arith.constant dense<0.000000e+00> : vector<16x128xf32>
    %105 = tpu.matmul %104, %102, %cst_39 {dimension_numbers = #tpu.dot_dimension_numbers<[1], [0], [0], [1], [0, 0, 1, 1], [], []>} : vector<16x8xf32>, vector<8x128xf32>, vector<16x128xf32> -> vector<16x128xf32>
    %106 = arith.addf %95, %105 : vector<16x128xf32>
    %c88 = arith.constant 88 : index
    %c0_40 = arith.constant 0 : index
    %107 = vector.load %arg2[%c88, %c0_40] : memref<488x64xbf16, #tpu.memory_space<vmem>>, vector<16x8xbf16>
    %108 = arith.extf %107 : vector<16x8xbf16> to vector<16x8xf32>
    %cst_41 = arith.constant dense<0.000000e+00> : vector<16x128xf32>
    %109 = tpu.matmul %108, %85, %cst_41 {dimension_numbers = #tpu.dot_dimension_numbers<[1], [0], [0], [1], [0, 0, 1, 1], [], []>} : vector<16x8xf32>, vector<8x128xf32>, vector<16x128xf32> -> vector<16x128xf32>
    %110 = arith.addf %106, %109 : vector<16x128xf32>
    %c127_i32_42 = arith.constant 127 : i32
    %111 = tpu.dynamic_rotate %85 by %c127_i32_42 dim 1 : vector<8x128xf32>, i32 -> vector<8x128xf32>
    %c63_i32 = arith.constant 63 : i32
    %112 = vector.broadcast %c63_i32 : i32 to vector<1x128xi32>
    %113 = arith.cmpi slt, %0, %112 : vector<1x128xi32>
    %cst_43 = arith.constant 0.000000e+00 : f32
    %114 = vector.shape_cast %113 : vector<1x128xi1> to vector<1x128xi1>
    %115 = vector.broadcast %114 : vector<1x128xi1> to vector<8x128xi1>
    %116 = vector.broadcast %cst_43 : f32 to vector<8x128xf32>
    %117 = arith.select %115, %111, %116 : vector<8x128xi1>, vector<8x128xf32>
    %c104 = arith.constant 104 : index
    %c0_44 = arith.constant 0 : index
    %118 = vector.load %arg2[%c104, %c0_44] : memref<488x64xbf16, #tpu.memory_space<vmem>>, vector<16x8xbf16>
    %119 = arith.extf %118 : vector<16x8xbf16> to vector<16x8xf32>
    %cst_45 = arith.constant dense<0.000000e+00> : vector<16x128xf32>
    %120 = tpu.matmul %119, %117, %cst_45 {dimension_numbers = #tpu.dot_dimension_numbers<[1], [0], [0], [1], [0, 0, 1, 1], [], []>} : vector<16x8xf32>, vector<8x128xf32>, vector<16x128xf32> -> vector<16x128xf32>
    %121 = arith.addf %110, %120 : vector<16x128xf32>
    %c126_i32_46 = arith.constant 126 : i32
    %122 = tpu.dynamic_rotate %85 by %c126_i32_46 dim 1 : vector<8x128xf32>, i32 -> vector<8x128xf32>
    %c62_i32 = arith.constant 62 : i32
    %123 = vector.broadcast %c62_i32 : i32 to vector<1x128xi32>
    %124 = arith.cmpi slt, %0, %123 : vector<1x128xi32>
    %cst_47 = arith.constant 0.000000e+00 : f32
    %125 = vector.shape_cast %124 : vector<1x128xi1> to vector<1x128xi1>
    %126 = vector.broadcast %125 : vector<1x128xi1> to vector<8x128xi1>
    %127 = vector.broadcast %cst_47 : f32 to vector<8x128xf32>
    %128 = arith.select %126, %122, %127 : vector<8x128xi1>, vector<8x128xf32>
    %c120 = arith.constant 120 : index
    %c0_48 = arith.constant 0 : index
    %129 = vector.load %arg2[%c120, %c0_48] : memref<488x64xbf16, #tpu.memory_space<vmem>>, vector<16x8xbf16>
    %130 = arith.extf %129 : vector<16x8xbf16> to vector<16x8xf32>
    %cst_49 = arith.constant dense<0.000000e+00> : vector<16x128xf32>
    %131 = tpu.matmul %130, %128, %cst_49 {dimension_numbers = #tpu.dot_dimension_numbers<[1], [0], [0], [1], [0, 0, 1, 1], [], []>} : vector<16x8xf32>, vector<8x128xf32>, vector<16x128xf32> -> vector<16x128xf32>
    %132 = arith.addf %121, %131 : vector<16x128xf32>
    %c0_50 = arith.constant 0 : index
    %c1 = arith.constant 1 : index
    %133 = vector.load %arg3[%c0_50, %c1] : memref<64x8xf32, #tpu.memory_space<vmem>>, vector<16x1xf32>
    %134 = vector.broadcast %133 : vector<16x1xf32> to vector<16x128xf32>
    %135 = arith.addf %132, %134 : vector<16x128xf32>
    %cst_51 = arith.constant 0.000000e+00 : f32
    %136 = vector.broadcast %cst_51 : f32 to vector<16x128xf32>
    %137 = arith.maximumf %135, %136 : vector<16x128xf32>
    %c127_i32_52 = arith.constant 127 : i32
    %138 = tpu.dynamic_rotate %137 by %c127_i32_52 dim 1 : vector<16x128xf32>, i32 -> vector<16x128xf32>
    %139 = arith.maximumf %137, %138 : vector<16x128xf32>
    %cst_53 = arith.constant dense<0.000000e+00> : vector<16x128xf32>
    %140 = tpu.matmul %139, %1, %cst_53 {dimension_numbers = #tpu.dot_dimension_numbers<[1], [0], [0], [1], [0, 0, 1, 1], [], []>} : vector<16x128xf32>, vector<128x128xf32>, vector<16x128xf32> -> vector<16x128xf32>
    %c1_i32_54 = arith.constant 1 : i32
    %141 = tpu.dynamic_rotate %140 by %c1_i32_54 dim 1 : vector<16x128xf32>, i32 -> vector<16x128xf32>
    %c1_i32_55 = arith.constant 1 : i32
    %142 = vector.broadcast %c1_i32_55 : i32 to vector<1x128xi32>
    %143 = arith.cmpi sge, %0, %142 : vector<1x128xi32>
    %cst_56 = arith.constant 0.000000e+00 : f32
    %144 = vector.shape_cast %143 : vector<1x128xi1> to vector<1x128xi1>
    %145 = vector.broadcast %144 : vector<1x128xi1> to vector<16x128xi1>
    %146 = vector.broadcast %cst_56 : f32 to vector<16x128xf32>
    %147 = arith.select %145, %141, %146 : vector<16x128xi1>, vector<16x128xf32>
    %c136 = arith.constant 136 : index
    %c0_57 = arith.constant 0 : index
    %148 = vector.load %arg2[%c136, %c0_57] : memref<488x64xbf16, #tpu.memory_space<vmem>>, vector<32x16xbf16>
    %149 = arith.extf %148 : vector<32x16xbf16> to vector<32x16xf32>
    %cst_58 = arith.constant dense<0.000000e+00> : vector<32x128xf32>
    %150 = tpu.matmul %149, %147, %cst_58 {dimension_numbers = #tpu.dot_dimension_numbers<[1], [0], [0], [1], [0, 0, 1, 1], [], []>} : vector<32x16xf32>, vector<16x128xf32>, vector<32x128xf32> -> vector<32x128xf32>
    %c168 = arith.constant 168 : index
    %c0_59 = arith.constant 0 : index
    %151 = vector.load %arg2[%c168, %c0_59] : memref<488x64xbf16, #tpu.memory_space<vmem>>, vector<32x16xbf16>
    %152 = arith.extf %151 : vector<32x16xbf16> to vector<32x16xf32>
    %cst_60 = arith.constant dense<0.000000e+00> : vector<32x128xf32>
    %153 = tpu.matmul %152, %140, %cst_60 {dimension_numbers = #tpu.dot_dimension_numbers<[1], [0], [0], [1], [0, 0, 1, 1], [], []>} : vector<32x16xf32>, vector<16x128xf32>, vector<32x128xf32> -> vector<32x128xf32>
    %154 = arith.addf %150, %153 : vector<32x128xf32>
    %c127_i32_61 = arith.constant 127 : i32
    %155 = tpu.dynamic_rotate %140 by %c127_i32_61 dim 1 : vector<16x128xf32>, i32 -> vector<16x128xf32>
    %c31_i32 = arith.constant 31 : i32
    %156 = vector.broadcast %c31_i32 : i32 to vector<1x128xi32>
    %157 = arith.cmpi slt, %0, %156 : vector<1x128xi32>
    %cst_62 = arith.constant 0.000000e+00 : f32
    %158 = vector.shape_cast %157 : vector<1x128xi1> to vector<1x128xi1>
    %159 = vector.broadcast %158 : vector<1x128xi1> to vector<16x128xi1>
    %160 = vector.broadcast %cst_62 : f32 to vector<16x128xf32>
    %161 = arith.select %159, %155, %160 : vector<16x128xi1>, vector<16x128xf32>
    %c200 = arith.constant 200 : index
    %c0_63 = arith.constant 0 : index
    %162 = vector.load %arg2[%c200, %c0_63] : memref<488x64xbf16, #tpu.memory_space<vmem>>, vector<32x16xbf16>
    %163 = arith.extf %162 : vector<32x16xbf16> to vector<32x16xf32>
    %cst_64 = arith.constant dense<0.000000e+00> : vector<32x128xf32>
    %164 = tpu.matmul %163, %161, %cst_64 {dimension_numbers = #tpu.dot_dimension_numbers<[1], [0], [0], [1], [0, 0, 1, 1], [], []>} : vector<32x16xf32>, vector<16x128xf32>, vector<32x128xf32> -> vector<32x128xf32>
    %165 = arith.addf %154, %164 : vector<32x128xf32>
    %c0_65 = arith.constant 0 : index
    %c2 = arith.constant 2 : index
    %166 = vector.load %arg3[%c0_65, %c2] : memref<64x8xf32, #tpu.memory_space<vmem>>, vector<32x1xf32>
    %167 = vector.broadcast %166 : vector<32x1xf32> to vector<32x128xf32>
    %168 = arith.addf %165, %167 : vector<32x128xf32>
    %cst_66 = arith.constant 0.000000e+00 : f32
    %169 = vector.broadcast %cst_66 : f32 to vector<32x128xf32>
    %170 = arith.maximumf %168, %169 : vector<32x128xf32>
    %c127_i32_67 = arith.constant 127 : i32
    %171 = tpu.dynamic_rotate %170 by %c127_i32_67 dim 1 : vector<32x128xf32>, i32 -> vector<32x128xf32>
    %172 = arith.maximumf %170, %171 : vector<32x128xf32>
    %cst_68 = arith.constant dense<0.000000e+00> : vector<32x128xf32>
    %173 = tpu.matmul %172, %1, %cst_68 {dimension_numbers = #tpu.dot_dimension_numbers<[1], [0], [0], [1], [0, 0, 1, 1], [], []>} : vector<32x128xf32>, vector<128x128xf32>, vector<32x128xf32> -> vector<32x128xf32>
    %c1_i32_69 = arith.constant 1 : i32
    %174 = tpu.dynamic_rotate %173 by %c1_i32_69 dim 1 : vector<32x128xf32>, i32 -> vector<32x128xf32>
    %c1_i32_70 = arith.constant 1 : i32
    %175 = vector.broadcast %c1_i32_70 : i32 to vector<1x128xi32>
    %176 = arith.cmpi sge, %0, %175 : vector<1x128xi32>
    %cst_71 = arith.constant 0.000000e+00 : f32
    %177 = vector.shape_cast %176 : vector<1x128xi1> to vector<1x128xi1>
    %178 = vector.broadcast %177 : vector<1x128xi1> to vector<32x128xi1>
    %179 = vector.broadcast %cst_71 : f32 to vector<32x128xf32>
    %180 = arith.select %178, %174, %179 : vector<32x128xi1>, vector<32x128xf32>
    %c232 = arith.constant 232 : index
    %c0_72 = arith.constant 0 : index
    %181 = vector.load %arg2[%c232, %c0_72] : memref<488x64xbf16, #tpu.memory_space<vmem>>, vector<64x32xbf16>
    %182 = arith.extf %181 : vector<64x32xbf16> to vector<64x32xf32>
    %cst_73 = arith.constant dense<0.000000e+00> : vector<64x128xf32>
    %183 = tpu.matmul %182, %180, %cst_73 {dimension_numbers = #tpu.dot_dimension_numbers<[1], [0], [0], [1], [0, 0, 1, 1], [], []>} : vector<64x32xf32>, vector<32x128xf32>, vector<64x128xf32> -> vector<64x128xf32>
    %c296 = arith.constant 296 : index
    %c0_74 = arith.constant 0 : index
    %184 = vector.load %arg2[%c296, %c0_74] : memref<488x64xbf16, #tpu.memory_space<vmem>>, vector<64x32xbf16>
    %185 = arith.extf %184 : vector<64x32xbf16> to vector<64x32xf32>
    %cst_75 = arith.constant dense<0.000000e+00> : vector<64x128xf32>
    %186 = tpu.matmul %185, %173, %cst_75 {dimension_numbers = #tpu.dot_dimension_numbers<[1], [0], [0], [1], [0, 0, 1, 1], [], []>} : vector<64x32xf32>, vector<32x128xf32>, vector<64x128xf32> -> vector<64x128xf32>
    %187 = arith.addf %183, %186 : vector<64x128xf32>
    %c127_i32_76 = arith.constant 127 : i32
    %188 = tpu.dynamic_rotate %173 by %c127_i32_76 dim 1 : vector<32x128xf32>, i32 -> vector<32x128xf32>
    %c15_i32 = arith.constant 15 : i32
    %189 = vector.broadcast %c15_i32 : i32 to vector<1x128xi32>
    %190 = arith.cmpi slt, %0, %189 : vector<1x128xi32>
    %cst_77 = arith.constant 0.000000e+00 : f32
    %191 = vector.shape_cast %190 : vector<1x128xi1> to vector<1x128xi1>
    %192 = vector.broadcast %191 : vector<1x128xi1> to vector<32x128xi1>
    %193 = vector.broadcast %cst_77 : f32 to vector<32x128xf32>
    %194 = arith.select %192, %188, %193 : vector<32x128xi1>, vector<32x128xf32>
    %c360 = arith.constant 360 : index
    %c0_78 = arith.constant 0 : index
    %195 = vector.load %arg2[%c360, %c0_78] : memref<488x64xbf16, #tpu.memory_space<vmem>>, vector<64x32xbf16>
    %196 = arith.extf %195 : vector<64x32xbf16> to vector<64x32xf32>
    %cst_79 = arith.constant dense<0.000000e+00> : vector<64x128xf32>
    %197 = tpu.matmul %196, %194, %cst_79 {dimension_numbers = #tpu.dot_dimension_numbers<[1], [0], [0], [1], [0, 0, 1, 1], [], []>} : vector<64x32xf32>, vector<32x128xf32>, vector<64x128xf32> -> vector<64x128xf32>
    %198 = arith.addf %187, %197 : vector<64x128xf32>
    %c0_80 = arith.constant 0 : index
    %c3 = arith.constant 3 : index
    %199 = vector.load %arg3[%c0_80, %c3] : memref<64x8xf32, #tpu.memory_space<vmem>>, vector<64x1xf32>
    %200 = vector.broadcast %199 : vector<64x1xf32> to vector<64x128xf32>
    %201 = arith.addf %198, %200 : vector<64x128xf32>
    %cst_81 = arith.constant 0.000000e+00 : f32
    %202 = vector.broadcast %cst_81 : f32 to vector<64x128xf32>
    %203 = arith.maximumf %201, %202 : vector<64x128xf32>
    %c127_i32_82 = arith.constant 127 : i32
    %204 = tpu.dynamic_rotate %203 by %c127_i32_82 dim 1 : vector<64x128xf32>, i32 -> vector<64x128xf32>
    %205 = arith.maximumf %203, %204 : vector<64x128xf32>
    %cst_83 = arith.constant dense<0.000000e+00> : vector<64x128xf32>
    %206 = tpu.matmul %205, %1, %cst_83 {dimension_numbers = #tpu.dot_dimension_numbers<[1], [0], [0], [1], [0, 0, 1, 1], [], []>} : vector<64x128xf32>, vector<128x128xf32>, vector<64x128xf32> -> vector<64x128xf32>
    %c8_i32 = arith.constant 8 : i32
    %207 = vector.broadcast %c8_i32 : i32 to vector<1x128xi32>
    %208 = arith.cmpi slt, %0, %207 : vector<1x128xi32>
    %cst_84 = arith.constant 0.000000e+00 : f32
    %209 = vector.shape_cast %208 : vector<1x128xi1> to vector<1x128xi1>
    %210 = vector.broadcast %209 : vector<1x128xi1> to vector<64x128xi1>
    %211 = vector.broadcast %cst_84 : f32 to vector<64x128xf32>
    %212 = arith.select %210, %206, %211 : vector<64x128xi1>, vector<64x128xf32>
    %cst_85 = arith.constant dense<0.000000e+00> : vector<64x128xf32>
    %213 = tpu.matmul %3, %212, %cst_85 {dimension_numbers = #tpu.dot_dimension_numbers<[1], [0], [0], [1], [0, 0, 1, 1], [], []>} : vector<64x64xf32>, vector<64x128xf32>, vector<64x128xf32> -> vector<64x128xf32>
    %cst_86 = arith.constant dense<0.000000e+00> : vector<64xf32>
    %214 = vector.multi_reduction <add>, %213, %cst_86 [1] : vector<64x128xf32> to vector<64xf32>
    %215 = vector.shape_cast %214 : vector<64xf32> to vector<64x1xf32>
    %cst_87 = arith.constant 1.250000e-01 : f32
    %216 = vector.broadcast %cst_87 : f32 to vector<64x1xf32>
    %217 = arith.mulf %215, %216 : vector<64x1xf32>
    %218 = arith.addf %217, %4 : vector<64x1xf32>
    %c0_88 = arith.constant 0 : index
    %c0_89 = arith.constant 0 : index
    %c0_90 = arith.constant 0 : index
    %219 = vector.load %arg5[%c0_88, %c0_89, %c0_90] : memref<2x64x1xf32, #tpu.memory_space<vmem>>, vector<1x64x1xf32>
    %220 = vector.shape_cast %219 : vector<1x64x1xf32> to vector<64x1xf32>
    %221 = vector.shape_cast %218 : vector<64x1xf32> to vector<1x64x1xf32>
    tpu.vector_store %arg5[%c0_88, %c0_89, %c0_90], %221 {strides = array<i32>} : memref<2x64x1xf32, #tpu.memory_space<vmem>>, vector<1x64x1xf32>,
    %c1_91 = arith.constant 1 : index
    %c0_92 = arith.constant 0 : index
    %c0_93 = arith.constant 0 : index
    %222 = vector.load %arg1[%c1_91, %c0_92, %c0_93] : memref<2x1x128xf32, #tpu.memory_space<vmem>>, vector<1x1x128xf32>
    %223 = vector.shape_cast %222 : vector<1x1x128xf32> to vector<1x128xf32>
    %c3_i32_94 = arith.constant 3 : i32
    %224 = tpu.dynamic_rotate %223 by %c3_i32_94 dim 1 : vector<1x128xf32>, i32 -> vector<1x128xf32>
    %c3_i32_95 = arith.constant 3 : i32
    %225 = vector.broadcast %c3_i32_95 : i32 to vector<1x128xi32>
    %226 = arith.cmpi sge, %0, %225 : vector<1x128xi32>
    %cst_96 = arith.constant 0.000000e+00 : f32
    %227 = vector.broadcast %cst_96 : f32 to vector<1x128xf32>
    %228 = arith.select %226, %224, %227 : vector<1x128xi1>, vector<1x128xf32>
    %c0_97 = arith.constant 0 : index
    %c0_98 = arith.constant 0 : index
    %229 = vector.load %arg2[%c0_97, %c0_98] : memref<488x64xbf16, #tpu.memory_space<vmem>>, vector<8x1xbf16>
    %230 = arith.extf %229 : vector<8x1xbf16> to vector<8x1xf32>
    %231 = vector.broadcast %230 : vector<8x1xf32> to vector<8x128xf32>
    %232 = vector.broadcast %228 : vector<1x128xf32> to vector<8x128xf32>
    %233 = arith.mulf %231, %232 : vector<8x128xf32>
    %c2_i32_99 = arith.constant 2 : i32
    %234 = tpu.dynamic_rotate %223 by %c2_i32_99 dim 1 : vector<1x128xf32>, i32 -> vector<1x128xf32>
    %c2_i32_100 = arith.constant 2 : i32
    %235 = vector.broadcast %c2_i32_100 : i32 to vector<1x128xi32>
    %236 = arith.cmpi sge, %0, %235 : vector<1x128xi32>
    %cst_101 = arith.constant 0.000000e+00 : f32
    %237 = vector.broadcast %cst_101 : f32 to vector<1x128xf32>
    %238 = arith.select %236, %234, %237 : vector<1x128xi1>, vector<1x128xf32>
    %c8_102 = arith.constant 8 : index
    %c0_103 = arith.constant 0 : index
    %239 = vector.load %arg2[%c8_102, %c0_103] : memref<488x64xbf16, #tpu.memory_space<vmem>>, vector<8x1xbf16>
    %240 = arith.extf %239 : vector<8x1xbf16> to vector<8x1xf32>
    %241 = vector.broadcast %240 : vector<8x1xf32> to vector<8x128xf32>
    %242 = vector.broadcast %238 : vector<1x128xf32> to vector<8x128xf32>
    %243 = arith.mulf %241, %242 : vector<8x128xf32>
    %244 = arith.addf %233, %243 : vector<8x128xf32>
    %c1_i32_104 = arith.constant 1 : i32
    %245 = tpu.dynamic_rotate %223 by %c1_i32_104 dim 1 : vector<1x128xf32>, i32 -> vector<1x128xf32>
    %c1_i32_105 = arith.constant 1 : i32
    %246 = vector.broadcast %c1_i32_105 : i32 to vector<1x128xi32>
    %247 = arith.cmpi sge, %0, %246 : vector<1x128xi32>
    %cst_106 = arith.constant 0.000000e+00 : f32
    %248 = vector.broadcast %cst_106 : f32 to vector<1x128xf32>
    %249 = arith.select %247, %245, %248 : vector<1x128xi1>, vector<1x128xf32>
    %c16_107 = arith.constant 16 : index
    %c0_108 = arith.constant 0 : index
    %250 = vector.load %arg2[%c16_107, %c0_108] : memref<488x64xbf16, #tpu.memory_space<vmem>>, vector<8x1xbf16>
    %251 = arith.extf %250 : vector<8x1xbf16> to vector<8x1xf32>
    %252 = vector.broadcast %251 : vector<8x1xf32> to vector<8x128xf32>
    %253 = vector.broadcast %249 : vector<1x128xf32> to vector<8x128xf32>
    %254 = arith.mulf %252, %253 : vector<8x128xf32>
    %255 = arith.addf %244, %254 : vector<8x128xf32>
    %c24_109 = arith.constant 24 : index
    %c0_110 = arith.constant 0 : index
    %256 = vector.load %arg2[%c24_109, %c0_110] : memref<488x64xbf16, #tpu.memory_space<vmem>>, vector<8x1xbf16>
    %257 = arith.extf %256 : vector<8x1xbf16> to vector<8x1xf32>
    %258 = vector.broadcast %257 : vector<8x1xf32> to vector<8x128xf32>
    %259 = vector.broadcast %223 : vector<1x128xf32> to vector<8x128xf32>
    %260 = arith.mulf %258, %259 : vector<8x128xf32>
    %261 = arith.addf %255, %260 : vector<8x128xf32>
    %c127_i32_111 = arith.constant 127 : i32
    %262 = tpu.dynamic_rotate %223 by %c127_i32_111 dim 1 : vector<1x128xf32>, i32 -> vector<1x128xf32>
    %c127_i32_112 = arith.constant 127 : i32
    %263 = vector.broadcast %c127_i32_112 : i32 to vector<1x128xi32>
    %264 = arith.cmpi slt, %0, %263 : vector<1x128xi32>
    %cst_113 = arith.constant 0.000000e+00 : f32
    %265 = vector.broadcast %cst_113 : f32 to vector<1x128xf32>
    %266 = arith.select %264, %262, %265 : vector<1x128xi1>, vector<1x128xf32>
    %c32_114 = arith.constant 32 : index
    %c0_115 = arith.constant 0 : index
    %267 = vector.load %arg2[%c32_114, %c0_115] : memref<488x64xbf16, #tpu.memory_space<vmem>>, vector<8x1xbf16>
    %268 = arith.extf %267 : vector<8x1xbf16> to vector<8x1xf32>
    %269 = vector.broadcast %268 : vector<8x1xf32> to vector<8x128xf32>
    %270 = vector.broadcast %266 : vector<1x128xf32> to vector<8x128xf32>
    %271 = arith.mulf %269, %270 : vector<8x128xf32>
    %272 = arith.addf %261, %271 : vector<8x128xf32>
    %c126_i32_116 = arith.constant 126 : i32
    %273 = tpu.dynamic_rotate %223 by %c126_i32_116 dim 1 : vector<1x128xf32>, i32 -> vector<1x128xf32>
    %c126_i32_117 = arith.constant 126 : i32
    %274 = vector.broadcast %c126_i32_117 : i32 to vector<1x128xi32>
    %275 = arith.cmpi slt, %0, %274 : vector<1x128xi32>
    %cst_118 = arith.constant 0.000000e+00 : f32
    %276 = vector.broadcast %cst_118 : f32 to vector<1x128xf32>
    %277 = arith.select %275, %273, %276 : vector<1x128xi1>, vector<1x128xf32>
    %c40_119 = arith.constant 40 : index
    %c0_120 = arith.constant 0 : index
    %278 = vector.load %arg2[%c40_119, %c0_120] : memref<488x64xbf16, #tpu.memory_space<vmem>>, vector<8x1xbf16>
    %279 = arith.extf %278 : vector<8x1xbf16> to vector<8x1xf32>
    %280 = vector.broadcast %279 : vector<8x1xf32> to vector<8x128xf32>
    %281 = vector.broadcast %277 : vector<1x128xf32> to vector<8x128xf32>
    %282 = arith.mulf %280, %281 : vector<8x128xf32>
    %283 = arith.addf %272, %282 : vector<8x128xf32>
    %c125_i32_121 = arith.constant 125 : i32
    %284 = tpu.dynamic_rotate %223 by %c125_i32_121 dim 1 : vector<1x128xf32>, i32 -> vector<1x128xf32>
    %c125_i32_122 = arith.constant 125 : i32
    %285 = vector.broadcast %c125_i32_122 : i32 to vector<1x128xi32>
    %286 = arith.cmpi slt, %0, %285 : vector<1x128xi32>
    %cst_123 = arith.constant 0.000000e+00 : f32
    %287 = vector.broadcast %cst_123 : f32 to vector<1x128xf32>
    %288 = arith.select %286, %284, %287 : vector<1x128xi1>, vector<1x128xf32>
    %c48_124 = arith.constant 48 : index
    %c0_125 = arith.constant 0 : index
    %289 = vector.load %arg2[%c48_124, %c0_125] : memref<488x64xbf16, #tpu.memory_space<vmem>>, vector<8x1xbf16>
    %290 = arith.extf %289 : vector<8x1xbf16> to vector<8x1xf32>
    %291 = vector.broadcast %290 : vector<8x1xf32> to vector<8x128xf32>
    %292 = vector.broadcast %288 : vector<1x128xf32> to vector<8x128xf32>
    %293 = arith.mulf %291, %292 : vector<8x128xf32>
    %294 = arith.addf %283, %293 : vector<8x128xf32>
    %c0_126 = arith.constant 0 : index
    %c0_127 = arith.constant 0 : index
    %295 = vector.load %arg3[%c0_126, %c0_127] : memref<64x8xf32, #tpu.memory_space<vmem>>, vector<8x1xf32>
    %296 = vector.broadcast %295 : vector<8x1xf32> to vector<8x128xf32>
    %297 = arith.addf %294, %296 : vector<8x128xf32>
    %cst_128 = arith.constant 0.000000e+00 : f32
    %298 = vector.broadcast %cst_128 : f32 to vector<8x128xf32>
    %299 = arith.maximumf %297, %298 : vector<8x128xf32>
    %c127_i32_129 = arith.constant 127 : i32
    %300 = tpu.dynamic_rotate %299 by %c127_i32_129 dim 1 : vector<8x128xf32>, i32 -> vector<8x128xf32>
    %301 = arith.maximumf %299, %300 : vector<8x128xf32>
    %cst_130 = arith.constant dense<0.000000e+00> : vector<8x128xf32>
    %302 = tpu.matmul %301, %1, %cst_130 {dimension_numbers = #tpu.dot_dimension_numbers<[1], [0], [0], [1], [0, 0, 1, 1], [], []>} : vector<8x128xf32>, vector<128x128xf32>, vector<8x128xf32> -> vector<8x128xf32>
    %c2_i32_131 = arith.constant 2 : i32
    %303 = tpu.dynamic_rotate %302 by %c2_i32_131 dim 1 : vector<8x128xf32>, i32 -> vector<8x128xf32>
    %c2_i32_132 = arith.constant 2 : i32
    %304 = vector.broadcast %c2_i32_132 : i32 to vector<1x128xi32>
    %305 = arith.cmpi sge, %0, %304 : vector<1x128xi32>
    %cst_133 = arith.constant 0.000000e+00 : f32
    %306 = vector.shape_cast %305 : vector<1x128xi1> to vector<1x128xi1>
    %307 = vector.broadcast %306 : vector<1x128xi1> to vector<8x128xi1>
    %308 = vector.broadcast %cst_133 : f32 to vector<8x128xf32>
    %309 = arith.select %307, %303, %308 : vector<8x128xi1>, vector<8x128xf32>
    %c56_134 = arith.constant 56 : index
    %c0_135 = arith.constant 0 : index
    %310 = vector.load %arg2[%c56_134, %c0_135] : memref<488x64xbf16, #tpu.memory_space<vmem>>, vector<16x8xbf16>
    %311 = arith.extf %310 : vector<16x8xbf16> to vector<16x8xf32>
    %cst_136 = arith.constant dense<0.000000e+00> : vector<16x128xf32>
    %312 = tpu.matmul %311, %309, %cst_136 {dimension_numbers = #tpu.dot_dimension_numbers<[1], [0], [0], [1], [0, 0, 1, 1], [], []>} : vector<16x8xf32>, vector<8x128xf32>, vector<16x128xf32> -> vector<16x128xf32>
    %c1_i32_137 = arith.constant 1 : i32
    %313 = tpu.dynamic_rotate %302 by %c1_i32_137 dim 1 : vector<8x128xf32>, i32 -> vector<8x128xf32>
    %c1_i32_138 = arith.constant 1 : i32
    %314 = vector.broadcast %c1_i32_138 : i32 to vector<1x128xi32>
    %315 = arith.cmpi sge, %0, %314 : vector<1x128xi32>
    %cst_139 = arith.constant 0.000000e+00 : f32
    %316 = vector.shape_cast %315 : vector<1x128xi1> to vector<1x128xi1>
    %317 = vector.broadcast %316 : vector<1x128xi1> to vector<8x128xi1>
    %318 = vector.broadcast %cst_139 : f32 to vector<8x128xf32>
    %319 = arith.select %317, %313, %318 : vector<8x128xi1>, vector<8x128xf32>
    %c72_140 = arith.constant 72 : index
    %c0_141 = arith.constant 0 : index
    %320 = vector.load %arg2[%c72_140, %c0_141] : memref<488x64xbf16, #tpu.memory_space<vmem>>, vector<16x8xbf16>
    %321 = arith.extf %320 : vector<16x8xbf16> to vector<16x8xf32>
    %cst_142 = arith.constant dense<0.000000e+00> : vector<16x128xf32>
    %322 = tpu.matmul %321, %319, %cst_142 {dimension_numbers = #tpu.dot_dimension_numbers<[1], [0], [0], [1], [0, 0, 1, 1], [], []>} : vector<16x8xf32>, vector<8x128xf32>, vector<16x128xf32> -> vector<16x128xf32>
    %323 = arith.addf %312, %322 : vector<16x128xf32>
    %c88_143 = arith.constant 88 : index
    %c0_144 = arith.constant 0 : index
    %324 = vector.load %arg2[%c88_143, %c0_144] : memref<488x64xbf16, #tpu.memory_space<vmem>>, vector<16x8xbf16>
    %325 = arith.extf %324 : vector<16x8xbf16> to vector<16x8xf32>
    %cst_145 = arith.constant dense<0.000000e+00> : vector<16x128xf32>
    %326 = tpu.matmul %325, %302, %cst_145 {dimension_numbers = #tpu.dot_dimension_numbers<[1], [0], [0], [1], [0, 0, 1, 1], [], []>} : vector<16x8xf32>, vector<8x128xf32>, vector<16x128xf32> -> vector<16x128xf32>
    %327 = arith.addf %323, %326 : vector<16x128xf32>
    %c127_i32_146 = arith.constant 127 : i32
    %328 = tpu.dynamic_rotate %302 by %c127_i32_146 dim 1 : vector<8x128xf32>, i32 -> vector<8x128xf32>
    %c63_i32_147 = arith.constant 63 : i32
    %329 = vector.broadcast %c63_i32_147 : i32 to vector<1x128xi32>
    %330 = arith.cmpi slt, %0, %329 : vector<1x128xi32>
    %cst_148 = arith.constant 0.000000e+00 : f32
    %331 = vector.shape_cast %330 : vector<1x128xi1> to vector<1x128xi1>
    %332 = vector.broadcast %331 : vector<1x128xi1> to vector<8x128xi1>
    %333 = vector.broadcast %cst_148 : f32 to vector<8x128xf32>
    %334 = arith.select %332, %328, %333 : vector<8x128xi1>, vector<8x128xf32>
    %c104_149 = arith.constant 104 : index
    %c0_150 = arith.constant 0 : index
    %335 = vector.load %arg2[%c104_149, %c0_150] : memref<488x64xbf16, #tpu.memory_space<vmem>>, vector<16x8xbf16>
    %336 = arith.extf %335 : vector<16x8xbf16> to vector<16x8xf32>
    %cst_151 = arith.constant dense<0.000000e+00> : vector<16x128xf32>
    %337 = tpu.matmul %336, %334, %cst_151 {dimension_numbers = #tpu.dot_dimension_numbers<[1], [0], [0], [1], [0, 0, 1, 1], [], []>} : vector<16x8xf32>, vector<8x128xf32>, vector<16x128xf32> -> vector<16x128xf32>
    %338 = arith.addf %327, %337 : vector<16x128xf32>
    %c126_i32_152 = arith.constant 126 : i32
    %339 = tpu.dynamic_rotate %302 by %c126_i32_152 dim 1 : vector<8x128xf32>, i32 -> vector<8x128xf32>
    %c62_i32_153 = arith.constant 62 : i32
    %340 = vector.broadcast %c62_i32_153 : i32 to vector<1x128xi32>
    %341 = arith.cmpi slt, %0, %340 : vector<1x128xi32>
    %cst_154 = arith.constant 0.000000e+00 : f32
    %342 = vector.shape_cast %341 : vector<1x128xi1> to vector<1x128xi1>
    %343 = vector.broadcast %342 : vector<1x128xi1> to vector<8x128xi1>
    %344 = vector.broadcast %cst_154 : f32 to vector<8x128xf32>
    %345 = arith.select %343, %339, %344 : vector<8x128xi1>, vector<8x128xf32>
    %c120_155 = arith.constant 120 : index
    %c0_156 = arith.constant 0 : index
    %346 = vector.load %arg2[%c120_155, %c0_156] : memref<488x64xbf16, #tpu.memory_space<vmem>>, vector<16x8xbf16>
    %347 = arith.extf %346 : vector<16x8xbf16> to vector<16x8xf32>
    %cst_157 = arith.constant dense<0.000000e+00> : vector<16x128xf32>
    %348 = tpu.matmul %347, %345, %cst_157 {dimension_numbers = #tpu.dot_dimension_numbers<[1], [0], [0], [1], [0, 0, 1, 1], [], []>} : vector<16x8xf32>, vector<8x128xf32>, vector<16x128xf32> -> vector<16x128xf32>
    %349 = arith.addf %338, %348 : vector<16x128xf32>
    %c0_158 = arith.constant 0 : index
    %c1_159 = arith.constant 1 : index
    %350 = vector.load %arg3[%c0_158, %c1_159] : memref<64x8xf32, #tpu.memory_space<vmem>>, vector<16x1xf32>
    %351 = vector.broadcast %350 : vector<16x1xf32> to vector<16x128xf32>
    %352 = arith.addf %349, %351 : vector<16x128xf32>
    %cst_160 = arith.constant 0.000000e+00 : f32
    %353 = vector.broadcast %cst_160 : f32 to vector<16x128xf32>
    %354 = arith.maximumf %352, %353 : vector<16x128xf32>
    %c127_i32_161 = arith.constant 127 : i32
    %355 = tpu.dynamic_rotate %354 by %c127_i32_161 dim 1 : vector<16x128xf32>, i32 -> vector<16x128xf32>
    %356 = arith.maximumf %354, %355 : vector<16x128xf32>
    %cst_162 = arith.constant dense<0.000000e+00> : vector<16x128xf32>
    %357 = tpu.matmul %356, %1, %cst_162 {dimension_numbers = #tpu.dot_dimension_numbers<[1], [0], [0], [1], [0, 0, 1, 1], [], []>} : vector<16x128xf32>, vector<128x128xf32>, vector<16x128xf32> -> vector<16x128xf32>
    %c1_i32_163 = arith.constant 1 : i32
    %358 = tpu.dynamic_rotate %357 by %c1_i32_163 dim 1 : vector<16x128xf32>, i32 -> vector<16x128xf32>
    %c1_i32_164 = arith.constant 1 : i32
    %359 = vector.broadcast %c1_i32_164 : i32 to vector<1x128xi32>
    %360 = arith.cmpi sge, %0, %359 : vector<1x128xi32>
    %cst_165 = arith.constant 0.000000e+00 : f32
    %361 = vector.shape_cast %360 : vector<1x128xi1> to vector<1x128xi1>
    %362 = vector.broadcast %361 : vector<1x128xi1> to vector<16x128xi1>
    %363 = vector.broadcast %cst_165 : f32 to vector<16x128xf32>
    %364 = arith.select %362, %358, %363 : vector<16x128xi1>, vector<16x128xf32>
    %c136_166 = arith.constant 136 : index
    %c0_167 = arith.constant 0 : index
    %365 = vector.load %arg2[%c136_166, %c0_167] : memref<488x64xbf16, #tpu.memory_space<vmem>>, vector<32x16xbf16>
    %366 = arith.extf %365 : vector<32x16xbf16> to vector<32x16xf32>
    %cst_168 = arith.constant dense<0.000000e+00> : vector<32x128xf32>
    %367 = tpu.matmul %366, %364, %cst_168 {dimension_numbers = #tpu.dot_dimension_numbers<[1], [0], [0], [1], [0, 0, 1, 1], [], []>} : vector<32x16xf32>, vector<16x128xf32>, vector<32x128xf32> -> vector<32x128xf32>
    %c168_169 = arith.constant 168 : index
    %c0_170 = arith.constant 0 : index
    %368 = vector.load %arg2[%c168_169, %c0_170] : memref<488x64xbf16, #tpu.memory_space<vmem>>, vector<32x16xbf16>
    %369 = arith.extf %368 : vector<32x16xbf16> to vector<32x16xf32>
    %cst_171 = arith.constant dense<0.000000e+00> : vector<32x128xf32>
    %370 = tpu.matmul %369, %357, %cst_171 {dimension_numbers = #tpu.dot_dimension_numbers<[1], [0], [0], [1], [0, 0, 1, 1], [], []>} : vector<32x16xf32>, vector<16x128xf32>, vector<32x128xf32> -> vector<32x128xf32>
    %371 = arith.addf %367, %370 : vector<32x128xf32>
    %c127_i32_172 = arith.constant 127 : i32
    %372 = tpu.dynamic_rotate %357 by %c127_i32_172 dim 1 : vector<16x128xf32>, i32 -> vector<16x128xf32>
    %c31_i32_173 = arith.constant 31 : i32
    %373 = vector.broadcast %c31_i32_173 : i32 to vector<1x128xi32>
    %374 = arith.cmpi slt, %0, %373 : vector<1x128xi32>
    %cst_174 = arith.constant 0.000000e+00 : f32
    %375 = vector.shape_cast %374 : vector<1x128xi1> to vector<1x128xi1>
    %376 = vector.broadcast %375 : vector<1x128xi1> to vector<16x128xi1>
    %377 = vector.broadcast %cst_174 : f32 to vector<16x128xf32>
    %378 = arith.select %376, %372, %377 : vector<16x128xi1>, vector<16x128xf32>
    %c200_175 = arith.constant 200 : index
    %c0_176 = arith.constant 0 : index
    %379 = vector.load %arg2[%c200_175, %c0_176] : memref<488x64xbf16, #tpu.memory_space<vmem>>, vector<32x16xbf16>
    %380 = arith.extf %379 : vector<32x16xbf16> to vector<32x16xf32>
    %cst_177 = arith.constant dense<0.000000e+00> : vector<32x128xf32>
    %381 = tpu.matmul %380, %378, %cst_177 {dimension_numbers = #tpu.dot_dimension_numbers<[1], [0], [0], [1], [0, 0, 1, 1], [], []>} : vector<32x16xf32>, vector<16x128xf32>, vector<32x128xf32> -> vector<32x128xf32>
    %382 = arith.addf %371, %381 : vector<32x128xf32>
    %c0_178 = arith.constant 0 : index
    %c2_179 = arith.constant 2 : index
    %383 = vector.load %arg3[%c0_178, %c2_179] : memref<64x8xf32, #tpu.memory_space<vmem>>, vector<32x1xf32>
    %384 = vector.broadcast %383 : vector<32x1xf32> to vector<32x128xf32>
    %385 = arith.addf %382, %384 : vector<32x128xf32>
    %cst_180 = arith.constant 0.000000e+00 : f32
    %386 = vector.broadcast %cst_180 : f32 to vector<32x128xf32>
    %387 = arith.maximumf %385, %386 : vector<32x128xf32>
    %c127_i32_181 = arith.constant 127 : i32
    %388 = tpu.dynamic_rotate %387 by %c127_i32_181 dim 1 : vector<32x128xf32>, i32 -> vector<32x128xf32>
    %389 = arith.maximumf %387, %388 : vector<32x128xf32>
    %cst_182 = arith.constant dense<0.000000e+00> : vector<32x128xf32>
    %390 = tpu.matmul %389, %1, %cst_182 {dimension_numbers = #tpu.dot_dimension_numbers<[1], [0], [0], [1], [0, 0, 1, 1], [], []>} : vector<32x128xf32>, vector<128x128xf32>, vector<32x128xf32> -> vector<32x128xf32>
    %c1_i32_183 = arith.constant 1 : i32
    %391 = tpu.dynamic_rotate %390 by %c1_i32_183 dim 1 : vector<32x128xf32>, i32 -> vector<32x128xf32>
    %c1_i32_184 = arith.constant 1 : i32
    %392 = vector.broadcast %c1_i32_184 : i32 to vector<1x128xi32>
    %393 = arith.cmpi sge, %0, %392 : vector<1x128xi32>
    %cst_185 = arith.constant 0.000000e+00 : f32
    %394 = vector.shape_cast %393 : vector<1x128xi1> to vector<1x128xi1>
    %395 = vector.broadcast %394 : vector<1x128xi1> to vector<32x128xi1>
    %396 = vector.broadcast %cst_185 : f32 to vector<32x128xf32>
    %397 = arith.select %395, %391, %396 : vector<32x128xi1>, vector<32x128xf32>
    %c232_186 = arith.constant 232 : index
    %c0_187 = arith.constant 0 : index
    %398 = vector.load %arg2[%c232_186, %c0_187] : memref<488x64xbf16, #tpu.memory_space<vmem>>, vector<64x32xbf16>
    %399 = arith.extf %398 : vector<64x32xbf16> to vector<64x32xf32>
    %cst_188 = arith.constant dense<0.000000e+00> : vector<64x128xf32>
    %400 = tpu.matmul %399, %397, %cst_188 {dimension_numbers = #tpu.dot_dimension_numbers<[1], [0], [0], [1], [0, 0, 1, 1], [], []>} : vector<64x32xf32>, vector<32x128xf32>, vector<64x128xf32> -> vector<64x128xf32>
    %c296_189 = arith.constant 296 : index
    %c0_190 = arith.constant 0 : index
    %401 = vector.load %arg2[%c296_189, %c0_190] : memref<488x64xbf16, #tpu.memory_space<vmem>>, vector<64x32xbf16>
    %402 = arith.extf %401 : vector<64x32xbf16> to vector<64x32xf32>
    %cst_191 = arith.constant dense<0.000000e+00> : vector<64x128xf32>
    %403 = tpu.matmul %402, %390, %cst_191 {dimension_numbers = #tpu.dot_dimension_numbers<[1], [0], [0], [1], [0, 0, 1, 1], [], []>} : vector<64x32xf32>, vector<32x128xf32>, vector<64x128xf32> -> vector<64x128xf32>
    %404 = arith.addf %400, %403 : vector<64x128xf32>
    %c127_i32_192 = arith.constant 127 : i32
    %405 = tpu.dynamic_rotate %390 by %c127_i32_192 dim 1 : vector<32x128xf32>, i32 -> vector<32x128xf32>
    %c15_i32_193 = arith.constant 15 : i32
    %406 = vector.broadcast %c15_i32_193 : i32 to vector<1x128xi32>
    %407 = arith.cmpi slt, %0, %406 : vector<1x128xi32>
    %cst_194 = arith.constant 0.000000e+00 : f32
    %408 = vector.shape_cast %407 : vector<1x128xi1> to vector<1x128xi1>
    %409 = vector.broadcast %408 : vector<1x128xi1> to vector<32x128xi1>
    %410 = vector.broadcast %cst_194 : f32 to vector<32x128xf32>
    %411 = arith.select %409, %405, %410 : vector<32x128xi1>, vector<32x128xf32>
    %c360_195 = arith.constant 360 : index
    %c0_196 = arith.constant 0 : index
    %412 = vector.load %arg2[%c360_195, %c0_196] : memref<488x64xbf16, #tpu.memory_space<vmem>>, vector<64x32xbf16>
    %413 = arith.extf %412 : vector<64x32xbf16> to vector<64x32xf32>
    %cst_197 = arith.constant dense<0.000000e+00> : vector<64x128xf32>
    %414 = tpu.matmul %413, %411, %cst_197 {dimension_numbers = #tpu.dot_dimension_numbers<[1], [0], [0], [1], [0, 0, 1, 1], [], []>} : vector<64x32xf32>, vector<32x128xf32>, vector<64x128xf32> -> vector<64x128xf32>
    %415 = arith.addf %404, %414 : vector<64x128xf32>
    %c0_198 = arith.constant 0 : index
    %c3_199 = arith.constant 3 : index
    %416 = vector.load %arg3[%c0_198, %c3_199] : memref<64x8xf32, #tpu.memory_space<vmem>>, vector<64x1xf32>
    %417 = vector.broadcast %416 : vector<64x1xf32> to vector<64x128xf32>
    %418 = arith.addf %415, %417 : vector<64x128xf32>
    %cst_200 = arith.constant 0.000000e+00 : f32
    %419 = vector.broadcast %cst_200 : f32 to vector<64x128xf32>
    %420 = arith.maximumf %418, %419 : vector<64x128xf32>
    %c127_i32_201 = arith.constant 127 : i32
    %421 = tpu.dynamic_rotate %420 by %c127_i32_201 dim 1 : vector<64x128xf32>, i32 -> vector<64x128xf32>
    %422 = arith.maximumf %420, %421 : vector<64x128xf32>
    %cst_202 = arith.constant dense<0.000000e+00> : vector<64x128xf32>
    %423 = tpu.matmul %422, %1, %cst_202 {dimension_numbers = #tpu.dot_dimension_numbers<[1], [0], [0], [1], [0, 0, 1, 1], [], []>} : vector<64x128xf32>, vector<128x128xf32>, vector<64x128xf32> -> vector<64x128xf32>
    %c8_i32_203 = arith.constant 8 : i32
    %424 = vector.broadcast %c8_i32_203 : i32 to vector<1x128xi32>
    %425 = arith.cmpi slt, %0, %424 : vector<1x128xi32>
    %cst_204 = arith.constant 0.000000e+00 : f32
    %426 = vector.shape_cast %425 : vector<1x128xi1> to vector<1x128xi1>
    %427 = vector.broadcast %426 : vector<1x128xi1> to vector<64x128xi1>
    %428 = vector.broadcast %cst_204 : f32 to vector<64x128xf32>
    %429 = arith.select %427, %423, %428 : vector<64x128xi1>, vector<64x128xf32>
    %cst_205 = arith.constant dense<0.000000e+00> : vector<64x128xf32>
    %430 = tpu.matmul %3, %429, %cst_205 {dimension_numbers = #tpu.dot_dimension_numbers<[1], [0], [0], [1], [0, 0, 1, 1], [], []>} : vector<64x64xf32>, vector<64x128xf32>, vector<64x128xf32> -> vector<64x128xf32>
    %cst_206 = arith.constant dense<0.000000e+00> : vector<64xf32>
    %431 = vector.multi_reduction <add>, %430, %cst_206 [1] : vector<64x128xf32> to vector<64xf32>
    %432 = vector.shape_cast %431 : vector<64xf32> to vector<64x1xf32>
    %cst_207 = arith.constant 1.250000e-01 : f32
    %433 = vector.broadcast %cst_207 : f32 to vector<64x1xf32>
    %434 = arith.mulf %432, %433 : vector<64x1xf32>
    %435 = arith.addf %434, %4 : vector<64x1xf32>
    %c1_208 = arith.constant 1 : index
    %c0_209 = arith.constant 0 : index
    %c0_210 = arith.constant 0 : index
    %436 = vector.load %arg5[%c1_208, %c0_209, %c0_210] : memref<2x64x1xf32, #tpu.memory_space<vmem>>, vector<1x64x1xf32>
    %437 = vector.shape_cast %436 : vector<1x64x1xf32> to vector<64x1xf32>
    %438 = vector.shape_cast %435 : vector<64x1xf32> to vector<1x64x1xf32>
    tpu.vector_store %arg5[%c1_208, %c0_209, %c0_210], %438 {strides = array<i32>} : memref<2x64x1xf32, #tpu.memory_space<vmem>>, vector<1x64x1xf32>,
    return
  }
  func.func @transform_0(%arg0: i32) -> (i32, i32, i32) {
    %c0_i32 = arith.constant 0 : i32
    %c0_i32_0 = arith.constant 0 : i32
    %c0_i32_1 = arith.constant 0 : i32
    return %arg0, %c0_i32, %c0_i32_0 : i32, i32, i32
  }
  func.func @transform_1(%arg0: i32) -> (i32, i32) {
    %c0_i32 = arith.constant 0 : i32
    %c0_i32_0 = arith.constant 0 : i32
    %c0_i32_1 = arith.constant 0 : i32
    return %c0_i32, %c0_i32_0 : i32, i32
  }
  func.func @transform_2(%arg0: i32) -> (i32, i32) {
    %c0_i32 = arith.constant 0 : i32
    %c0_i32_0 = arith.constant 0 : i32
    %c0_i32_1 = arith.constant 0 : i32
    return %c0_i32, %c0_i32_0 : i32, i32
  }
  func.func @transform_3(%arg0: i32) -> (i32, i32) {
    %c0_i32 = arith.constant 0 : i32
    %c0_i32_0 = arith.constant 0 : i32
    %c0_i32_1 = arith.constant 0 : i32
    return %c0_i32, %c0_i32_0 : i32, i32
  }
  func.func @transform_4(%arg0: i32) -> (i32, i32, i32) {
    %c0_i32 = arith.constant 0 : i32
    %c0_i32_0 = arith.constant 0 : i32
    %c0_i32_1 = arith.constant 0 : i32
    return %arg0, %c0_i32, %c0_i32_0 : i32, i32, i32
  }
}

</mosaic_0001>

<llo_original>
// kernel: tpu_custom_call.1
$region0: #{tpu_custom_call.1}
  #allocation0 [shape = 'u32[]', space=smem, size = 0x4, offset = 0x4, fixed_abs, tag = 'smem constant byte address 0x4 - core index']
  #allocation1 [shape = 'u32[144,128]{1,0:T(1,128)}', space=vmem, size = 0x12000, scoped, tag = 'internal scratch']
  %s0 = inlined_call_operand.vmem [shape: f32[4,1,128], index: 0, kind: input, shape index: {}]
  %s1 = inlined_call_operand.vmem [shape: bf16[488,64], index: 1, kind: input, shape index: {}]
  %s2 = inlined_call_operand.vmem [shape: f32[64,8], index: 2, kind: input, shape index: {}]
  %s3 = inlined_call_operand.vmem [shape: f32[128,128], index: 3, kind: input, shape index: {}]
  %s4 = inlined_call_operand.vmem [shape: f32[4,64,1], index: 4, kind: output, shape index: {}]
  %s5 = sld [smem:[#allocation0]]
  $region49: #{tpu_custom_call.1} parent=0
    _
  %s7 = ssub.s32 1, %s5
  %s8 = scalar_select 0, %s7, %s5
  loop: start=0, step=1, limit=4
  $region2: #{tpu_custom_call.1} parent=0 // loop_pre_header
    _
  $region3: #{tpu_custom_call.1} parent=0 // loop_header
    %s10 = sphi 0, %s14
    %p11 = scmp.ge.s32.totalorder %s10, 4
    %s20 = sphi 0, %s22
    %s23 = sphi 0, %s20
    %s24 = sphi 0, %s23
    %s40 = sphi 0, %s24
    %s44 = sphi 0, %s44
    %s46 = sphi 0, %s44
    %s47 = sphi 0, %s46
    %s61 = sphi 0, %s47
    %s65 = sphi 0, %s65
    %s67 = sphi 0, %s65
    %s68 = sphi 0, %s67
    %s82 = sphi 0, %s68
    %s86 = sphi 0, %s86
    %s88 = sphi 0, %s86
    %s89 = sphi 0, %s88
    %s103 = sphi 0, %s89
    %s109 = sphi 0, %s111
    %s112 = sphi 0, %s109
    %s113 = sphi 0, %s112
    %s129 = sphi 0, %s113
  $region4: #{tpu_custom_call.1} parent=0 // loop_header_branch
    %13 = sbr.rel (%p11) target = $region8
  $region5: #{tpu_custom_call.1} parent=0 // loop_body
    %s15 = ssub.s32 %s10, 1
    %s16 = ssub.s32 %s10, 2
    %s17 = sadd.s32 %s10, 1
    %s18 = ssub.s32 %s10, %s17
    %p19 = scmp.eq.s32.totalorder %s18, 0
    %s21 = sadd.s32 %s20, 1
    %s22 = scalar_select %p19, %s20, %s21
    %p25 = pneg %p19
    %p26 = scmp.eq.s32.totalorder %s10, 1
    %p27 = por %p25, %p26
    %p28 = scmp.ne.s32.totalorder %s20, %s23
    %p29 = scmp.eq.s32.totalorder %s10, 0
    %p30 = por %p28, %p29
    %p31 = scmp.ne.s32.totalorder %s20, %s23
    %p32 = scmp.eq.s32.totalorder %s15, 1
    %p33 = por %p31, %p32
    %p34 = scmp.ne.s32.totalorder %s23, %s24
    %p35 = scmp.eq.s32.totalorder %s15, 0
    %p36 = por %p34, %p35
    %p37 = scmp.ne.s32.totalorder %s23, %s24
    %p38 = scmp.eq.s32.totalorder %s16, 1
    %p39 = por %p37, %p38
    %p41 = scmp.ne.s32.totalorder %s24, %s40
    %p42 = scmp.eq.s32.totalorder %s16, 0
    %p43 = por %p41, %p42
    %s45 = sadd.s32 %s44, 1
    %p48 = scmp.eq.s32.totalorder %s10, 1
    %p49 = scmp.ne.s32.totalorder %s44, %s46
    %p50 = scmp.eq.s32.totalorder %s10, 0
    %p51 = por %p49, %p50
    %p52 = scmp.ne.s32.totalorder %s44, %s46
    %p53 = scmp.eq.s32.totalorder %s15, 1
    %p54 = por %p52, %p53
    %p55 = scmp.ne.s32.totalorder %s46, %s47
    %p56 = scmp.eq.s32.totalorder %s15, 0
    %p57 = por %p55, %p56
    %p58 = scmp.ne.s32.totalorder %s46, %s47
    %p59 = scmp.eq.s32.totalorder %s16, 1
    %p60 = por %p58, %p59
    %p62 = scmp.ne.s32.totalorder %s47, %s61
    %p63 = scmp.eq.s32.totalorder %s16, 0
    %p64 = por %p62, %p63
    %s66 = sadd.s32 %s65, 1
    %p69 = scmp.eq.s32.totalorder %s10, 1
    %p70 = scmp.ne.s32.totalorder %s65, %s67
    %p71 = scmp.eq.s32.totalorder %s10, 0
    %p72 = por %p70, %p71
    %p73 = scmp.ne.s32.totalorder %s65, %s67
    %p74 = scmp.eq.s32.totalorder %s15, 1
    %p75 = por %p73, %p74
    %p76 = scmp.ne.s32.totalorder %s67, %s68
    %p77 = scmp.eq.s32.totalorder %s15, 0
    %p78 = por %p76, %p77
    %p79 = scmp.ne.s32.totalorder %s67, %s68
    %p80 = scmp.eq.s32.totalorder %s16, 1
    %p81 = por %p79, %p80
    %p83 = scmp.ne.s32.totalorder %s68, %s82
    %p84 = scmp.eq.s32.totalorder %s16, 0
    %p85 = por %p83, %p84
    %s87 = sadd.s32 %s86, 1
    %p90 = scmp.eq.s32.totalorder %s10, 1
    %p91 = scmp.ne.s32.totalorder %s86, %s88
    %p92 = scmp.eq.s32.totalorder %s10, 0
    %p93 = por %p91, %p92
    %p94 = scmp.ne.s32.totalorder %s86, %s88
    %p95 = scmp.eq.s32.totalorder %s15, 1
    %p96 = por %p94, %p95
    %p97 = scmp.ne.s32.totalorder %s88, %s89
    %p98 = scmp.eq.s32.totalorder %s15, 0
    %p99 = por %p97, %p98
    %p100 = scmp.ne.s32.totalorder %s88, %s89
    %p101 = scmp.eq.s32.totalorder %s16, 1
    %p102 = por %p100, %p101
    %p104 = scmp.ne.s32.totalorder %s89, %s103
    %p105 = scmp.eq.s32.totalorder %s16, 0
    %p106 = por %p104, %p105
    %s107 = ssub.s32 %s10, %s17
    %p108 = scmp.eq.s32.totalorder %s107, 0
    %s110 = sadd.s32 %s109, 1
    %s111 = scalar_select %p108, %s109, %s110
    %p114 = pneg %p108
    %p115 = scmp.eq.s32.totalorder %s10, 1
    %p116 = por %p114, %p115
    %p117 = scmp.ne.s32.totalorder %s109, %s112
    %p118 = scmp.eq.s32.totalorder %s10, 0
    %p119 = por %p117, %p118
    %p120 = scmp.ne.s32.totalorder %s109, %s112
    %p121 = scmp.eq.s32.totalorder %s15, 1
    %p122 = por %p120, %p121
    %p123 = scmp.ne.s32.totalorder %s112, %s113
    %p124 = scmp.eq.s32.totalorder %s15, 0
    %p125 = por %p123, %p124
    %p126 = scmp.ne.s32.totalorder %s112, %s113
    %p127 = scmp.eq.s32.totalorder %s16, 1
    %p128 = por %p126, %p127
    %p130 = scmp.ne.s32.totalorder %s113, %s129
    %p131 = scmp.eq.s32.totalorder %s16, 0
    %p132 = por %p130, %p131
    %p133 = scmp.le.s32.totalorder 1, %s10
    %p134 = scmp.lt.s32.totalorder %s10, 3
    %p135 = pnand %p133, %p134
    %p136 = pneg %p135
    // Predicated region
    $region9: #{tpu_custom_call.1} parent=5 // pred_check
      _
    $region10: #{tpu_custom_call.1} parent=5 // pred_check_branch
      %138 = sbr.rel (%p135) target = $region12
    $region11: #{tpu_custom_call.1} parent=5 // pred_region
      %s139 = ssub.s32 %s10, 1
      // Predicated region
      $region13: #{tpu_custom_call.1} parent=11 // pred_check
        %p140 = pneg %p57
      $region14: #{tpu_custom_call.1} parent=11 // pred_check_branch
        %142 = sbr.rel (%p140) target = $region16
      $region15: #{tpu_custom_call.1} parent=11 // pred_region
        _
      $region16: #{tpu_custom_call.1} parent=11 // pred_fallthru
        _
      // Predicated region
      $region17: #{tpu_custom_call.1} parent=11 // pred_check
        %p143 = pneg %p78
      $region18: #{tpu_custom_call.1} parent=11 // pred_check_branch
        %145 = sbr.rel (%p143) target = $region20
      $region19: #{tpu_custom_call.1} parent=11 // pred_region
        _
      $region20: #{tpu_custom_call.1} parent=11 // pred_fallthru
        _
      // Predicated region
      $region21: #{tpu_custom_call.1} parent=11 // pred_check
        %p146 = pneg %p99
      $region22: #{tpu_custom_call.1} parent=11 // pred_check_branch
        %148 = sbr.rel (%p146) target = $region24
      $region23: #{tpu_custom_call.1} parent=11 // pred_region
        _
      $region24: #{tpu_custom_call.1} parent=11 // pred_fallthru
        _
    $region12: #{tpu_custom_call.1} parent=5 // pred_fallthru
      _
    %p149 = scmp.lt.s32.totalorder %s10, 2
    // Predicated region
    $region25: #{tpu_custom_call.1} parent=5 // pred_check
      %p150 = pneg %p149
    $region26: #{tpu_custom_call.1} parent=5 // pred_check_branch
      %152 = sbr.rel (%p150) target = $region28
    $region27: #{tpu_custom_call.1} parent=5 // pred_region
      // Predicated region
      $region29: #{tpu_custom_call.1} parent=27 // pred_check
        %p153 = pneg %p30
      $region30: #{tpu_custom_call.1} parent=27 // pred_check_branch
        %155 = sbr.rel (%p153) target = $region32
      $region31: #{tpu_custom_call.1} parent=27 // pred_region
        %s156 = smul.u32 2, %s10
        %p157 = scmp.lt.s32.totalorder %s156, 3
        %s158 = scalar_select %p157, %s156, 3
        %s159 = scalar_lea.vmem %s0, %s158
        %s160 = smul.u32 2, %s10
      $region32: #{tpu_custom_call.1} parent=27 // pred_fallthru
        _
    $region28: #{tpu_custom_call.1} parent=5 // pred_fallthru
      _
    %p161 = scmp.le.s32.totalorder 1, %s10
    %p162 = scmp.lt.s32.totalorder %s10, 3
    %p163 = pnand %p161, %p162
    %p164 = pneg %p163
    // Predicated region
    $region33: #{tpu_custom_call.1} parent=5 // pred_check
      _
    $region34: #{tpu_custom_call.1} parent=5 // pred_check_branch
      %166 = sbr.rel (%p163) target = $region36
    $region35: #{tpu_custom_call.1} parent=5 // pred_region
      %s167 = ssub.s32 %s10, 1
      %s168 = smul.u32 2, %s15
      %p169 = scmp.lt.s32.totalorder %s168, 3
      %s170 = scalar_select %p169, %s168, 3
      %s171 = scalar_lea.vmem %s0, %s170
      %p172 = pneg %p36
      %p173 = pneg %p33
      %p174 = pneg %p57
      %p175 = pneg %p54
      %p176 = pneg %p78
      %p177 = pneg %p75
      %p178 = pneg %p99
      %p179 = pneg %p96
      %p180 = pneg %p125
      %p181 = pneg %p122
      %s182 = smul.u32 2, %s15
      %p183 = scmp.lt.s32.totalorder %s182, 3
      %s184 = scalar_select %p183, %s182, 3
      %s185 = smul.addr %s184, 8
      %s186 = smul.addr %s185, 8
      %s187 = scalar_lea.vmem %s4, %s186
      %s188 = smul.u32 2, %s15
      %p189 = scmp.lt.s32.totalorder %s188, 3
      %s190 = scalar_select %p189, %s188, 3
      %s191 = scalar_lea.vmem %s0, %s190
      %s192 = smul.u32 2, %s15
      %s193 = smul.u32 2, %s15
      %p194 = scmp.lt.s32.totalorder %s193, 3
      %s195 = scalar_select %p194, %s193, 3
      %s196 = smul.addr %s195, 8
      %s197 = smul.addr %s196, 8
      %s198 = scalar_lea.vmem %s4, %s197
      %s199 = smul.u32 2, %s15
      %v200 = vlaneseq
      %v201 = vand.u32 %v200, 127
      %v202 = vld [vmem:[%s3] sm:$0xff]
      %v203 = vld [vmem:[%s3 + $0x8] sm:$0xff]
      %v204 = vld [vmem:[%s3 + $0x10] sm:$0xff]
      %v205 = vld [vmem:[%s3 + $0x18] sm:$0xff]
      %v206 = vld [vmem:[%s3 + $0x20] sm:$0xff]
      %v207 = vld [vmem:[%s3 + $0x28] sm:$0xff]
      %v208 = vld [vmem:[%s3 + $0x30] sm:$0xff]
      %v209 = vld [vmem:[%s3 + $0x38] sm:$0xff]
      %v210 = vld [vmem:[%s3 + $0x40] sm:$0xff]
      %v211 = vld [vmem:[%s3 + $0x48] sm:$0xff]
      %v212 = vld [vmem:[%s3 + $0x50] sm:$0xff]
      %v213 = vld [vmem:[%s3 + $0x58] sm:$0xff]
      %v214 = vld [vmem:[%s3 + $0x60] sm:$0xff]
      %v215 = vld [vmem:[%s3 + $0x68] sm:$0xff]
      %v216 = vld [vmem:[%s3 + $0x70] sm:$0xff]
      %v217 = vld [vmem:[%s3 + $0x78] sm:$0xff]
      %v218 = vld [vmem:[%s1 + $0xd4] sm:$0xf]
      %v219 = vld [vmem:[%s1 + $0xd8] sm:$0xf]
      %v220 = vld [vmem:[%s1 + $0xdc] sm:$0xf]
      %v221 = vld [vmem:[%s1 + $0xe0] sm:$0xf]
      %v222 = vld [vmem:[%s1 + $0xe4] sm:$0xf]
      %v223 = vld [vmem:[%s1 + $0xe8] sm:$0xf]
      %v224 = vld [vmem:[%s1 + $0xec] sm:$0xf]
      %v225 = vld [vmem:[%s1 + $0xf0] sm:$0xf]
      %v226 = vunpack.c.l.bf16 %v218
      %v227 = vunpack.c.l.bf16 %v219
      %v228 = vunpack.c.l.bf16 %v220
      %v229 = vunpack.c.l.bf16 %v221
      %v230 = vunpack.c.l.bf16 %v222
      %v231 = vunpack.c.l.bf16 %v223
      %v232 = vunpack.c.l.bf16 %v224
      %v233 = vunpack.c.l.bf16 %v225
      %v234 = vld [vmem:[%s2] sm:$0xff]
      %v235 = vld [vmem:[%s2 + $0x8] sm:$0xff]
      %v236 = vld [vmem:[%s2 + $0x10] sm:$0xff]
      %v237 = vld [vmem:[%s2 + $0x18] sm:$0xff]
      %v238 = vld [vmem:[%s2 + $0x20] sm:$0xff]
      %v239 = vld [vmem:[%s2 + $0x28] sm:$0xff]
      %v240 = vld [vmem:[%s2 + $0x30] sm:$0xff]
      %v241 = vld [vmem:[%s2 + $0x38] sm:$0xff]
      %v242 = vld [vmem:[%s191] sm:$0x1]
      %243 = vrot.lane.b32.xlu0 %v242, 3
      %v244 = vpop.permute.xlu0 %243
      %vm245 = vcmp.ge.s32.totalorder %v201, 3
      %v246 = vsel %vm245, %v244, 0.0
      %v247 = vld [vmem:[%s1] sm:$0xf]
      %v248 = vunpack.c.l.bf16 %v247
      %250 = vset.pattern.permute.xlu0 0
      %251 = vperm.xlu0 %250, %v248
      %v252 = vpop.permute.xlu0 %251
      %v254 = vlaneseq
      %v255 = vshrl.u32 %v254, 7
      %v256 = vsub.s32 0, %v255
      %v257 = vrot.slane %v246, %v256
      %v258 = vmul.f32 %v252, %v257
      %259 = vrot.lane.b32.xlu0 %v242, 2
      %v260 = vpop.permute.xlu0 %259
      %vm261 = vcmp.ge.s32.totalorder %v201, 2
      %v262 = vsel %vm261, %v260, 0.0
      %v263 = vld [vmem:[%s1 + $0x4] sm:$0xf]
      %v264 = vunpack.c.l.bf16 %v263
      %266 = vset.pattern.permute.xlu0 0
      %267 = vperm.xlu0 %266, %v264
      %v268 = vpop.permute.xlu0 %267
      %v270 = vlaneseq
      %v271 = vshrl.u32 %v270, 7
      %v272 = vsub.s32 0, %v271
      %v273 = vrot.slane %v262, %v272
      %v274 = vmul.f32 %v268, %v273
      %v275 = vadd.f32 %v258, %v274
      %276 = vrot.lane.b32.xlu0 %v242, 1
      %v277 = vpop.permute.xlu0 %276
      %vm278 = vcmp.ge.s32.totalorder %v201, 1
      %v279 = vsel %vm278, %v277, 0.0
      %v280 = vld [vmem:[%s1 + $0x8] sm:$0xf]
      %v281 = vunpack.c.l.bf16 %v280
      %283 = vset.pattern.permute.xlu0 0
      %284 = vperm.xlu0 %283, %v281
      %v285 = vpop.permute.xlu0 %284
      %v287 = vlaneseq
      %v288 = vshrl.u32 %v287, 7
      %v289 = vsub.s32 0, %v288
      %v290 = vrot.slane %v279, %v289
      %v291 = vmul.f32 %v285, %v290
      %v292 = vadd.f32 %v275, %v291
      %v293 = vld [vmem:[%s1 + $0xc] sm:$0xf]
      %v294 = vunpack.c.l.bf16 %v293
      %296 = vset.pattern.permute.xlu0 0
      %297 = vperm.xlu0 %296, %v294
      %v298 = vpop.permute.xlu0 %297
      %v301 = vlaneseq
      %v302 = vshrl.u32 %v301, 7
      %v303 = vsub.s32 0, %v302
      %v304 = vrot.slane %v242, %v303
      %v306 = vmul.f32 %v298, %v304
      %v307 = vadd.f32 %v292, %v306
      %308 = vrot.lane.b32.xlu0 %v242, 127
      %v309 = vpop.permute.xlu0 %308
      %vm310 = vcmp.lt.s32.totalorder %v201, 127
      %v311 = vsel %vm310, %v309, 0.0
      %v312 = vld [vmem:[%s1 + $0x10] sm:$0xf]
      %v313 = vunpack.c.l.bf16 %v312
      %315 = vset.pattern.permute.xlu0 0
      %316 = vperm.xlu0 %315, %v313
      %v317 = vpop.permute.xlu0 %316
      %v319 = vlaneseq
      %v320 = vshrl.u32 %v319, 7
      %v321 = vsub.s32 0, %v320
      %v322 = vrot.slane %v311, %v321
      %v323 = vmul.f32 %v317, %v322
      %v324 = vadd.f32 %v307, %v323
      %325 = vrot.lane.b32.xlu0 %v242, 126
      %v326 = vpop.permute.xlu0 %325
      %vm327 = vcmp.lt.s32.totalorder %v201, 126
      %v328 = vsel %vm327, %v326, 0.0
      %v329 = vld [vmem:[%s1 + $0x14] sm:$0xf]
      %v330 = vunpack.c.l.bf16 %v329
      %332 = vset.pattern.permute.xlu0 0
      %333 = vperm.xlu0 %332, %v330
      %v334 = vpop.permute.xlu0 %333
      %v336 = vlaneseq
      %v337 = vshrl.u32 %v336, 7
      %v338 = vsub.s32 0, %v337
      %v339 = vrot.slane %v328, %v338
      %v340 = vmul.f32 %v334, %v339
      %v341 = vadd.f32 %v324, %v340
      %342 = vrot.lane.b32.xlu0 %v242, 125
      %v343 = vpop.permute.xlu0 %342
      %vm344 = vcmp.lt.s32.totalorder %v201, 125
      %v345 = vsel %vm344, %v343, 0.0
      %v346 = vld [vmem:[%s1 + $0x18] sm:$0xf]
      %v347 = vunpack.c.l.bf16 %v346
      %349 = vset.pattern.permute.xlu0 0
      %350 = vperm.xlu0 %349, %v347
      %v351 = vpop.permute.xlu0 %350
      %v353 = vlaneseq
      %v354 = vshrl.u32 %v353, 7
      %v355 = vsub.s32 0, %v354
      %v356 = vrot.slane %v345, %v355
      %v357 = vmul.f32 %v351, %v356
      %v358 = vadd.f32 %v341, %v357
      %v359 = vld [vmem:[%s2] sm:$0xff]
      %361 = vset.pattern.permute.xlu0 0
      %362 = vperm.xlu0 %361, %v359
      %v363 = vpop.permute.xlu0 %362
      %v365 = vadd.f32 %v358, %v363
      %v366 = vmax.f32 %v365, 0.0
      %367 = vrot.lane.b32.xlu0 %v366, 127
      %v368 = vpop.permute.xlu0 %367
      %v369 = vmax.f32 %v366, %v368
      %370 = vmatprep.subr.mxu0 0.0
      %371 = vmatpush1.msra.mxu0 %v202
      %372 = vmatprep.subr.mxu0 0.0
      %373 = vmatpush1.msra.mxu0 %v203
      %374 = vmatprep.subr.mxu0 0.0
      %375 = vmatpush1.msra.mxu0 %v204
      %376 = vmatprep.subr.mxu0 0.0
      %377 = vmatpush1.msra.mxu0 %v205
      %378 = vmatprep.subr.mxu0 0.0
      %379 = vmatpush1.msra.mxu0 %v206
      %380 = vmatprep.subr.mxu0 0.0
      %381 = vmatpush1.msra.mxu0 %v207
      %382 = vmatprep.subr.mxu0 0.0
      %383 = vmatpush1.msra.mxu0 %v208
      %384 = vmatprep.subr.mxu0 0.0
      %385 = vmatpush1.msra.mxu0 %v209
      %386 = vmatprep.subr.mxu0 0.0
      %387 = vmatpush1.msra.mxu0 %v210
      %388 = vmatprep.subr.mxu0 0.0
      %389 = vmatpush1.msra.mxu0 %v211
      %390 = vmatprep.subr.mxu0 0.0
      %391 = vmatpush1.msra.mxu0 %v212
      %392 = vmatprep.subr.mxu0 0.0
      %393 = vmatpush1.msra.mxu0 %v213
      %394 = vmatprep.subr.mxu0 0.0
      %395 = vmatpush1.msra.mxu0 %v214
      %396 = vmatprep.subr.mxu0 0.0
      %397 = vmatpush1.msra.mxu0 %v215
      %398 = vmatprep.subr.mxu0 0.0
      %399 = vmatpush1.msra.mxu0 %v216
      %400 = vmatprep.subr.mxu0 0.0
      %401 = vmatpush1.msra.mxu0 %v217
      %402 = vmatprep.subr.mxu0 0.0
      %403 = vmatpush1.msra.mxu0 0.0
      %404 = vmatprep.subr.mxu0 0.0
      %405 = vmatpush1.msra.mxu0 0.0
      %406 = vmatprep.subr.mxu0 0.0
      %407 = vmatpush1.msra.mxu0 0.0
      %408 = vmatprep.subr.mxu0 0.0
      %409 = vmatpush1.msra.mxu0 0.0
      %410 = vmatprep.subr.mxu0 0.0
      %411 = vmatpush1.msra.mxu0 0.0
      %412 = vmatprep.subr.mxu0 0.0
      %413 = vmatpush1.msra.mxu0 0.0
      %414 = vmatprep.subr.mxu0 0.0
      %415 = vmatpush1.msra.mxu0 0.0
      %416 = vmatprep.subr.mxu0 0.0
      %417 = vmatpush1.msra.mxu0 0.0
      %418 = vmatprep.subr.mxu0 0.0
      %419 = vmatpush1.msra.mxu0 0.0
      %420 = vmatprep.subr.mxu0 0.0
      %421 = vmatpush1.msra.mxu0 0.0
      %422 = vmatprep.subr.mxu0 0.0
      %423 = vmatpush1.msra.mxu0 0.0
      %424 = vmatprep.subr.mxu0 0.0
      %425 = vmatpush1.msra.mxu0 0.0
      %426 = vmatprep.subr.mxu0 0.0
      %427 = vmatpush1.msra.mxu0 0.0
      %428 = vmatprep.subr.mxu0 0.0
      %429 = vmatpush1.msra.mxu0 0.0
      %430 = vmatprep.subr.mxu0 0.0
      %431 = vmatpush1.msra.mxu0 0.0
      %432 = vmatprep.subr.mxu0 0.0
      %433 = vmatpush1.msra.mxu0 0.0
      %434 = vmatprep.mubr.f32.mxu0 0.0
      %435 = vmatmul.mubr.f32.gmra.mrb[0].mxu0 %v369
      %v436 = vpop.f32.mrb[0].mxu0
      %v437 = vadd.f32 0.0, %v436
      %v438 = vpop.f32.mrb[0].mxu0
      %439 = vdwg.mxu0
      %440 = vrot.lane.b32.xlu0 %v437, 2
      %v441 = vpop.permute.xlu0 %440
      %v442 = vsel %vm261, 1, 0
      %vm443 = vcmp.eq.s32.totalorder %v442, 1
      %v444 = vsel %vm443, %v441, 0.0
      %v445 = vld [vmem:[%s1 + $0x1c] sm:$0xf]
      %v446 = vld [vmem:[%s1 + $0x20] sm:$0xf]
      %v447 = vunpack.c.l.bf16 %v445
      %v448 = vunpack.c.l.bf16 %v446
      %449 = vrot.lane.b32.xlu0 %v437, 1
      %v450 = vpop.permute.xlu0 %449
      %v451 = vsel %vm278, 1, 0
      %vm452 = vcmp.eq.s32.totalorder %v451, 1
      %v453 = vsel %vm452, %v450, 0.0
      %v454 = vld [vmem:[%s1 + $0x24] sm:$0xf]
      %v455 = vld [vmem:[%s1 + $0x28] sm:$0xf]
      %v456 = vunpack.c.l.bf16 %v454
      %v457 = vunpack.c.l.bf16 %v455
      %vm458 = vcmask 64512
      %v460 = vsel %vm458, %v456, 0
      %v463 = vsel %vm458, %v457, 0
      %465 = vmatprep.subr.mxu0 0.0
      %466 = vmatpush1.msra.mxu0 %v453
      %467 = vmatprep.subr.mxu0 0.0
      %468 = vmatpush1.msra.mxu0 0.0
      %469 = vmatprep.subr.mxu0 0.0
      %470 = vmatpush1.msra.mxu0 0.0
      %471 = vmatprep.subr.mxu0 0.0
      %472 = vmatpush1.msra.mxu0 0.0
      %473 = vmatprep.subr.mxu0 0.0
      %474 = vmatpush1.msra.mxu0 0.0
      %475 = vmatprep.subr.mxu0 0.0
      %476 = vmatpush1.msra.mxu0 0.0
      %477 = vmatprep.subr.mxu0 0.0
      %478 = vmatpush1.msra.mxu0 0.0
      %479 = vmatprep.subr.mxu0 0.0
      %480 = vmatpush1.msra.mxu0 0.0
      %481 = vmatprep.subr.mxu0 0.0
      %482 = vmatpush1.msra.mxu0 0.0
      %483 = vmatprep.subr.mxu0 0.0
      %484 = vmatpush1.msra.mxu0 0.0
      %485 = vmatprep.subr.mxu0 0.0
      %486 = vmatpush1.msra.mxu0 0.0
      %487 = vmatprep.subr.mxu0 0.0
      %488 = vmatpush1.msra.mxu0 0.0
      %489 = vmatprep.subr.mxu0 0.0
      %490 = vmatpush1.msra.mxu0 0.0
      %491 = vmatprep.subr.mxu0 0.0
      %492 = vmatpush1.msra.mxu0 0.0
      %493 = vmatprep.subr.mxu0 0.0
      %494 = vmatpush1.msra.mxu0 0.0
      %495 = vmatprep.subr.mxu0 0.0
      %496 = vmatpush1.msra.mxu0 0.0
      %497 = vmatprep.subr.mxu0 0.0
      %498 = vmatpush1.msra.mxu0 0.0
      %499 = vmatprep.subr.mxu0 0.0
      %500 = vmatpush1.msra.mxu0 0.0
      %501 = vmatprep.subr.mxu0 0.0
      %502 = vmatpush1.msra.mxu0 0.0
      %503 = vmatprep.subr.mxu0 0.0
      %504 = vmatpush1.msra.mxu0 0.0
      %505 = vmatprep.subr.mxu0 0.0
      %506 = vmatpush1.msra.mxu0 0.0
      %507 = vmatprep.subr.mxu0 0.0
      %508 = vmatpush1.msra.mxu0 0.0
      %509 = vmatprep.subr.mxu0 0.0
      %510 = vmatpush1.msra.mxu0 0.0
      %511 = vmatprep.subr.mxu0 0.0
      %512 = vmatpush1.msra.mxu0 0.0
      %513 = vmatprep.subr.mxu0 0.0
      %514 = vmatpush1.msra.mxu0 0.0
      %515 = vmatprep.subr.mxu0 0.0
      %516 = vmatpush1.msra.mxu0 0.0
      %517 = vmatprep.subr.mxu0 0.0
      %518 = vmatpush1.msra.mxu0 0.0
      %519 = vmatprep.subr.mxu0 0.0
      %520 = vmatpush1.msra.mxu0 0.0
      %521 = vmatprep.subr.mxu0 0.0
      %522 = vmatpush1.msra.mxu0 0.0
      %523 = vmatprep.subr.mxu0 0.0
      %524 = vmatpush1.msra.mxu0 0.0
      %525 = vmatprep.subr.mxu0 0.0
      %526 = vmatpush1.msra.mxu0 0.0
      %527 = vmatprep.subr.mxu0 0.0
      %528 = vmatpush1.msra.mxu0 0.0
      %529 = vmatprep.mubr.f32.mxu0 0.0
      %530 = vmatmul.mubr.f32.gmra.mrb[0].mxu0 %v460
      %v531 = vpop.f32.mrb[0].mxu0
      %v532 = vadd.f32 0.0, %v531
      %v533 = vpop.f32.mrb[0].mxu0
      %534 = vmatprep.mubr.f32.mxu0 0.0
      %535 = vmatmul.mubr.f32.gmra.mrb[0].mxu0 %v463
      %v536 = vpop.f32.mrb[0].mxu0
      %v537 = vadd.f32 0.0, %v536
      %v538 = vpop.f32.mrb[0].mxu0
      %539 = vdwg.mxu0
      %v541 = vsel %vm458, %v447, 0
      %v544 = vsel %vm458, %v448, 0
      %546 = vmatprep.subr.mxu0 0.0
      %547 = vmatpush1.msra.mxu0 %v444
      %548 = vmatprep.subr.mxu0 0.0
      %549 = vmatpush1.msra.mxu0 0.0
      %550 = vmatprep.subr.mxu0 0.0
      %551 = vmatpush1.msra.mxu0 0.0
      %552 = vmatprep.subr.mxu0 0.0
      %553 = vmatpush1.msra.mxu0 0.0
      %554 = vmatprep.subr.mxu0 0.0
      %555 = vmatpush1.msra.mxu0 0.0
      %556 = vmatprep.subr.mxu0 0.0
      %557 = vmatpush1.msra.mxu0 0.0
      %558 = vmatprep.subr.mxu0 0.0
      %559 = vmatpush1.msra.mxu0 0.0
      %560 = vmatprep.subr.mxu0 0.0
      %561 = vmatpush1.msra.mxu0 0.0
      %562 = vmatprep.subr.mxu0 0.0
      %563 = vmatpush1.msra.mxu0 0.0
      %564 = vmatprep.subr.mxu0 0.0
      %565 = vmatpush1.msra.mxu0 0.0
      %566 = vmatprep.subr.mxu0 0.0
      %567 = vmatpush1.msra.mxu0 0.0
      %568 = vmatprep.subr.mxu0 0.0
      %569 = vmatpush1.msra.mxu0 0.0
      %570 = vmatprep.subr.mxu0 0.0
      %571 = vmatpush1.msra.mxu0 0.0
      %572 = vmatprep.subr.mxu0 0.0
      %573 = vmatpush1.msra.mxu0 0.0
      %574 = vmatprep.subr.mxu0 0.0
      %575 = vmatpush1.msra.mxu0 0.0
      %576 = vmatprep.subr.mxu0 0.0
      %577 = vmatpush1.msra.mxu0 0.0
      %578 = vmatprep.subr.mxu0 0.0
      %579 = vmatpush1.msra.mxu0 0.0
      %580 = vmatprep.subr.mxu0 0.0
      %581 = vmatpush1.msra.mxu0 0.0
      %582 = vmatprep.subr.mxu0 0.0
      %583 = vmatpush1.msra.mxu0 0.0
      %584 = vmatprep.subr.mxu0 0.0
      %585 = vmatpush1.msra.mxu0 0.0
      %586 = vmatprep.subr.mxu0 0.0
      %587 = vmatpush1.msra.mxu0 0.0
      %588 = vmatprep.subr.mxu0 0.0
      %589 = vmatpush1.msra.mxu0 0.0
      %590 = vmatprep.subr.mxu0 0.0
      %591 = vmatpush1.msra.mxu0 0.0
      %592 = vmatprep.subr.mxu0 0.0
      %593 = vmatpush1.msra.mxu0 0.0
      %594 = vmatprep.subr.mxu0 0.0
      %595 = vmatpush1.msra.mxu0 0.0
      %596 = vmatprep.subr.mxu0 0.0
      %597 = vmatpush1.msra.mxu0 0.0
      %598 = vmatprep.subr.mxu0 0.0
      %599 = vmatpush1.msra.mxu0 0.0
      %600 = vmatprep.subr.mxu0 0.0
      %601 = vmatpush1.msra.mxu0 0.0
      %602 = vmatprep.subr.mxu0 0.0
      %603 = vmatpush1.msra.mxu0 0.0
      %604 = vmatprep.subr.mxu0 0.0
      %605 = vmatpush1.msra.mxu0 0.0
      %606 = vmatprep.subr.mxu0 0.0
      %607 = vmatpush1.msra.mxu0 0.0
      %608 = vmatprep.subr.mxu0 0.0
      %609 = vmatpush1.msra.mxu0 0.0
      %610 = vmatprep.mubr.f32.mxu0 0.0
      %611 = vmatmul.mubr.f32.gmra.mrb[0].mxu0 %v541
      %v612 = vpop.f32.mrb[0].mxu0
      %v613 = vadd.f32 %v532, %v612
      %v614 = vpop.f32.mrb[0].mxu0
      %615 = vmatprep.mubr.f32.mxu0 0.0
      %616 = vmatmul.mubr.f32.gmra.mrb[0].mxu0 %v544
      %v617 = vpop.f32.mrb[0].mxu0
      %v618 = vadd.f32 %v537, %v617
      %v619 = vpop.f32.mrb[0].mxu0
      %620 = vdwg.mxu0
      %v621 = vld [vmem:[%s1 + $0x2c] sm:$0xf]
      %v622 = vld [vmem:[%s1 + $0x30] sm:$0xf]
      %v623 = vunpack.c.l.bf16 %v621
      %v624 = vunpack.c.l.bf16 %v622
      %v626 = vsel %vm458, %v623, 0
      %v629 = vsel %vm458, %v624, 0
      %631 = vmatprep.subr.mxu0 0.0
      %632 = vmatpush1.msra.mxu0 %v437
      %633 = vmatprep.subr.mxu0 0.0
      %634 = vmatpush1.msra.mxu0 0.0
      %635 = vmatprep.subr.mxu0 0.0
      %636 = vmatpush1.msra.mxu0 0.0
      %637 = vmatprep.subr.mxu0 0.0
      %638 = vmatpush1.msra.mxu0 0.0
      %639 = vmatprep.subr.mxu0 0.0
      %640 = vmatpush1.msra.mxu0 0.0
      %641 = vmatprep.subr.mxu0 0.0
      %642 = vmatpush1.msra.mxu0 0.0
      %643 = vmatprep.subr.mxu0 0.0
      %644 = vmatpush1.msra.mxu0 0.0
      %645 = vmatprep.subr.mxu0 0.0
      %646 = vmatpush1.msra.mxu0 0.0
      %647 = vmatprep.subr.mxu0 0.0
      %648 = vmatpush1.msra.mxu0 0.0
      %649 = vmatprep.subr.mxu0 0.0
      %650 = vmatpush1.msra.mxu0 0.0
      %651 = vmatprep.subr.mxu0 0.0
      %652 = vmatpush1.msra.mxu0 0.0
      %653 = vmatprep.subr.mxu0 0.0
      %654 = vmatpush1.msra.mxu0 0.0
      %655 = vmatprep.subr.mxu0 0.0
      %656 = vmatpush1.msra.mxu0 0.0
      %657 = vmatprep.subr.mxu0 0.0
      %658 = vmatpush1.msra.mxu0 0.0
      %659 = vmatprep.subr.mxu0 0.0
      %660 = vmatpush1.msra.mxu0 0.0
      %661 = vmatprep.subr.mxu0 0.0
      %662 = vmatpush1.msra.mxu0 0.0
      %663 = vmatprep.subr.mxu0 0.0
      %664 = vmatpush1.msra.mxu0 0.0
      %665 = vmatprep.subr.mxu0 0.0
      %666 = vmatpush1.msra.mxu0 0.0
      %667 = vmatprep.subr.mxu0 0.0
      %668 = vmatpush1.msra.mxu0 0.0
      %669 = vmatprep.subr.mxu0 0.0
      %670 = vmatpush1.msra.mxu0 0.0
      %671 = vmatprep.subr.mxu0 0.0
      %672 = vmatpush1.msra.mxu0 0.0
      %673 = vmatprep.subr.mxu0 0.0
      %674 = vmatpush1.msra.mxu0 0.0
      %675 = vmatprep.subr.mxu0 0.0
      %676 = vmatpush1.msra.mxu0 0.0
      %677 = vmatprep.subr.mxu0 0.0
      %678 = vmatpush1.msra.mxu0 0.0
      %679 = vmatprep.subr.mxu0 0.0
      %680 = vmatpush1.msra.mxu0 0.0
      %681 = vmatprep.subr.mxu0 0.0
      %682 = vmatpush1.msra.mxu0 0.0
      %683 = vmatprep.subr.mxu0 0.0
      %684 = vmatpush1.msra.mxu0 0.0
      %685 = vmatprep.subr.mxu0 0.0
      %686 = vmatpush1.msra.mxu0 0.0
      %687 = vmatprep.subr.mxu0 0.0
      %688 = vmatpush1.msra.mxu0 0.0
      %689 = vmatprep.subr.mxu0 0.0
      %690 = vmatpush1.msra.mxu0 0.0
      %691 = vmatprep.subr.mxu0 0.0
      %692 = vmatpush1.msra.mxu0 0.0
      %693 = vmatprep.subr.mxu0 0.0
      %694 = vmatpush1.msra.mxu0 0.0
      %695 = vmatprep.mubr.f32.mxu0 0.0
      %696 = vmatmul.mubr.f32.gmra.mrb[0].mxu0 %v626
      %v697 = vpop.f32.mrb[0].mxu0
      %v698 = vadd.f32 0.0, %v697
      %v699 = vpop.f32.mrb[0].mxu0
      %700 = vmatprep.mubr.f32.mxu0 0.0
      %701 = vmatmul.mubr.f32.gmra.mrb[0].mxu0 %v629
      %v702 = vpop.f32.mrb[0].mxu0
      %v703 = vadd.f32 0.0, %v702
      %v704 = vpop.f32.mrb[0].mxu0
      %705 = vdwg.mxu0
      %v706 = vadd.f32 %v613, %v698
      %v707 = vadd.f32 %v618, %v703
      %708 = vrot.lane.b32.xlu0 %v437, 127
      %v709 = vpop.permute.xlu0 %708
      %vm710 = vcmp.lt.s32.totalorder %v201, 63
      %v711 = vsel %vm710, 1, 0
      %vm712 = vcmp.eq.s32.totalorder %v711, 1
      %v713 = vsel %vm712, %v709, 0.0
      %v714 = vld [vmem:[%s1 + $0x34] sm:$0xf]
      %v715 = vld [vmem:[%s1 + $0x38] sm:$0xf]
      %v716 = vunpack.c.l.bf16 %v714
      %v717 = vunpack.c.l.bf16 %v715
      %v719 = vsel %vm458, %v716, 0
      %v722 = vsel %vm458, %v717, 0
      %724 = vmatprep.subr.mxu0 0.0
      %725 = vmatpush1.msra.mxu0 %v713
      %726 = vmatprep.subr.mxu0 0.0
      %727 = vmatpush1.msra.mxu0 0.0
      %728 = vmatprep.subr.mxu0 0.0
      %729 = vmatpush1.msra.mxu0 0.0
      %730 = vmatprep.subr.mxu0 0.0
      %731 = vmatpush1.msra.mxu0 0.0
      %732 = vmatprep.subr.mxu0 0.0
      %733 = vmatpush1.msra.mxu0 0.0
      %734 = vmatprep.subr.mxu0 0.0
      %735 = vmatpush1.msra.mxu0 0.0
      %736 = vmatprep.subr.mxu0 0.0
      %737 = vmatpush1.msra.mxu0 0.0
      %738 = vmatprep.subr.mxu0 0.0
      %739 = vmatpush1.msra.mxu0 0.0
      %740 = vmatprep.subr.mxu0 0.0
      %741 = vmatpush1.msra.mxu0 0.0
      %742 = vmatprep.subr.mxu0 0.0
      %743 = vmatpush1.msra.mxu0 0.0
      %744 = vmatprep.subr.mxu0 0.0
      %745 = vmatpush1.msra.mxu0 0.0
      %746 = vmatprep.subr.mxu0 0.0
      %747 = vmatpush1.msra.mxu0 0.0
      %748 = vmatprep.subr.mxu0 0.0
      %749 = vmatpush1.msra.mxu0 0.0
      %750 = vmatprep.subr.mxu0 0.0
      %751 = vmatpush1.msra.mxu0 0.0
      %752 = vmatprep.subr.mxu0 0.0
      %753 = vmatpush1.msra.mxu0 0.0
      %754 = vmatprep.subr.mxu0 0.0
      %755 = vmatpush1.msra.mxu0 0.0
      %756 = vmatprep.subr.mxu0 0.0
      %757 = vmatpush1.msra.mxu0 0.0
      %758 = vmatprep.subr.mxu0 0.0
      %759 = vmatpush1.msra.mxu0 0.0
      %760 = vmatprep.subr.mxu0 0.0
      %761 = vmatpush1.msra.mxu0 0.0
      %762 = vmatprep.subr.mxu0 0.0
      %763 = vmatpush1.msra.mxu0 0.0
      %764 = vmatprep.subr.mxu0 0.0
      %765 = vmatpush1.msra.mxu0 0.0
      %766 = vmatprep.subr.mxu0 0.0
      %767 = vmatpush1.msra.mxu0 0.0
      %768 = vmatprep.subr.mxu0 0.0
      %769 = vmatpush1.msra.mxu0 0.0
      %770 = vmatprep.subr.mxu0 0.0
      %771 = vmatpush1.msra.mxu0 0.0
      %772 = vmatprep.subr.mxu0 0.0
      %773 = vmatpush1.msra.mxu0 0.0
      %774 = vmatprep.subr.mxu0 0.0
      %775 = vmatpush1.msra.mxu0 0.0
      %776 = vmatprep.subr.mxu0 0.0
      %777 = vmatpush1.msra.mxu0 0.0
      %778 = vmatprep.subr.mxu0 0.0
      %779 = vmatpush1.msra.mxu0 0.0
      %780 = vmatprep.subr.mxu0 0.0
      %781 = vmatpush1.msra.mxu0 0.0
      %782 = vmatprep.subr.mxu0 0.0
      %783 = vmatpush1.msra.mxu0 0.0
      %784 = vmatprep.subr.mxu0 0.0
      %785 = vmatpush1.msra.mxu0 0.0
      %786 = vmatprep.subr.mxu0 0.0
      %787 = vmatpush1.msra.mxu0 0.0
      %788 = vmatprep.mubr.f32.mxu0 0.0
      %789 = vmatmul.mubr.f32.gmra.mrb[0].mxu0 %v719
      %v790 = vpop.f32.mrb[0].mxu0
      %v791 = vadd.f32 0.0, %v790
      %v792 = vpop.f32.mrb[0].mxu0
      %793 = vmatprep.mubr.f32.mxu0 0.0
      %794 = vmatmul.mubr.f32.gmra.mrb[0].mxu0 %v722
      %v795 = vpop.f32.mrb[0].mxu0
      %v796 = vadd.f32 0.0, %v795
      %v797 = vpop.f32.mrb[0].mxu0
      %798 = vdwg.mxu0
      %v799 = vadd.f32 %v706, %v791
      %v800 = vadd.f32 %v707, %v796
      %801 = vrot.lane.b32.xlu0 %v437, 126
      %v802 = vpop.permute.xlu0 %801
      %vm803 = vcmp.lt.s32.totalorder %v201, 62
      %v804 = vsel %vm803, 1, 0
      %vm805 = vcmp.eq.s32.totalorder %v804, 1
      %v806 = vsel %vm805, %v802, 0.0
      %v807 = vld [vmem:[%s1 + $0x3c] sm:$0xf]
      %v808 = vld [vmem:[%s1 + $0x40] sm:$0xf]
      %v809 = vunpack.c.l.bf16 %v807
      %v810 = vunpack.c.l.bf16 %v808
      %v812 = vsel %vm458, %v809, 0
      %v815 = vsel %vm458, %v810, 0
      %817 = vmatprep.subr.mxu0 0.0
      %818 = vmatpush1.msra.mxu0 %v806
      %819 = vmatprep.subr.mxu0 0.0
      %820 = vmatpush1.msra.mxu0 0.0
      %821 = vmatprep.subr.mxu0 0.0
      %822 = vmatpush1.msra.mxu0 0.0
      %823 = vmatprep.subr.mxu0 0.0
      %824 = vmatpush1.msra.mxu0 0.0
      %825 = vmatprep.subr.mxu0 0.0
      %826 = vmatpush1.msra.mxu0 0.0
      %827 = vmatprep.subr.mxu0 0.0
      %828 = vmatpush1.msra.mxu0 0.0
      %829 = vmatprep.subr.mxu0 0.0
      %830 = vmatpush1.msra.mxu0 0.0
      %831 = vmatprep.subr.mxu0 0.0
      %832 = vmatpush1.msra.mxu0 0.0
      %833 = vmatprep.subr.mxu0 0.0
      %834 = vmatpush1.msra.mxu0 0.0
      %835 = vmatprep.subr.mxu0 0.0
      %836 = vmatpush1.msra.mxu0 0.0
      %837 = vmatprep.subr.mxu0 0.0
      %838 = vmatpush1.msra.mxu0 0.0
      %839 = vmatprep.subr.mxu0 0.0
      %840 = vmatpush1.msra.mxu0 0.0
      %841 = vmatprep.subr.mxu0 0.0
      %842 = vmatpush1.msra.mxu0 0.0
      %843 = vmatprep.subr.mxu0 0.0
      %844 = vmatpush1.msra.mxu0 0.0
      %845 = vmatprep.subr.mxu0 0.0
      %846 = vmatpush1.msra.mxu0 0.0
      %847 = vmatprep.subr.mxu0 0.0
      %848 = vmatpush1.msra.mxu0 0.0
      %849 = vmatprep.subr.mxu0 0.0
      %850 = vmatpush1.msra.mxu0 0.0
      %851 = vmatprep.subr.mxu0 0.0
      %852 = vmatpush1.msra.mxu0 0.0
      %853 = vmatprep.subr.mxu0 0.0
      %854 = vmatpush1.msra.mxu0 0.0
      %855 = vmatprep.subr.mxu0 0.0
      %856 = vmatpush1.msra.mxu0 0.0
      %857 = vmatprep.subr.mxu0 0.0
      %858 = vmatpush1.msra.mxu0 0.0
      %859 = vmatprep.subr.mxu0 0.0
      %860 = vmatpush1.msra.mxu0 0.0
      %861 = vmatprep.subr.mxu0 0.0
      %862 = vmatpush1.msra.mxu0 0.0
      %863 = vmatprep.subr.mxu0 0.0
      %864 = vmatpush1.msra.mxu0 0.0
      %865 = vmatprep.subr.mxu0 0.0
      %866 = vmatpush1.msra.mxu0 0.0
      %867 = vmatprep.subr.mxu0 0.0
      %868 = vmatpush1.msra.mxu0 0.0
      %869 = vmatprep.subr.mxu0 0.0
      %870 = vmatpush1.msra.mxu0 0.0
      %871 = vmatprep.subr.mxu0 0.0
      %872 = vmatpush1.msra.mxu0 0.0
      %873 = vmatprep.subr.mxu0 0.0
      %874 = vmatpush1.msra.mxu0 0.0
      %875 = vmatprep.subr.mxu0 0.0
      %876 = vmatpush1.msra.mxu0 0.0
      %877 = vmatprep.subr.mxu0 0.0
      %878 = vmatpush1.msra.mxu0 0.0
      %879 = vmatprep.subr.mxu0 0.0
      %880 = vmatpush1.msra.mxu0 0.0
      %881 = vmatprep.mubr.f32.mxu0 0.0
      %882 = vmatmul.mubr.f32.gmra.mrb[0].mxu0 %v812
      %v883 = vpop.f32.mrb[0].mxu0
      %v884 = vadd.f32 0.0, %v883
      %v885 = vpop.f32.mrb[0].mxu0
      %886 = vmatprep.mubr.f32.mxu0 0.0
      %887 = vmatmul.mubr.f32.gmra.mrb[0].mxu0 %v815
      %v888 = vpop.f32.mrb[0].mxu0
      %v889 = vadd.f32 0.0, %v888
      %v890 = vpop.f32.mrb[0].mxu0
      %891 = vdwg.mxu0
      %v892 = vadd.f32 %v799, %v884
      %v893 = vadd.f32 %v800, %v889
      %v894 = vld [vmem:[%s2] sm:$0xff]
      %v895 = vld [vmem:[%s2 + $0x8] sm:$0xff]
      %897 = vset.pattern.permute.xlu0 1
      %898 = vperm.xlu0 %897, %v894
      %v899 = vpop.permute.xlu0 %898
      %902 = vset.pattern.permute.xlu0 1
      %903 = vperm.xlu0 %902, %v895
      %v904 = vpop.permute.xlu0 %903
      %v906 = vadd.f32 %v892, %v899
      %v907 = vadd.f32 %v893, %v904
      %v908 = vmax.f32 %v906, 0.0
      %v909 = vmax.f32 %v907, 0.0
      %910 = vrot.lane.b32.xlu0 %v908, 127
      %v911 = vpop.permute.xlu0 %910
      %912 = vrot.lane.b32.xlu0 %v909, 127
      %v913 = vpop.permute.xlu0 %912
      %v914 = vmax.f32 %v908, %v911
      %v915 = vmax.f32 %v909, %v913
      %916 = vmatprep.subr.mxu0 0.0
      %917 = vmatpush1.msra.mxu0 %v202
      %918 = vmatprep.subr.mxu0 0.0
      %919 = vmatpush1.msra.mxu0 %v203
      %920 = vmatprep.subr.mxu0 0.0
      %921 = vmatpush1.msra.mxu0 %v204
      %922 = vmatprep.subr.mxu0 0.0
      %923 = vmatpush1.msra.mxu0 %v205
      %924 = vmatprep.subr.mxu0 0.0
      %925 = vmatpush1.msra.mxu0 %v206
      %926 = vmatprep.subr.mxu0 0.0
      %927 = vmatpush1.msra.mxu0 %v207
      %928 = vmatprep.subr.mxu0 0.0
      %929 = vmatpush1.msra.mxu0 %v208
      %930 = vmatprep.subr.mxu0 0.0
      %931 = vmatpush1.msra.mxu0 %v209
      %932 = vmatprep.subr.mxu0 0.0
      %933 = vmatpush1.msra.mxu0 %v210
      %934 = vmatprep.subr.mxu0 0.0
      %935 = vmatpush1.msra.mxu0 %v211
      %936 = vmatprep.subr.mxu0 0.0
      %937 = vmatpush1.msra.mxu0 %v212
      %938 = vmatprep.subr.mxu0 0.0
      %939 = vmatpush1.msra.mxu0 %v213
      %940 = vmatprep.subr.mxu0 0.0
      %941 = vmatpush1.msra.mxu0 %v214
      %942 = vmatprep.subr.mxu0 0.0
      %943 = vmatpush1.msra.mxu0 %v215
      %944 = vmatprep.subr.mxu0 0.0
      %945 = vmatpush1.msra.mxu0 %v216
      %946 = vmatprep.subr.mxu0 0.0
      %947 = vmatpush1.msra.mxu0 %v217
      %948 = vmatprep.subr.mxu0 0.0
      %949 = vmatpush1.msra.mxu0 0.0
      %950 = vmatprep.subr.mxu0 0.0
      %951 = vmatpush1.msra.mxu0 0.0
      %952 = vmatprep.subr.mxu0 0.0
      %953 = vmatpush1.msra.mxu0 0.0
      %954 = vmatprep.subr.mxu0 0.0
      %955 = vmatpush1.msra.mxu0 0.0
      %956 = vmatprep.subr.mxu0 0.0
      %957 = vmatpush1.msra.mxu0 0.0
      %958 = vmatprep.subr.mxu0 0.0
      %959 = vmatpush1.msra.mxu0 0.0
      %960 = vmatprep.subr.mxu0 0.0
      %961 = vmatpush1.msra.mxu0 0.0
      %962 = vmatprep.subr.mxu0 0.0
      %963 = vmatpush1.msra.mxu0 0.0
      %964 = vmatprep.subr.mxu0 0.0
      %965 = vmatpush1.msra.mxu0 0.0
      %966 = vmatprep.subr.mxu0 0.0
      %967 = vmatpush1.msra.mxu0 0.0
      %968 = vmatprep.subr.mxu0 0.0
      %969 = vmatpush1.msra.mxu0 0.0
      %970 = vmatprep.subr.mxu0 0.0
      %971 = vmatpush1.msra.mxu0 0.0
      %972 = vmatprep.subr.mxu0 0.0
      %973 = vmatpush1.msra.mxu0 0.0
      %974 = vmatprep.subr.mxu0 0.0
      %975 = vmatpush1.msra.mxu0 0.0
      %976 = vmatprep.subr.mxu0 0.0
      %977 = vmatpush1.msra.mxu0 0.0
      %978 = vmatprep.subr.mxu0 0.0
      %979 = vmatpush1.msra.mxu0 0.0
      %980 = vmatprep.mubr.f32.mxu0 0.0
      %981 = vmatmul.mubr.f32.gmra.mrb[0].mxu0 %v914
      %v982 = vpop.f32.mrb[0].mxu0
      %v983 = vadd.f32 0.0, %v982
      %v984 = vpop.f32.mrb[0].mxu0
      %985 = vmatprep.mubr.f32.mxu0 0.0
      %986 = vmatmul.mubr.f32.gmra.mrb[0].mxu0 %v915
      %v987 = vpop.f32.mrb[0].mxu0
      %v988 = vadd.f32 0.0, %v987
      %v989 = vpop.f32.mrb[0].mxu0
      %990 = vdwg.mxu0
      %991 = vrot.lane.b32.xlu0 %v983, 1
      %v992 = vpop.permute.xlu0 %991
      %993 = vrot.lane.b32.xlu0 %v988, 1
      %v994 = vpop.permute.xlu0 %993
      %v995 = vsel %vm452, %v992, 0.0
      %v996 = vsel %vm452, %v994, 0.0
      %v997 = vld [vmem:[%s1 + $0x44] sm:$0xf]
      %v998 = vld [vmem:[%s1 + $0x48] sm:$0xf]
      %v999 = vld [vmem:[%s1 + $0x4c] sm:$0xf]
      %v1000 = vld [vmem:[%s1 + $0x50] sm:$0xf]
      %v1001 = vunpack.c.l.bf16 %v997
      %v1002 = vunpack.c.l.bf16 %v998
      %v1003 = vunpack.c.l.bf16 %v999
      %v1004 = vunpack.c.l.bf16 %v1000
      %v1005 = vld [vmem:[%s1 + $0x54] sm:$0xf]
      %v1006 = vld [vmem:[%s1 + $0x58] sm:$0xf]
      %v1007 = vld [vmem:[%s1 + $0x5c] sm:$0xf]
      %v1008 = vld [vmem:[%s1 + $0x60] sm:$0xf]
      %v1009 = vunpack.c.l.bf16 %v1005
      %v1010 = vunpack.c.l.bf16 %v1006
      %v1011 = vunpack.c.l.bf16 %v1007
      %v1012 = vunpack.c.l.bf16 %v1008
      %vm1013 = vcmask 130048
      %v1015 = vsel %vm1013, %v1009, 0
      %v1018 = vsel %vm1013, %v1010, 0
      %v1021 = vsel %vm1013, %v1011, 0
      %v1024 = vsel %vm1013, %v1012, 0
      %1026 = vmatprep.subr.mxu0 0.0
      %1027 = vmatpush1.msra.mxu0 %v983
      %1028 = vmatprep.subr.mxu0 0.0
      %1029 = vmatpush1.msra.mxu0 %v988
      %1030 = vmatprep.subr.mxu0 0.0
      %1031 = vmatpush1.msra.mxu0 0.0
      %1032 = vmatprep.subr.mxu0 0.0
      %1033 = vmatpush1.msra.mxu0 0.0
      %1034 = vmatprep.subr.mxu0 0.0
      %1035 = vmatpush1.msra.mxu0 0.0
      %1036 = vmatprep.subr.mxu0 0.0
      %1037 = vmatpush1.msra.mxu0 0.0
      %1038 = vmatprep.subr.mxu0 0.0
      %1039 = vmatpush1.msra.mxu0 0.0
      %1040 = vmatprep.subr.mxu0 0.0
      %1041 = vmatpush1.msra.mxu0 0.0
      %1042 = vmatprep.subr.mxu0 0.0
      %1043 = vmatpush1.msra.mxu0 0.0
      %1044 = vmatprep.subr.mxu0 0.0
      %1045 = vmatpush1.msra.mxu0 0.0
      %1046 = vmatprep.subr.mxu0 0.0
      %1047 = vmatpush1.msra.mxu0 0.0
      %1048 = vmatprep.subr.mxu0 0.0
      %1049 = vmatpush1.msra.mxu0 0.0
      %1050 = vmatprep.subr.mxu0 0.0
      %1051 = vmatpush1.msra.mxu0 0.0
      %1052 = vmatprep.subr.mxu0 0.0
      %1053 = vmatpush1.msra.mxu0 0.0
      %1054 = vmatprep.subr.mxu0 0.0
      %1055 = vmatpush1.msra.mxu0 0.0
      %1056 = vmatprep.subr.mxu0 0.0
      %1057 = vmatpush1.msra.mxu0 0.0
      %1058 = vmatprep.subr.mxu0 0.0
      %1059 = vmatpush1.msra.mxu0 0.0
      %1060 = vmatprep.subr.mxu0 0.0
      %1061 = vmatpush1.msra.mxu0 0.0
      %1062 = vmatprep.subr.mxu0 0.0
      %1063 = vmatpush1.msra.mxu0 0.0
      %1064 = vmatprep.subr.mxu0 0.0
      %1065 = vmatpush1.msra.mxu0 0.0
      %1066 = vmatprep.subr.mxu0 0.0
      %1067 = vmatpush1.msra.mxu0 0.0
      %1068 = vmatprep.subr.mxu0 0.0
      %1069 = vmatpush1.msra.mxu0 0.0
      %1070 = vmatprep.subr.mxu0 0.0
      %1071 = vmatpush1.msra.mxu0 0.0
      %1072 = vmatprep.subr.mxu0 0.0
      %1073 = vmatpush1.msra.mxu0 0.0
      %1074 = vmatprep.subr.mxu0 0.0
      %1075 = vmatpush1.msra.mxu0 0.0
      %1076 = vmatprep.subr.mxu0 0.0
      %1077 = vmatpush1.msra.mxu0 0.0
      %1078 = vmatprep.subr.mxu0 0.0
      %1079 = vmatpush1.msra.mxu0 0.0
      %1080 = vmatprep.subr.mxu0 0.0
      %1081 = vmatpush1.msra.mxu0 0.0
      %1082 = vmatprep.subr.mxu0 0.0
      %1083 = vmatpush1.msra.mxu0 0.0
      %1084 = vmatprep.subr.mxu0 0.0
      %1085 = vmatpush1.msra.mxu0 0.0
      %1086 = vmatprep.subr.mxu0 0.0
      %1087 = vmatpush1.msra.mxu0 0.0
      %1088 = vmatprep.subr.mxu0 0.0
      %1089 = vmatpush1.msra.mxu0 0.0
      %1090 = vmatprep.mubr.f32.mxu0 0.0
      %1091 = vmatmul.mubr.f32.gmra.mrb[0].mxu0 %v1015
      %v1092 = vpop.f32.mrb[0].mxu0
      %v1093 = vadd.f32 0.0, %v1092
      %v1094 = vpop.f32.mrb[0].mxu0
      %1095 = vmatprep.mubr.f32.mxu0 0.0
      %1096 = vmatmul.mubr.f32.gmra.mrb[0].mxu0 %v1018
      %v1097 = vpop.f32.mrb[0].mxu0
      %v1098 = vadd.f32 0.0, %v1097
      %v1099 = vpop.f32.mrb[0].mxu0
      %1100 = vmatprep.mubr.f32.mxu0 0.0
      %1101 = vmatmul.mubr.f32.gmra.mrb[0].mxu0 %v1021
      %v1102 = vpop.f32.mrb[0].mxu0
      %v1103 = vadd.f32 0.0, %v1102
      %v1104 = vpop.f32.mrb[0].mxu0
      %1105 = vmatprep.mubr.f32.mxu0 0.0
      %1106 = vmatmul.mubr.f32.gmra.mrb[0].mxu0 %v1024
      %v1107 = vpop.f32.mrb[0].mxu0
      %v1108 = vadd.f32 0.0, %v1107
      %v1109 = vpop.f32.mrb[0].mxu0
      %1110 = vdwg.mxu0
      %v1112 = vsel %vm1013, %v1001, 0
      %v1115 = vsel %vm1013, %v1002, 0
      %v1118 = vsel %vm1013, %v1003, 0
      %v1121 = vsel %vm1013, %v1004, 0
      %1123 = vmatprep.subr.mxu0 0.0
      %1124 = vmatpush1.msra.mxu0 %v995
      %1125 = vmatprep.subr.mxu0 0.0
      %1126 = vmatpush1.msra.mxu0 %v996
      %1127 = vmatprep.subr.mxu0 0.0
      %1128 = vmatpush1.msra.mxu0 0.0
      %1129 = vmatprep.subr.mxu0 0.0
      %1130 = vmatpush1.msra.mxu0 0.0
      %1131 = vmatprep.subr.mxu0 0.0
      %1132 = vmatpush1.msra.mxu0 0.0
      %1133 = vmatprep.subr.mxu0 0.0
      %1134 = vmatpush1.msra.mxu0 0.0
      %1135 = vmatprep.subr.mxu0 0.0
      %1136 = vmatpush1.msra.mxu0 0.0
      %1137 = vmatprep.subr.mxu0 0.0
      %1138 = vmatpush1.msra.mxu0 0.0
      %1139 = vmatprep.subr.mxu0 0.0
      %1140 = vmatpush1.msra.mxu0 0.0
      %1141 = vmatprep.subr.mxu0 0.0
      %1142 = vmatpush1.msra.mxu0 0.0
      %1143 = vmatprep.subr.mxu0 0.0
      %1144 = vmatpush1.msra.mxu0 0.0
      %1145 = vmatprep.subr.mxu0 0.0
      %1146 = vmatpush1.msra.mxu0 0.0
      %1147 = vmatprep.subr.mxu0 0.0
      %1148 = vmatpush1.msra.mxu0 0.0
      %1149 = vmatprep.subr.mxu0 0.0
      %1150 = vmatpush1.msra.mxu0 0.0
      %1151 = vmatprep.subr.mxu0 0.0
      %1152 = vmatpush1.msra.mxu0 0.0
      %1153 = vmatprep.subr.mxu0 0.0
      %1154 = vmatpush1.msra.mxu0 0.0
      %1155 = vmatprep.subr.mxu0 0.0
      %1156 = vmatpush1.msra.mxu0 0.0
      %1157 = vmatprep.subr.mxu0 0.0
      %1158 = vmatpush1.msra.mxu0 0.0
      %1159 = vmatprep.subr.mxu0 0.0
      %1160 = vmatpush1.msra.mxu0 0.0
      %1161 = vmatprep.subr.mxu0 0.0
      %1162 = vmatpush1.msra.mxu0 0.0
      %1163 = vmatprep.subr.mxu0 0.0
      %1164 = vmatpush1.msra.mxu0 0.0
      %1165 = vmatprep.subr.mxu0 0.0
      %1166 = vmatpush1.msra.mxu0 0.0
      %1167 = vmatprep.subr.mxu0 0.0
      %1168 = vmatpush1.msra.mxu0 0.0
      %1169 = vmatprep.subr.mxu0 0.0
      %1170 = vmatpush1.msra.mxu0 0.0
      %1171 = vmatprep.subr.mxu0 0.0
      %1172 = vmatpush1.msra.mxu0 0.0
      %1173 = vmatprep.subr.mxu0 0.0
      %1174 = vmatpush1.msra.mxu0 0.0
      %1175 = vmatprep.subr.mxu0 0.0
      %1176 = vmatpush1.msra.mxu0 0.0
      %1177 = vmatprep.subr.mxu0 0.0
      %1178 = vmatpush1.msra.mxu0 0.0
      %1179 = vmatprep.subr.mxu0 0.0
      %1180 = vmatpush1.msra.mxu0 0.0
      %1181 = vmatprep.subr.mxu0 0.0
      %1182 = vmatpush1.msra.mxu0 0.0
      %1183 = vmatprep.subr.mxu0 0.0
      %1184 = vmatpush1.msra.mxu0 0.0
      %1185 = vmatprep.subr.mxu0 0.0
      %1186 = vmatpush1.msra.mxu0 0.0
      %1187 = vmatprep.mubr.f32.mxu0 0.0
      %1188 = vmatmul.mubr.f32.gmra.mrb[0].mxu0 %v1112
      %v1189 = vpop.f32.mrb[0].mxu0
      %v1190 = vadd.f32 %v1093, %v1189
      %v1191 = vpop.f32.mrb[0].mxu0
      %1192 = vmatprep.mubr.f32.mxu0 0.0
      %1193 = vmatmul.mubr.f32.gmra.mrb[0].mxu0 %v1115
      %v1194 = vpop.f32.mrb[0].mxu0
      %v1195 = vadd.f32 %v1098, %v1194
      %v1196 = vpop.f32.mrb[0].mxu0
      %1197 = vmatprep.mubr.f32.mxu0 0.0
      %1198 = vmatmul.mubr.f32.gmra.mrb[0].mxu0 %v1118
      %v1199 = vpop.f32.mrb[0].mxu0
      %v1200 = vadd.f32 %v1103, %v1199
      %v1201 = vpop.f32.mrb[0].mxu0
      %1202 = vmatprep.mubr.f32.mxu0 0.0
      %1203 = vmatmul.mubr.f32.gmra.mrb[0].mxu0 %v1121
      %v1204 = vpop.f32.mrb[0].mxu0
      %v1205 = vadd.f32 %v1108, %v1204
      %v1206 = vpop.f32.mrb[0].mxu0
      %1207 = vdwg.mxu0
      %1208 = vrot.lane.b32.xlu0 %v983, 127
      %v1209 = vpop.permute.xlu0 %1208
      %1210 = vrot.lane.b32.xlu0 %v988, 127
      %v1211 = vpop.permute.xlu0 %1210
      %vm1212 = vcmp.lt.s32.totalorder %v201, 31
      %v1213 = vsel %vm1212, 1, 0
      %vm1214 = vcmp.eq.s32.totalorder %v1213, 1
      %v1215 = vsel %vm1214, %v1209, 0.0
      %v1216 = vsel %vm1214, %v1211, 0.0
      %v1217 = vld [vmem:[%s1 + $0x64] sm:$0xf]
      %v1218 = vld [vmem:[%s1 + $0x68] sm:$0xf]
      %v1219 = vld [vmem:[%s1 + $0x6c] sm:$0xf]
      %v1220 = vld [vmem:[%s1 + $0x70] sm:$0xf]
      %v1221 = vunpack.c.l.bf16 %v1217
      %v1222 = vunpack.c.l.bf16 %v1218
      %v1223 = vunpack.c.l.bf16 %v1219
      %v1224 = vunpack.c.l.bf16 %v1220
      %v1226 = vsel %vm1013, %v1221, 0
      %v1229 = vsel %vm1013, %v1222, 0
      %v1232 = vsel %vm1013, %v1223, 0
      %v1235 = vsel %vm1013, %v1224, 0
      %1237 = vmatprep.subr.mxu0 0.0
      %1238 = vmatpush1.msra.mxu0 %v1215
      %1239 = vmatprep.subr.mxu0 0.0
      %1240 = vmatpush1.msra.mxu0 %v1216
      %1241 = vmatprep.subr.mxu0 0.0
      %1242 = vmatpush1.msra.mxu0 0.0
      %1243 = vmatprep.subr.mxu0 0.0
      %1244 = vmatpush1.msra.mxu0 0.0
      %1245 = vmatprep.subr.mxu0 0.0
      %1246 = vmatpush1.msra.mxu0 0.0
      %1247 = vmatprep.subr.mxu0 0.0
      %1248 = vmatpush1.msra.mxu0 0.0
      %1249 = vmatprep.subr.mxu0 0.0
      %1250 = vmatpush1.msra.mxu0 0.0
      %1251 = vmatprep.subr.mxu0 0.0
      %1252 = vmatpush1.msra.mxu0 0.0
      %1253 = vmatprep.subr.mxu0 0.0
      %1254 = vmatpush1.msra.mxu0 0.0
      %1255 = vmatprep.subr.mxu0 0.0
      %1256 = vmatpush1.msra.mxu0 0.0
      %1257 = vmatprep.subr.mxu0 0.0
      %1258 = vmatpush1.msra.mxu0 0.0
      %1259 = vmatprep.subr.mxu0 0.0
      %1260 = vmatpush1.msra.mxu0 0.0
      %1261 = vmatprep.subr.mxu0 0.0
      %1262 = vmatpush1.msra.mxu0 0.0
      %1263 = vmatprep.subr.mxu0 0.0
      %1264 = vmatpush1.msra.mxu0 0.0
      %1265 = vmatprep.subr.mxu0 0.0
      %1266 = vmatpush1.msra.mxu0 0.0
      %1267 = vmatprep.subr.mxu0 0.0
      %1268 = vmatpush1.msra.mxu0 0.0
      %1269 = vmatprep.subr.mxu0 0.0
      %1270 = vmatpush1.msra.mxu0 0.0
      %1271 = vmatprep.subr.mxu0 0.0
      %1272 = vmatpush1.msra.mxu0 0.0
      %1273 = vmatprep.subr.mxu0 0.0
      %1274 = vmatpush1.msra.mxu0 0.0
      %1275 = vmatprep.subr.mxu0 0.0
      %1276 = vmatpush1.msra.mxu0 0.0
      %1277 = vmatprep.subr.mxu0 0.0
      %1278 = vmatpush1.msra.mxu0 0.0
      %1279 = vmatprep.subr.mxu0 0.0
      %1280 = vmatpush1.msra.mxu0 0.0
      %1281 = vmatprep.subr.mxu0 0.0
      %1282 = vmatpush1.msra.mxu0 0.0
      %1283 = vmatprep.subr.mxu0 0.0
      %1284 = vmatpush1.msra.mxu0 0.0
      %1285 = vmatprep.subr.mxu0 0.0
      %1286 = vmatpush1.msra.mxu0 0.0
      %1287 = vmatprep.subr.mxu0 0.0
      %1288 = vmatpush1.msra.mxu0 0.0
      %1289 = vmatprep.subr.mxu0 0.0
      %1290 = vmatpush1.msra.mxu0 0.0
      %1291 = vmatprep.subr.mxu0 0.0
      %1292 = vmatpush1.msra.mxu0 0.0
      %1293 = vmatprep.subr.mxu0 0.0
      %1294 = vmatpush1.msra.mxu0 0.0
      %1295 = vmatprep.subr.mxu0 0.0
      %1296 = vmatpush1.msra.mxu0 0.0
      %1297 = vmatprep.subr.mxu0 0.0
      %1298 = vmatpush1.msra.mxu0 0.0
      %1299 = vmatprep.subr.mxu0 0.0
      %1300 = vmatpush1.msra.mxu0 0.0
      %1301 = vmatprep.mubr.f32.mxu0 0.0
      %1302 = vmatmul.mubr.f32.gmra.mrb[0].mxu0 %v1226
      %v1303 = vpop.f32.mrb[0].mxu0
      %v1304 = vadd.f32 0.0, %v1303
      %v1305 = vpop.f32.mrb[0].mxu0
      %1306 = vmatprep.mubr.f32.mxu0 0.0
      %1307 = vmatmul.mubr.f32.gmra.mrb[0].mxu0 %v1229
      %v1308 = vpop.f32.mrb[0].mxu0
      %v1309 = vadd.f32 0.0, %v1308
      %v1310 = vpop.f32.mrb[0].mxu0
      %1311 = vmatprep.mubr.f32.mxu0 0.0
      %1312 = vmatmul.mubr.f32.gmra.mrb[0].mxu0 %v1232
      %v1313 = vpop.f32.mrb[0].mxu0
      %v1314 = vadd.f32 0.0, %v1313
      %v1315 = vpop.f32.mrb[0].mxu0
      %1316 = vmatprep.mubr.f32.mxu0 0.0
      %1317 = vmatmul.mubr.f32.gmra.mrb[0].mxu0 %v1235
      %v1318 = vpop.f32.mrb[0].mxu0
      %v1319 = vadd.f32 0.0, %v1318
      %v1320 = vpop.f32.mrb[0].mxu0
      %1321 = vdwg.mxu0
      %v1322 = vadd.f32 %v1190, %v1304
      %v1323 = vadd.f32 %v1195, %v1309
      %v1324 = vadd.f32 %v1200, %v1314
      %v1325 = vadd.f32 %v1205, %v1319
      %v1326 = vld [vmem:[%s2] sm:$0xff]
      %v1327 = vld [vmem:[%s2 + $0x8] sm:$0xff]
      %v1328 = vld [vmem:[%s2 + $0x10] sm:$0xff]
      %v1329 = vld [vmem:[%s2 + $0x18] sm:$0xff]
      %1331 = vset.pattern.permute.xlu0 2
      %1332 = vperm.xlu0 %1331, %v1326
      %v1333 = vpop.permute.xlu0 %1332
      %1336 = vset.pattern.permute.xlu0 2
      %1337 = vperm.xlu0 %1336, %v1327
      %v1338 = vpop.permute.xlu0 %1337
      %1341 = vset.pattern.permute.xlu0 2
      %1342 = vperm.xlu0 %1341, %v1328
      %v1343 = vpop.permute.xlu0 %1342
      %1346 = vset.pattern.permute.xlu0 2
      %1347 = vperm.xlu0 %1346, %v1329
      %v1348 = vpop.permute.xlu0 %1347
      %v1350 = vadd.f32 %v1322, %v1333
      %v1351 = vadd.f32 %v1323, %v1338
      %v1352 = vadd.f32 %v1324, %v1343
      %v1353 = vadd.f32 %v1325, %v1348
      %v1354 = vmax.f32 %v1350, 0.0
      %v1355 = vmax.f32 %v1351, 0.0
      %v1356 = vmax.f32 %v1352, 0.0
      %v1357 = vmax.f32 %v1353, 0.0
      %1358 = vrot.lane.b32.xlu0 %v1354, 127
      %v1359 = vpop.permute.xlu0 %1358
      %1360 = vrot.lane.b32.xlu0 %v1355, 127
      %v1361 = vpop.permute.xlu0 %1360
      %1362 = vrot.lane.b32.xlu0 %v1356, 127
      %v1363 = vpop.permute.xlu0 %1362
      %1364 = vrot.lane.b32.xlu0 %v1357, 127
      %v1365 = vpop.permute.xlu0 %1364
      %v1366 = vmax.f32 %v1354, %v1359
      %v1367 = vmax.f32 %v1355, %v1361
      %v1368 = vmax.f32 %v1356, %v1363
      %v1369 = vmax.f32 %v1357, %v1365
      %1370 = vmatprep.subr.mxu0 0.0
      %1371 = vmatpush1.msra.mxu0 %v202
      %1372 = vmatprep.subr.mxu0 0.0
      %1373 = vmatpush1.msra.mxu0 %v203
      %1374 = vmatprep.subr.mxu0 0.0
      %1375 = vmatpush1.msra.mxu0 %v204
      %1376 = vmatprep.subr.mxu0 0.0
      %1377 = vmatpush1.msra.mxu0 %v205
      %1378 = vmatprep.subr.mxu0 0.0
      %1379 = vmatpush1.msra.mxu0 %v206
      %1380 = vmatprep.subr.mxu0 0.0
      %1381 = vmatpush1.msra.mxu0 %v207
      %1382 = vmatprep.subr.mxu0 0.0
      %1383 = vmatpush1.msra.mxu0 %v208
      %1384 = vmatprep.subr.mxu0 0.0
      %1385 = vmatpush1.msra.mxu0 %v209
      %1386 = vmatprep.subr.mxu0 0.0
      %1387 = vmatpush1.msra.mxu0 %v210
      %1388 = vmatprep.subr.mxu0 0.0
      %1389 = vmatpush1.msra.mxu0 %v211
      %1390 = vmatprep.subr.mxu0 0.0
      %1391 = vmatpush1.msra.mxu0 %v212
      %1392 = vmatprep.subr.mxu0 0.0
      %1393 = vmatpush1.msra.mxu0 %v213
      %1394 = vmatprep.subr.mxu0 0.0
      %1395 = vmatpush1.msra.mxu0 %v214
      %1396 = vmatprep.subr.mxu0 0.0
      %1397 = vmatpush1.msra.mxu0 %v215
      %1398 = vmatprep.subr.mxu0 0.0
      %1399 = vmatpush1.msra.mxu0 %v216
      %1400 = vmatprep.subr.mxu0 0.0
      %1401 = vmatpush1.msra.mxu0 %v217
      %1402 = vmatprep.subr.mxu0 0.0
      %1403 = vmatpush1.msra.mxu0 0.0
      %1404 = vmatprep.subr.mxu0 0.0
      %1405 = vmatpush1.msra.mxu0 0.0
      %1406 = vmatprep.subr.mxu0 0.0
      %1407 = vmatpush1.msra.mxu0 0.0
      %1408 = vmatprep.subr.mxu0 0.0
      %1409 = vmatpush1.msra.mxu0 0.0
      %1410 = vmatprep.subr.mxu0 0.0
      %1411 = vmatpush1.msra.mxu0 0.0
      %1412 = vmatprep.subr.mxu0 0.0
      %1413 = vmatpush1.msra.mxu0 0.0
      %1414 = vmatprep.subr.mxu0 0.0
      %1415 = vmatpush1.msra.mxu0 0.0
      %1416 = vmatprep.subr.mxu0 0.0
      %1417 = vmatpush1.msra.mxu0 0.0
      %1418 = vmatprep.subr.mxu0 0.0
      %1419 = vmatpush1.msra.mxu0 0.0
      %1420 = vmatprep.subr.mxu0 0.0
      %1421 = vmatpush1.msra.mxu0 0.0
      %1422 = vmatprep.subr.mxu0 0.0
      %1423 = vmatpush1.msra.mxu0 0.0
      %1424 = vmatprep.subr.mxu0 0.0
      %1425 = vmatpush1.msra.mxu0 0.0
      %1426 = vmatprep.subr.mxu0 0.0
      %1427 = vmatpush1.msra.mxu0 0.0
      %1428 = vmatprep.subr.mxu0 0.0
      %1429 = vmatpush1.msra.mxu0 0.0
      %1430 = vmatprep.subr.mxu0 0.0
      %1431 = vmatpush1.msra.mxu0 0.0
      %1432 = vmatprep.subr.mxu0 0.0
      %1433 = vmatpush1.msra.mxu0 0.0
      %1434 = vmatprep.mubr.f32.mxu0 0.0
      %1435 = vmatmul.mubr.f32.gmra.mrb[0].mxu0 %v1366
      %v1436 = vpop.f32.mrb[0].mxu0
      %v1437 = vadd.f32 0.0, %v1436
      %v1438 = vpop.f32.mrb[0].mxu0
      %1439 = vmatprep.mubr.f32.mxu0 0.0
      %1440 = vmatmul.mubr.f32.gmra.mrb[0].mxu0 %v1367
      %v1441 = vpop.f32.mrb[0].mxu0
      %v1442 = vadd.f32 0.0, %v1441
      %v1443 = vpop.f32.mrb[0].mxu0
      %1444 = vmatprep.mubr.f32.mxu0 0.0
      %1445 = vmatmul.mubr.f32.gmra.mrb[0].mxu0 %v1368
      %v1446 = vpop.f32.mrb[0].mxu0
      %v1447 = vadd.f32 0.0, %v1446
      %v1448 = vpop.f32.mrb[0].mxu0
      %1449 = vmatprep.mubr.f32.mxu0 0.0
      %1450 = vmatmul.mubr.f32.gmra.mrb[0].mxu0 %v1369
      %v1451 = vpop.f32.mrb[0].mxu0
      %v1452 = vadd.f32 0.0, %v1451
      %v1453 = vpop.f32.mrb[0].mxu0
      %1454 = vdwg.mxu0
      %1455 = vrot.lane.b32.xlu0 %v1437, 1
      %v1456 = vpop.permute.xlu0 %1455
      %1457 = vrot.lane.b32.xlu0 %v1442, 1
      %v1458 = vpop.permute.xlu0 %1457
      %1459 = vrot.lane.b32.xlu0 %v1447, 1
      %v1460 = vpop.permute.xlu0 %1459
      %1461 = vrot.lane.b32.xlu0 %v1452, 1
      %v1462 = vpop.permute.xlu0 %1461
      %v1463 = vsel %vm452, %v1456, 0.0
      %v1464 = vsel %vm452, %v1458, 0.0
      %v1465 = vsel %vm452, %v1460, 0.0
      %v1466 = vsel %vm452, %v1462, 0.0
      %v1467 = vld [vmem:[%s1 + $0x74] sm:$0xf]
      %v1468 = vld [vmem:[%s1 + $0x78] sm:$0xf]
      %v1469 = vld [vmem:[%s1 + $0x7c] sm:$0xf]
      %v1470 = vld [vmem:[%s1 + $0x80] sm:$0xf]
      %v1471 = vld [vmem:[%s1 + $0x84] sm:$0xf]
      %v1472 = vld [vmem:[%s1 + $0x88] sm:$0xf]
      %v1473 = vld [vmem:[%s1 + $0x8c] sm:$0xf]
      %v1474 = vld [vmem:[%s1 + $0x90] sm:$0xf]
      %v1475 = vunpack.c.l.bf16 %v1467
      %v1476 = vunpack.c.l.bf16 %v1468
      %v1477 = vunpack.c.l.bf16 %v1469
      %v1478 = vunpack.c.l.bf16 %v1470
      %v1479 = vunpack.c.l.bf16 %v1471
      %v1480 = vunpack.c.l.bf16 %v1472
      %v1481 = vunpack.c.l.bf16 %v1473
      %v1482 = vunpack.c.l.bf16 %v1474
      %v1483 = vld [vmem:[%s1 + $0x94] sm:$0xf]
      %v1484 = vld [vmem:[%s1 + $0x98] sm:$0xf]
      %v1485 = vld [vmem:[%s1 + $0x9c] sm:$0xf]
      %v1486 = vld [vmem:[%s1 + $0xa0] sm:$0xf]
      %v1487 = vld [vmem:[%s1 + $0xa4] sm:$0xf]
      %v1488 = vld [vmem:[%s1 + $0xa8] sm:$0xf]
      %v1489 = vld [vmem:[%s1 + $0xac] sm:$0xf]
      %v1490 = vld [vmem:[%s1 + $0xb0] sm:$0xf]
      %v1491 = vunpack.c.l.bf16 %v1483
      %v1492 = vunpack.c.l.bf16 %v1484
      %v1493 = vunpack.c.l.bf16 %v1485
      %v1494 = vunpack.c.l.bf16 %v1486
      %v1495 = vunpack.c.l.bf16 %v1487
      %v1496 = vunpack.c.l.bf16 %v1488
      %v1497 = vunpack.c.l.bf16 %v1489
      %v1498 = vunpack.c.l.bf16 %v1490
      %vm1499 = vcmask 261120
      %v1501 = vsel %vm1499, %v1491, 0
      %v1504 = vsel %vm1499, %v1492, 0
      %v1507 = vsel %vm1499, %v1493, 0
      %v1510 = vsel %vm1499, %v1494, 0
      %v1513 = vsel %vm1499, %v1495, 0
      %v1516 = vsel %vm1499, %v1496, 0
      %v1519 = vsel %vm1499, %v1497, 0
      %v1522 = vsel %vm1499, %v1498, 0
      %1524 = vmatprep.subr.mxu0 0.0
      %1525 = vmatpush1.msra.mxu0 %v1437
      %1526 = vmatprep.subr.mxu0 0.0
      %1527 = vmatpush1.msra.mxu0 %v1442
      %1528 = vmatprep.subr.mxu0 0.0
      %1529 = vmatpush1.msra.mxu0 %v1447
      %1530 = vmatprep.subr.mxu0 0.0
      %1531 = vmatpush1.msra.mxu0 %v1452
      %1532 = vmatprep.subr.mxu0 0.0
      %1533 = vmatpush1.msra.mxu0 0.0
      %1534 = vmatprep.subr.mxu0 0.0
      %1535 = vmatpush1.msra.mxu0 0.0
      %1536 = vmatprep.subr.mxu0 0.0
      %1537 = vmatpush1.msra.mxu0 0.0
      %1538 = vmatprep.subr.mxu0 0.0
      %1539 = vmatpush1.msra.mxu0 0.0
      %1540 = vmatprep.subr.mxu0 0.0
      %1541 = vmatpush1.msra.mxu0 0.0
      %1542 = vmatprep.subr.mxu0 0.0
      %1543 = vmatpush1.msra.mxu0 0.0
      %1544 = vmatprep.subr.mxu0 0.0
      %1545 = vmatpush1.msra.mxu0 0.0
      %1546 = vmatprep.subr.mxu0 0.0
      %1547 = vmatpush1.msra.mxu0 0.0
      %1548 = vmatprep.subr.mxu0 0.0
      %1549 = vmatpush1.msra.mxu0 0.0
      %1550 = vmatprep.subr.mxu0 0.0
      %1551 = vmatpush1.msra.mxu0 0.0
      %1552 = vmatprep.subr.mxu0 0.0
      %1553 = vmatpush1.msra.mxu0 0.0
      %1554 = vmatprep.subr.mxu0 0.0
      %1555 = vmatpush1.msra.mxu0 0.0
      %1556 = vmatprep.subr.mxu0 0.0
      %1557 = vmatpush1.msra.mxu0 0.0
      %1558 = vmatprep.subr.mxu0 0.0
      %1559 = vmatpush1.msra.mxu0 0.0
      %1560 = vmatprep.subr.mxu0 0.0
      %1561 = vmatpush1.msra.mxu0 0.0
      %1562 = vmatprep.subr.mxu0 0.0
      %1563 = vmatpush1.msra.mxu0 0.0
      %1564 = vmatprep.subr.mxu0 0.0
      %1565 = vmatpush1.msra.mxu0 0.0
      %1566 = vmatprep.subr.mxu0 0.0
      %1567 = vmatpush1.msra.mxu0 0.0
      %1568 = vmatprep.subr.mxu0 0.0
      %1569 = vmatpush1.msra.mxu0 0.0
      %1570 = vmatprep.subr.mxu0 0.0
      %1571 = vmatpush1.msra.mxu0 0.0
      %1572 = vmatprep.subr.mxu0 0.0
      %1573 = vmatpush1.msra.mxu0 0.0
      %1574 = vmatprep.subr.mxu0 0.0
      %1575 = vmatpush1.msra.mxu0 0.0
      %1576 = vmatprep.subr.mxu0 0.0
      %1577 = vmatpush1.msra.mxu0 0.0
      %1578 = vmatprep.subr.mxu0 0.0
      %1579 = vmatpush1.msra.mxu0 0.0
      %1580 = vmatprep.subr.mxu0 0.0
      %1581 = vmatpush1.msra.mxu0 0.0
      %1582 = vmatprep.subr.mxu0 0.0
      %1583 = vmatpush1.msra.mxu0 0.0
      %1584 = vmatprep.subr.mxu0 0.0
      %1585 = vmatpush1.msra.mxu0 0.0
      %1586 = vmatprep.subr.mxu0 0.0
      %1587 = vmatpush1.msra.mxu0 0.0
      %1588 = vmatprep.mubr.f32.mxu0 0.0
      %1589 = vmatmul.mubr.f32.gmra.mrb[0].mxu0 %v1501
      %v1590 = vpop.f32.mrb[0].mxu0
      %v1591 = vadd.f32 0.0, %v1590
      %v1592 = vpop.f32.mrb[0].mxu0
      %1593 = vmatprep.mubr.f32.mxu0 0.0
      %1594 = vmatmul.mubr.f32.gmra.mrb[0].mxu0 %v1504
      %v1595 = vpop.f32.mrb[0].mxu0
      %v1596 = vadd.f32 0.0, %v1595
      %v1597 = vpop.f32.mrb[0].mxu0
      %1598 = vmatprep.mubr.f32.mxu0 0.0
      %1599 = vmatmul.mubr.f32.gmra.mrb[0].mxu0 %v1507
      %v1600 = vpop.f32.mrb[0].mxu0
      %v1601 = vadd.f32 0.0, %v1600
      %v1602 = vpop.f32.mrb[0].mxu0
      %1603 = vmatprep.mubr.f32.mxu0 0.0
      %1604 = vmatmul.mubr.f32.gmra.mrb[0].mxu0 %v1510
      %v1605 = vpop.f32.mrb[0].mxu0
      %v1606 = vadd.f32 0.0, %v1605
      %v1607 = vpop.f32.mrb[0].mxu0
      %1608 = vmatprep.mubr.f32.mxu0 0.0
      %1609 = vmatmul.mubr.f32.gmra.mrb[0].mxu0 %v1513
      %v1610 = vpop.f32.mrb[0].mxu0
      %v1611 = vadd.f32 0.0, %v1610
      %v1612 = vpop.f32.mrb[0].mxu0
      %1613 = vmatprep.mubr.f32.mxu0 0.0
      %1614 = vmatmul.mubr.f32.gmra.mrb[0].mxu0 %v1516
      %v1615 = vpop.f32.mrb[0].mxu0
      %v1616 = vadd.f32 0.0, %v1615
      %v1617 = vpop.f32.mrb[0].mxu0
      %1618 = vmatprep.mubr.f32.mxu0 0.0
      %1619 = vmatmul.mubr.f32.gmra.mrb[0].mxu0 %v1519
      %v1620 = vpop.f32.mrb[0].mxu0
      %v1621 = vadd.f32 0.0, %v1620
      %v1622 = vpop.f32.mrb[0].mxu0
      %1623 = vmatprep.mubr.f32.mxu0 0.0
      %1624 = vmatmul.mubr.f32.gmra.mrb[0].mxu0 %v1522
      %v1625 = vpop.f32.mrb[0].mxu0
      %v1626 = vadd.f32 0.0, %v1625
      %v1627 = vpop.f32.mrb[0].mxu0
      %1628 = vdwg.mxu0
      %v1630 = vsel %vm1499, %v1475, 0
      %v1633 = vsel %vm1499, %v1476, 0
      %v1636 = vsel %vm1499, %v1477, 0
      %v1639 = vsel %vm1499, %v1478, 0
      %v1642 = vsel %vm1499, %v1479, 0
      %v1645 = vsel %vm1499, %v1480, 0
      %v1648 = vsel %vm1499, %v1481, 0
      %v1651 = vsel %vm1499, %v1482, 0
      %1653 = vmatprep.subr.mxu0 0.0
      %1654 = vmatpush1.msra.mxu0 %v1463
      %1655 = vmatprep.subr.mxu0 0.0
      %1656 = vmatpush1.msra.mxu0 %v1464
      %1657 = vmatprep.subr.mxu0 0.0
      %1658 = vmatpush1.msra.mxu0 %v1465
      %1659 = vmatprep.subr.mxu0 0.0
      %1660 = vmatpush1.msra.mxu0 %v1466
      %1661 = vmatprep.subr.mxu0 0.0
      %1662 = vmatpush1.msra.mxu0 0.0
      %1663 = vmatprep.subr.mxu0 0.0
      %1664 = vmatpush1.msra.mxu0 0.0
      %1665 = vmatprep.subr.mxu0 0.0
      %1666 = vmatpush1.msra.mxu0 0.0
      %1667 = vmatprep.subr.mxu0 0.0
      %1668 = vmatpush1.msra.mxu0 0.0
      %1669 = vmatprep.subr.mxu0 0.0
      %1670 = vmatpush1.msra.mxu0 0.0
      %1671 = vmatprep.subr.mxu0 0.0
      %1672 = vmatpush1.msra.mxu0 0.0
      %1673 = vmatprep.subr.mxu0 0.0
      %1674 = vmatpush1.msra.mxu0 0.0
      %1675 = vmatprep.subr.mxu0 0.0
      %1676 = vmatpush1.msra.mxu0 0.0
      %1677 = vmatprep.subr.mxu0 0.0
      %1678 = vmatpush1.msra.mxu0 0.0
      %1679 = vmatprep.subr.mxu0 0.0
      %1680 = vmatpush1.msra.mxu0 0.0
      %1681 = vmatprep.subr.mxu0 0.0
      %1682 = vmatpush1.msra.mxu0 0.0
      %1683 = vmatprep.subr.mxu0 0.0
      %1684 = vmatpush1.msra.mxu0 0.0
      %1685 = vmatprep.subr.mxu0 0.0
      %1686 = vmatpush1.msra.mxu0 0.0
      %1687 = vmatprep.subr.mxu0 0.0
      %1688 = vmatpush1.msra.mxu0 0.0
      %1689 = vmatprep.subr.mxu0 0.0
      %1690 = vmatpush1.msra.mxu0 0.0
      %1691 = vmatprep.subr.mxu0 0.0
      %1692 = vmatpush1.msra.mxu0 0.0
      %1693 = vmatprep.subr.mxu0 0.0
      %1694 = vmatpush1.msra.mxu0 0.0
      %1695 = vmatprep.subr.mxu0 0.0
      %1696 = vmatpush1.msra.mxu0 0.0
      %1697 = vmatprep.subr.mxu0 0.0
      %1698 = vmatpush1.msra.mxu0 0.0
      %1699 = vmatprep.subr.mxu0 0.0
      %1700 = vmatpush1.msra.mxu0 0.0
      %1701 = vmatprep.subr.mxu0 0.0
      %1702 = vmatpush1.msra.mxu0 0.0
      %1703 = vmatprep.subr.mxu0 0.0
      %1704 = vmatpush1.msra.mxu0 0.0
      %1705 = vmatprep.subr.mxu0 0.0
      %1706 = vmatpush1.msra.mxu0 0.0
      %1707 = vmatprep.subr.mxu0 0.0
      %1708 = vmatpush1.msra.mxu0 0.0
      %1709 = vmatprep.subr.mxu0 0.0
      %1710 = vmatpush1.msra.mxu0 0.0
      %1711 = vmatprep.subr.mxu0 0.0
      %1712 = vmatpush1.msra.mxu0 0.0
      %1713 = vmatprep.subr.mxu0 0.0
      %1714 = vmatpush1.msra.mxu0 0.0
      %1715 = vmatprep.subr.mxu0 0.0
      %1716 = vmatpush1.msra.mxu0 0.0
      %1717 = vmatprep.mubr.f32.mxu0 0.0
      %1718 = vmatmul.mubr.f32.gmra.mrb[0].mxu0 %v1630
      %v1719 = vpop.f32.mrb[0].mxu0
      %v1720 = vadd.f32 %v1591, %v1719
      %v1721 = vpop.f32.mrb[0].mxu0
      %1722 = vmatprep.mubr.f32.mxu0 0.0
      %1723 = vmatmul.mubr.f32.gmra.mrb[0].mxu0 %v1633
      %v1724 = vpop.f32.mrb[0].mxu0
      %v1725 = vadd.f32 %v1596, %v1724
      %v1726 = vpop.f32.mrb[0].mxu0
      %1727 = vmatprep.mubr.f32.mxu0 0.0
      %1728 = vmatmul.mubr.f32.gmra.mrb[0].mxu0 %v1636
      %v1729 = vpop.f32.mrb[0].mxu0
      %v1730 = vadd.f32 %v1601, %v1729
      %v1731 = vpop.f32.mrb[0].mxu0
      %1732 = vmatprep.mubr.f32.mxu0 0.0
      %1733 = vmatmul.mubr.f32.gmra.mrb[0].mxu0 %v1639
      %v1734 = vpop.f32.mrb[0].mxu0
      %v1735 = vadd.f32 %v1606, %v1734
      %v1736 = vpop.f32.mrb[0].mxu0
      %1737 = vmatprep.mubr.f32.mxu0 0.0
      %1738 = vmatmul.mubr.f32.gmra.mrb[0].mxu0 %v1642
      %v1739 = vpop.f32.mrb[0].mxu0
      %v1740 = vadd.f32 %v1611, %v1739
      %v1741 = vpop.f32.mrb[0].mxu0
      %1742 = vmatprep.mubr.f32.mxu0 0.0
      %1743 = vmatmul.mubr.f32.gmra.mrb[0].mxu0 %v1645
      %v1744 = vpop.f32.mrb[0].mxu0
      %v1745 = vadd.f32 %v1616, %v1744
      %v1746 = vpop.f32.mrb[0].mxu0
      %1747 = vmatprep.mubr.f32.mxu0 0.0
      %1748 = vmatmul.mubr.f32.gmra.mrb[0].mxu0 %v1648
      %v1749 = vpop.f32.mrb[0].mxu0
      %v1750 = vadd.f32 %v1621, %v1749
      %v1751 = vpop.f32.mrb[0].mxu0
      %1752 = vmatprep.mubr.f32.mxu0 0.0
      %1753 = vmatmul.mubr.f32.gmra.mrb[0].mxu0 %v1651
      %v1754 = vpop.f32.mrb[0].mxu0
      %v1755 = vadd.f32 %v1626, %v1754
      %v1756 = vpop.f32.mrb[0].mxu0
      %1757 = vdwg.mxu0
      %1758 = vrot.lane.b32.xlu0 %v1437, 127
      %v1759 = vpop.permute.xlu0 %1758
      %1760 = vrot.lane.b32.xlu0 %v1442, 127
      %v1761 = vpop.permute.xlu0 %1760
      %1762 = vrot.lane.b32.xlu0 %v1447, 127
      %v1763 = vpop.permute.xlu0 %1762
      %1764 = vrot.lane.b32.xlu0 %v1452, 127
      %v1765 = vpop.permute.xlu0 %1764
      %vm1766 = vcmp.lt.s32.totalorder %v201, 15
      %v1767 = vsel %vm1766, 1, 0
      %vm1768 = vcmp.eq.s32.totalorder %v1767, 1
      %v1769 = vsel %vm1768, %v1759, 0.0
      %v1770 = vsel %vm1768, %v1761, 0.0
      %v1771 = vsel %vm1768, %v1763, 0.0
      %v1772 = vsel %vm1768, %v1765, 0.0
      %v1773 = vld [vmem:[%s1 + $0xb4] sm:$0xf]
      %v1774 = vld [vmem:[%s1 + $0xb8] sm:$0xf]
      %v1775 = vld [vmem:[%s1 + $0xbc] sm:$0xf]
      %v1776 = vld [vmem:[%s1 + $0xc0] sm:$0xf]
      %v1777 = vld [vmem:[%s1 + $0xc4] sm:$0xf]
      %v1778 = vld [vmem:[%s1 + $0xc8] sm:$0xf]
      %v1779 = vld [vmem:[%s1 + $0xcc] sm:$0xf]
      %v1780 = vld [vmem:[%s1 + $0xd0] sm:$0xf]
      %v1781 = vunpack.c.l.bf16 %v1773
      %v1782 = vunpack.c.l.bf16 %v1774
      %v1783 = vunpack.c.l.bf16 %v1775
      %v1784 = vunpack.c.l.bf16 %v1776
      %v1785 = vunpack.c.l.bf16 %v1777
      %v1786 = vunpack.c.l.bf16 %v1778
      %v1787 = vunpack.c.l.bf16 %v1779
      %v1788 = vunpack.c.l.bf16 %v1780
      %v1790 = vsel %vm1499, %v1781, 0
      %v1793 = vsel %vm1499, %v1782, 0
      %v1796 = vsel %vm1499, %v1783, 0
      %v1799 = vsel %vm1499, %v1784, 0
      %v1802 = vsel %vm1499, %v1785, 0
      %v1805 = vsel %vm1499, %v1786, 0
      %v1808 = vsel %vm1499, %v1787, 0
      %v1811 = vsel %vm1499, %v1788, 0
      %1813 = vmatprep.subr.mxu0 0.0
      %1814 = vmatpush1.msra.mxu0 %v1769
      %1815 = vmatprep.subr.mxu0 0.0
      %1816 = vmatpush1.msra.mxu0 %v1770
      %1817 = vmatprep.subr.mxu0 0.0
      %1818 = vmatpush1.msra.mxu0 %v1771
      %1819 = vmatprep.subr.mxu0 0.0
      %1820 = vmatpush1.msra.mxu0 %v1772
      %1821 = vmatprep.subr.mxu0 0.0
      %1822 = vmatpush1.msra.mxu0 0.0
      %1823 = vmatprep.subr.mxu0 0.0
      %1824 = vmatpush1.msra.mxu0 0.0
      %1825 = vmatprep.subr.mxu0 0.0
      %1826 = vmatpush1.msra.mxu0 0.0
      %1827 = vmatprep.subr.mxu0 0.0
      %1828 = vmatpush1.msra.mxu0 0.0
      %1829 = vmatprep.subr.mxu0 0.0
      %1830 = vmatpush1.msra.mxu0 0.0
      %1831 = vmatprep.subr.mxu0 0.0
      %1832 = vmatpush1.msra.mxu0 0.0
      %1833 = vmatprep.subr.mxu0 0.0
      %1834 = vmatpush1.msra.mxu0 0.0
      %1835 = vmatprep.subr.mxu0 0.0
      %1836 = vmatpush1.msra.mxu0 0.0
      %1837 = vmatprep.subr.mxu0 0.0
      %1838 = vmatpush1.msra.mxu0 0.0
      %1839 = vmatprep.subr.mxu0 0.0
      %1840 = vmatpush1.msra.mxu0 0.0
      %1841 = vmatprep.subr.mxu0 0.0
      %1842 = vmatpush1.msra.mxu0 0.0
      %1843 = vmatprep.subr.mxu0 0.0
      %1844 = vmatpush1.msra.mxu0 0.0
      %1845 = vmatprep.subr.mxu0 0.0
      %1846 = vmatpush1.msra.mxu0 0.0
      %1847 = vmatprep.subr.mxu0 0.0
      %1848 = vmatpush1.msra.mxu0 0.0
      %1849 = vmatprep.subr.mxu0 0.0
      %1850 = vmatpush1.msra.mxu0 0.0
      %1851 = vmatprep.subr.mxu0 0.0
      %1852 = vmatpush1.msra.mxu0 0.0
      %1853 = vmatprep.subr.mxu0 0.0
      %1854 = vmatpush1.msra.mxu0 0.0
      %1855 = vmatprep.subr.mxu0 0.0
      %1856 = vmatpush1.msra.mxu0 0.0
      %1857 = vmatprep.subr.mxu0 0.0
      %1858 = vmatpush1.msra.mxu0 0.0
      %1859 = vmatprep.subr.mxu0 0.0
      %1860 = vmatpush1.msra.mxu0 0.0
      %1861 = vmatprep.subr.mxu0 0.0
      %1862 = vmatpush1.msra.mxu0 0.0
      %1863 = vmatprep.subr.mxu0 0.0
      %1864 = vmatpush1.msra.mxu0 0.0
      %1865 = vmatprep.subr.mxu0 0.0
      %1866 = vmatpush1.msra.mxu0 0.0
      %1867 = vmatprep.subr.mxu0 0.0
      %1868 = vmatpush1.msra.mxu0 0.0
      %1869 = vmatprep.subr.mxu0 0.0
      %1870 = vmatpush1.msra.mxu0 0.0
      %1871 = vmatprep.subr.mxu0 0.0
      %1872 = vmatpush1.msra.mxu0 0.0
      %1873 = vmatprep.subr.mxu0 0.0
      %1874 = vmatpush1.msra.mxu0 0.0
      %1875 = vmatprep.subr.mxu0 0.0
      %1876 = vmatpush1.msra.mxu0 0.0
      %1877 = vmatprep.mubr.f32.mxu0 0.0
      %1878 = vmatmul.mubr.f32.gmra.mrb[0].mxu0 %v1790
      %v1879 = vpop.f32.mrb[0].mxu0
      %v1880 = vadd.f32 0.0, %v1879
      %v1881 = vpop.f32.mrb[0].mxu0
      %1882 = vmatprep.mubr.f32.mxu0 0.0
      %1883 = vmatmul.mubr.f32.gmra.mrb[0].mxu0 %v1793
      %v1884 = vpop.f32.mrb[0].mxu0
      %v1885 = vadd.f32 0.0, %v1884
      %v1886 = vpop.f32.mrb[0].mxu0
      %1887 = vmatprep.mubr.f32.mxu0 0.0
      %1888 = vmatmul.mubr.f32.gmra.mrb[0].mxu0 %v1796
      %v1889 = vpop.f32.mrb[0].mxu0
      %v1890 = vadd.f32 0.0, %v1889
      %v1891 = vpop.f32.mrb[0].mxu0
      %1892 = vmatprep.mubr.f32.mxu0 0.0
      %1893 = vmatmul.mubr.f32.gmra.mrb[0].mxu0 %v1799
      %v1894 = vpop.f32.mrb[0].mxu0
      %v1895 = vadd.f32 0.0, %v1894
      %v1896 = vpop.f32.mrb[0].mxu0
      %1897 = vmatprep.mubr.f32.mxu0 0.0
      %1898 = vmatmul.mubr.f32.gmra.mrb[0].mxu0 %v1802
      %v1899 = vpop.f32.mrb[0].mxu0
      %v1900 = vadd.f32 0.0, %v1899
      %v1901 = vpop.f32.mrb[0].mxu0
      %1902 = vmatprep.mubr.f32.mxu0 0.0
      %1903 = vmatmul.mubr.f32.gmra.mrb[0].mxu0 %v1805
      %v1904 = vpop.f32.mrb[0].mxu0
      %v1905 = vadd.f32 0.0, %v1904
      %v1906 = vpop.f32.mrb[0].mxu0
      %1907 = vmatprep.mubr.f32.mxu0 0.0
      %1908 = vmatmul.mubr.f32.gmra.mrb[0].mxu0 %v1808
      %v1909 = vpop.f32.mrb[0].mxu0
      %v1910 = vadd.f32 0.0, %v1909
      %v1911 = vpop.f32.mrb[0].mxu0
      %1912 = vmatprep.mubr.f32.mxu0 0.0
      %1913 = vmatmul.mubr.f32.gmra.mrb[0].mxu0 %v1811
      %v1914 = vpop.f32.mrb[0].mxu0
      %v1915 = vadd.f32 0.0, %v1914
      %v1916 = vpop.f32.mrb[0].mxu0
      %1917 = vdwg.mxu0
      %v1918 = vadd.f32 %v1720, %v1880
      %v1919 = vadd.f32 %v1725, %v1885
      %v1920 = vadd.f32 %v1730, %v1890
      %v1921 = vadd.f32 %v1735, %v1895
      %v1922 = vadd.f32 %v1740, %v1900
      %v1923 = vadd.f32 %v1745, %v1905
      %v1924 = vadd.f32 %v1750, %v1910
      %v1925 = vadd.f32 %v1755, %v1915
      %1927 = vset.pattern.permute.xlu0 3
      %1928 = vperm.xlu0 %1927, %v234
      %v1929 = vpop.permute.xlu0 %1928
      %1932 = vset.pattern.permute.xlu0 3
      %1933 = vperm.xlu0 %1932, %v235
      %v1934 = vpop.permute.xlu0 %1933
      %1937 = vset.pattern.permute.xlu0 3
      %1938 = vperm.xlu0 %1937, %v236
      %v1939 = vpop.permute.xlu0 %1938
      %1942 = vset.pattern.permute.xlu0 3
      %1943 = vperm.xlu0 %1942, %v237
      %v1944 = vpop.permute.xlu0 %1943
      %1947 = vset.pattern.permute.xlu0 3
      %1948 = vperm.xlu0 %1947, %v238
      %v1949 = vpop.permute.xlu0 %1948
      %1952 = vset.pattern.permute.xlu0 3
      %1953 = vperm.xlu0 %1952, %v239
      %v1954 = vpop.permute.xlu0 %1953
      %1957 = vset.pattern.permute.xlu0 3
      %1958 = vperm.xlu0 %1957, %v240
      %v1959 = vpop.permute.xlu0 %1958
      %1962 = vset.pattern.permute.xlu0 3
      %1963 = vperm.xlu0 %1962, %v241
      %v1964 = vpop.permute.xlu0 %1963
      %v1966 = vadd.f32 %v1918, %v1929
      %v1967 = vadd.f32 %v1919, %v1934
      %v1968 = vadd.f32 %v1920, %v1939
      %v1969 = vadd.f32 %v1921, %v1944
      %v1970 = vadd.f32 %v1922, %v1949
      %v1971 = vadd.f32 %v1923, %v1954
      %v1972 = vadd.f32 %v1924, %v1959
      %v1973 = vadd.f32 %v1925, %v1964
      %v1974 = vmax.f32 %v1966, 0.0
      %v1975 = vmax.f32 %v1967, 0.0
      %v1976 = vmax.f32 %v1968, 0.0
      %v1977 = vmax.f32 %v1969, 0.0
      %v1978 = vmax.f32 %v1970, 0.0
      %v1979 = vmax.f32 %v1971, 0.0
      %v1980 = vmax.f32 %v1972, 0.0
      %v1981 = vmax.f32 %v1973, 0.0
      %1982 = vrot.lane.b32.xlu0 %v1974, 127
      %v1983 = vpop.permute.xlu0 %1982
      %1984 = vrot.lane.b32.xlu0 %v1975, 127
      %v1985 = vpop.permute.xlu0 %1984
      %1986 = vrot.lane.b32.xlu0 %v1976, 127
      %v1987 = vpop.permute.xlu0 %1986
      %1988 = vrot.lane.b32.xlu0 %v1977, 127
      %v1989 = vpop.permute.xlu0 %1988
      %1990 = vrot.lane.b32.xlu0 %v1978, 127
      %v1991 = vpop.permute.xlu0 %1990
      %1992 = vrot.lane.b32.xlu0 %v1979, 127
      %v1993 = vpop.permute.xlu0 %1992
      %1994 = vrot.lane.b32.xlu0 %v1980, 127
      %v1995 = vpop.permute.xlu0 %1994
      %1996 = vrot.lane.b32.xlu0 %v1981, 127
      %v1997 = vpop.permute.xlu0 %1996
      %v1998 = vmax.f32 %v1974, %v1983
      %v1999 = vmax.f32 %v1975, %v1985
      %v2000 = vmax.f32 %v1976, %v1987
      %v2001 = vmax.f32 %v1977, %v1989
      %v2002 = vmax.f32 %v1978, %v1991
      %v2003 = vmax.f32 %v1979, %v1993
      %v2004 = vmax.f32 %v1980, %v1995
      %v2005 = vmax.f32 %v1981, %v1997
      %2006 = vmatprep.subr.mxu0 0.0
      %2007 = vmatpush1.msra.mxu0 %v202
      %2008 = vmatprep.subr.mxu0 0.0
      %2009 = vmatpush1.msra.mxu0 %v203
      %2010 = vmatprep.subr.mxu0 0.0
      %2011 = vmatpush1.msra.mxu0 %v204
      %2012 = vmatprep.subr.mxu0 0.0
      %2013 = vmatpush1.msra.mxu0 %v205
      %2014 = vmatprep.subr.mxu0 0.0
      %2015 = vmatpush1.msra.mxu0 %v206
      %2016 = vmatprep.subr.mxu0 0.0
      %2017 = vmatpush1.msra.mxu0 %v207
      %2018 = vmatprep.subr.mxu0 0.0
      %2019 = vmatpush1.msra.mxu0 %v208
      %2020 = vmatprep.subr.mxu0 0.0
      %2021 = vmatpush1.msra.mxu0 %v209
      %2022 = vmatprep.subr.mxu0 0.0
      %2023 = vmatpush1.msra.mxu0 %v210
      %2024 = vmatprep.subr.mxu0 0.0
      %2025 = vmatpush1.msra.mxu0 %v211
      %2026 = vmatprep.subr.mxu0 0.0
      %2027 = vmatpush1.msra.mxu0 %v212
      %2028 = vmatprep.subr.mxu0 0.0
      %2029 = vmatpush1.msra.mxu0 %v213
      %2030 = vmatprep.subr.mxu0 0.0
      %2031 = vmatpush1.msra.mxu0 %v214
      %2032 = vmatprep.subr.mxu0 0.0
      %2033 = vmatpush1.msra.mxu0 %v215
      %2034 = vmatprep.subr.mxu0 0.0
      %2035 = vmatpush1.msra.mxu0 %v216
      %2036 = vmatprep.subr.mxu0 0.0
      %2037 = vmatpush1.msra.mxu0 %v217
      %2038 = vmatprep.subr.mxu0 0.0
      %2039 = vmatpush1.msra.mxu0 0.0
      %2040 = vmatprep.subr.mxu0 0.0
      %2041 = vmatpush1.msra.mxu0 0.0
      %2042 = vmatprep.subr.mxu0 0.0
      %2043 = vmatpush1.msra.mxu0 0.0
      %2044 = vmatprep.subr.mxu0 0.0
      %2045 = vmatpush1.msra.mxu0 0.0
      %2046 = vmatprep.subr.mxu0 0.0
      %2047 = vmatpush1.msra.mxu0 0.0
      %2048 = vmatprep.subr.mxu0 0.0
      %2049 = vmatpush1.msra.mxu0 0.0
      %2050 = vmatprep.subr.mxu0 0.0
      %2051 = vmatpush1.msra.mxu0 0.0
      %2052 = vmatprep.subr.mxu0 0.0
      %2053 = vmatpush1.msra.mxu0 0.0
      %2054 = vmatprep.subr.mxu0 0.0
      %2055 = vmatpush1.msra.mxu0 0.0
      %2056 = vmatprep.subr.mxu0 0.0
      %2057 = vmatpush1.msra.mxu0 0.0
      %2058 = vmatprep.subr.mxu0 0.0
      %2059 = vmatpush1.msra.mxu0 0.0
      %2060 = vmatprep.subr.mxu0 0.0
      %2061 = vmatpush1.msra.mxu0 0.0
      %2062 = vmatprep.subr.mxu0 0.0
      %2063 = vmatpush1.msra.mxu0 0.0
      %2064 = vmatprep.subr.mxu0 0.0
      %2065 = vmatpush1.msra.mxu0 0.0
      %2066 = vmatprep.subr.mxu0 0.0
      %2067 = vmatpush1.msra.mxu0 0.0
      %2068 = vmatprep.subr.mxu0 0.0
      %2069 = vmatpush1.msra.mxu0 0.0
      %2070 = vmatprep.mubr.f32.mxu0 0.0
      %2071 = vmatmul.mubr.f32.gmra.mrb[0].mxu0 %v1998
      %v2072 = vpop.f32.mrb[0].mxu0
      %v2073 = vadd.f32 0.0, %v2072
      %v2074 = vpop.f32.mrb[0].mxu0
      %2075 = vmatprep.mubr.f32.mxu0 0.0
      %2076 = vmatmul.mubr.f32.gmra.mrb[0].mxu0 %v1999
      %v2077 = vpop.f32.mrb[0].mxu0
      %v2078 = vadd.f32 0.0, %v2077
      %v2079 = vpop.f32.mrb[0].mxu0
      %2080 = vmatprep.mubr.f32.mxu0 0.0
      %2081 = vmatmul.mubr.f32.gmra.mrb[0].mxu0 %v2000
      %v2082 = vpop.f32.mrb[0].mxu0
      %v2083 = vadd.f32 0.0, %v2082
      %v2084 = vpop.f32.mrb[0].mxu0
      %2085 = vmatprep.mubr.f32.mxu0 0.0
      %2086 = vmatmul.mubr.f32.gmra.mrb[0].mxu0 %v2001
      %v2087 = vpop.f32.mrb[0].mxu0
      %v2088 = vadd.f32 0.0, %v2087
      %v2089 = vpop.f32.mrb[0].mxu0
      %2090 = vmatprep.mubr.f32.mxu0 0.0
      %2091 = vmatmul.mubr.f32.gmra.mrb[0].mxu0 %v2002
      %v2092 = vpop.f32.mrb[0].mxu0
      %v2093 = vadd.f32 0.0, %v2092
      %v2094 = vpop.f32.mrb[0].mxu0
      %2095 = vmatprep.mubr.f32.mxu0 0.0
      %2096 = vmatmul.mubr.f32.gmra.mrb[0].mxu0 %v2003
      %v2097 = vpop.f32.mrb[0].mxu0
      %v2098 = vadd.f32 0.0, %v2097
      %v2099 = vpop.f32.mrb[0].mxu0
      %2100 = vmatprep.mubr.f32.mxu0 0.0
      %2101 = vmatmul.mubr.f32.gmra.mrb[0].mxu0 %v2004
      %v2102 = vpop.f32.mrb[0].mxu0
      %v2103 = vadd.f32 0.0, %v2102
      %v2104 = vpop.f32.mrb[0].mxu0
      %2105 = vmatprep.mubr.f32.mxu0 0.0
      %2106 = vmatmul.mubr.f32.gmra.mrb[0].mxu0 %v2005
      %v2107 = vpop.f32.mrb[0].mxu0
      %v2108 = vadd.f32 0.0, %v2107
      %v2109 = vpop.f32.mrb[0].mxu0
      %2110 = vdwg.mxu0
      %vm2111 = vcmp.lt.s32.totalorder %v201, 8
      %v2112 = vsel %vm2111, 1, 0
      %vm2113 = vcmp.eq.s32.totalorder %v2112, 1
      %v2114 = vsel %vm2113, %v2073, 0.0
      %v2115 = vsel %vm2113, %v2078, 0.0
      %v2116 = vsel %vm2113, %v2083, 0.0
      %v2117 = vsel %vm2113, %v2088, 0.0
      %v2118 = vsel %vm2113, %v2093, 0.0
      %v2119 = vsel %vm2113, %v2098, 0.0
      %v2120 = vsel %vm2113, %v2103, 0.0
      %v2121 = vsel %vm2113, %v2108, 0.0
      %vm2122 = vcmask 523264
      %v2124 = vsel %vm2122, %v226, 0
      %v2127 = vsel %vm2122, %v227, 0
      %v2130 = vsel %vm2122, %v228, 0
      %v2133 = vsel %vm2122, %v229, 0
      %v2136 = vsel %vm2122, %v230, 0
      %v2139 = vsel %vm2122, %v231, 0
      %v2142 = vsel %vm2122, %v232, 0
      %v2145 = vsel %vm2122, %v233, 0
      %2147 = vmatprep.subr.mxu0 0.0
      %2148 = vmatpush1.msra.mxu0 %v2114
      %2149 = vmatprep.subr.mxu0 0.0
      %2150 = vmatpush1.msra.mxu0 %v2115
      %2151 = vmatprep.subr.mxu0 0.0
      %2152 = vmatpush1.msra.mxu0 %v2116
      %2153 = vmatprep.subr.mxu0 0.0
      %2154 = vmatpush1.msra.mxu0 %v2117
      %2155 = vmatprep.subr.mxu0 0.0
      %2156 = vmatpush1.msra.mxu0 %v2118
      %2157 = vmatprep.subr.mxu0 0.0
      %2158 = vmatpush1.msra.mxu0 %v2119
      %2159 = vmatprep.subr.mxu0 0.0
      %2160 = vmatpush1.msra.mxu0 %v2120
      %2161 = vmatprep.subr.mxu0 0.0
      %2162 = vmatpush1.msra.mxu0 %v2121
      %2163 = vmatprep.subr.mxu0 0.0
      %2164 = vmatpush1.msra.mxu0 0.0
      %2165 = vmatprep.subr.mxu0 0.0
      %2166 = vmatpush1.msra.mxu0 0.0
      %2167 = vmatprep.subr.mxu0 0.0
      %2168 = vmatpush1.msra.mxu0 0.0
      %2169 = vmatprep.subr.mxu0 0.0
      %2170 = vmatpush1.msra.mxu0 0.0
      %2171 = vmatprep.subr.mxu0 0.0
      %2172 = vmatpush1.msra.mxu0 0.0
      %2173 = vmatprep.subr.mxu0 0.0
      %2174 = vmatpush1.msra.mxu0 0.0
      %2175 = vmatprep.subr.mxu0 0.0
      %2176 = vmatpush1.msra.mxu0 0.0
      %2177 = vmatprep.subr.mxu0 0.0
      %2178 = vmatpush1.msra.mxu0 0.0
      %2179 = vmatprep.subr.mxu0 0.0
      %2180 = vmatpush1.msra.mxu0 0.0
      %2181 = vmatprep.subr.mxu0 0.0
      %2182 = vmatpush1.msra.mxu0 0.0
      %2183 = vmatprep.subr.mxu0 0.0
      %2184 = vmatpush1.msra.mxu0 0.0
      %2185 = vmatprep.subr.mxu0 0.0
      %2186 = vmatpush1.msra.mxu0 0.0
      %2187 = vmatprep.subr.mxu0 0.0
      %2188 = vmatpush1.msra.mxu0 0.0
      %2189 = vmatprep.subr.mxu0 0.0
      %2190 = vmatpush1.msra.mxu0 0.0
      %2191 = vmatprep.subr.mxu0 0.0
      %2192 = vmatpush1.msra.mxu0 0.0
      %2193 = vmatprep.subr.mxu0 0.0
      %2194 = vmatpush1.msra.mxu0 0.0
      %2195 = vmatprep.subr.mxu0 0.0
      %2196 = vmatpush1.msra.mxu0 0.0
      %2197 = vmatprep.subr.mxu0 0.0
      %2198 = vmatpush1.msra.mxu0 0.0
      %2199 = vmatprep.subr.mxu0 0.0
      %2200 = vmatpush1.msra.mxu0 0.0
      %2201 = vmatprep.subr.mxu0 0.0
      %2202 = vmatpush1.msra.mxu0 0.0
      %2203 = vmatprep.subr.mxu0 0.0
      %2204 = vmatpush1.msra.mxu0 0.0
      %2205 = vmatprep.subr.mxu0 0.0
      %2206 = vmatpush1.msra.mxu0 0.0
      %2207 = vmatprep.subr.mxu0 0.0
      %2208 = vmatpush1.msra.mxu0 0.0
      %2209 = vmatprep.subr.mxu0 0.0
      %2210 = vmatpush1.msra.mxu0 0.0
      %2211 = vmatprep.mubr.f32.mxu0 0.0
      %2212 = vmatmul.mubr.f32.gmra.mrb[0].mxu0 %v2124
      %v2213 = vpop.f32.mrb[0].mxu0
      %v2214 = vadd.f32 0.0, %v2213
      %v2215 = vpop.f32.mrb[0].mxu0
      %2216 = vmatprep.mubr.f32.mxu0 0.0
      %2217 = vmatmul.mubr.f32.gmra.mrb[0].mxu0 %v2127
      %v2218 = vpop.f32.mrb[0].mxu0
      %v2219 = vadd.f32 0.0, %v2218
      %v2220 = vpop.f32.mrb[0].mxu0
      %2221 = vmatprep.mubr.f32.mxu0 0.0
      %2222 = vmatmul.mubr.f32.gmra.mrb[0].mxu0 %v2130
      %v2223 = vpop.f32.mrb[0].mxu0
      %v2224 = vadd.f32 0.0, %v2223
      %v2225 = vpop.f32.mrb[0].mxu0
      %2226 = vmatprep.mubr.f32.mxu0 0.0
      %2227 = vmatmul.mubr.f32.gmra.mrb[0].mxu0 %v2133
      %v2228 = vpop.f32.mrb[0].mxu0
      %v2229 = vadd.f32 0.0, %v2228
      %v2230 = vpop.f32.mrb[0].mxu0
      %2231 = vmatprep.mubr.f32.mxu0 0.0
      %2232 = vmatmul.mubr.f32.gmra.mrb[0].mxu0 %v2136
      %v2233 = vpop.f32.mrb[0].mxu0
      %v2234 = vadd.f32 0.0, %v2233
      %v2235 = vpop.f32.mrb[0].mxu0
      %2236 = vmatprep.mubr.f32.mxu0 0.0
      %2237 = vmatmul.mubr.f32.gmra.mrb[0].mxu0 %v2139
      %v2238 = vpop.f32.mrb[0].mxu0
      %v2239 = vadd.f32 0.0, %v2238
      %v2240 = vpop.f32.mrb[0].mxu0
      %2241 = vmatprep.mubr.f32.mxu0 0.0
      %2242 = vmatmul.mubr.f32.gmra.mrb[0].mxu0 %v2142
      %v2243 = vpop.f32.mrb[0].mxu0
      %v2244 = vadd.f32 0.0, %v2243
      %v2245 = vpop.f32.mrb[0].mxu0
      %2246 = vmatprep.mubr.f32.mxu0 0.0
      %2247 = vmatmul.mubr.f32.gmra.mrb[0].mxu0 %v2145
      %v2248 = vpop.f32.mrb[0].mxu0
      %v2249 = vadd.f32 0.0, %v2248
      %v2250 = vpop.f32.mrb[0].mxu0
      %2251 = vdwg.mxu0
      %2252 = vadd.xlane.f32.xlu0 %v2214
      %v2253 = vpop.xlane.xlu0 %2252
      %2254 = vadd.xlane.f32.xlu0 %v2219
      %v2255 = vpop.xlane.xlu0 %2254
      %2256 = vadd.xlane.f32.xlu0 %v2224
      %v2257 = vpop.xlane.xlu0 %2256
      %2258 = vadd.xlane.f32.xlu0 %v2229
      %v2259 = vpop.xlane.xlu0 %2258
      %2260 = vadd.xlane.f32.xlu0 %v2234
      %v2261 = vpop.xlane.xlu0 %2260
      %2262 = vadd.xlane.f32.xlu0 %v2239
      %v2263 = vpop.xlane.xlu0 %2262
      %2264 = vadd.xlane.f32.xlu0 %v2244
      %v2265 = vpop.xlane.xlu0 %2264
      %2266 = vadd.xlane.f32.xlu0 %v2249
      %v2267 = vpop.xlane.xlu0 %2266
      %v2268 = vmul.f32 %v2253, 0.125
      %v2269 = vmul.f32 %v2255, 0.125
      %v2270 = vmul.f32 %v2257, 0.125
      %v2271 = vmul.f32 %v2259, 0.125
      %v2272 = vmul.f32 %v2261, 0.125
      %v2273 = vmul.f32 %v2263, 0.125
      %v2274 = vmul.f32 %v2265, 0.125
      %v2275 = vmul.f32 %v2267, 0.125
      %v2276 = vadd.f32 %v2268, %v234
      %v2277 = vadd.f32 %v2269, %v235
      %v2278 = vadd.f32 %v2270, %v236
      %v2279 = vadd.f32 %v2271, %v237
      %v2280 = vadd.f32 %v2272, %v238
      %v2281 = vadd.f32 %v2273, %v239
      %v2282 = vadd.f32 %v2274, %v240
      %v2283 = vadd.f32 %v2275, %v241
      %2292 = vrot.lane.b32.xlu0 %v2276, 124
      %v2293 = vpop.permute.xlu0 %2292
      %2294 = vrot.lane.b32.xlu0 %v2277, 124
      %v2295 = vpop.permute.xlu0 %2294
      %2296 = vrot.lane.b32.xlu0 %v2278, 124
      %v2297 = vpop.permute.xlu0 %2296
      %2298 = vrot.lane.b32.xlu0 %v2279, 124
      %v2299 = vpop.permute.xlu0 %2298
      %2300 = vrot.lane.b32.xlu0 %v2280, 124
      %v2301 = vpop.permute.xlu0 %2300
      %2302 = vrot.lane.b32.xlu0 %v2281, 124
      %v2303 = vpop.permute.xlu0 %2302
      %2304 = vrot.lane.b32.xlu0 %v2282, 124
      %v2305 = vpop.permute.xlu0 %2304
      %2306 = vrot.lane.b32.xlu0 %v2283, 124
      %v2307 = vpop.permute.xlu0 %2306
      %vm2316 = vcmask 7168
      %2317 = vst.msk [vmem:[%s198] sm:$0xff] %vm2316, %v2293
      %2318 = vst.msk [vmem:[%s198 + $0x8] sm:$0xff] %vm2316, %v2295
      %2319 = vst.msk [vmem:[%s198 + $0x10] sm:$0xff] %vm2316, %v2297
      %2320 = vst.msk [vmem:[%s198 + $0x18] sm:$0xff] %vm2316, %v2299
      %2321 = vst.msk [vmem:[%s198 + $0x20] sm:$0xff] %vm2316, %v2301
      %2322 = vst.msk [vmem:[%s198 + $0x28] sm:$0xff] %vm2316, %v2303
      %2323 = vst.msk [vmem:[%s198 + $0x30] sm:$0xff] %vm2316, %v2305
      %2324 = vst.msk [vmem:[%s198 + $0x38] sm:$0xff] %vm2316, %v2307
      %s2325 = scalar_lea.vmem %s191, 1
      %v2326 = vld [vmem:[%s2325] sm:$0x1]
      %2327 = vrot.lane.b32.xlu0 %v2326, 3
      %v2328 = vpop.permute.xlu0 %2327
      %v2329 = vsel %vm245, %v2328, 0.0
      %v2330 = vld [vmem:[%s1] sm:$0xf]
      %v2331 = vunpack.c.l.bf16 %v2330
      %2333 = vset.pattern.permute.xlu0 0
      %2334 = vperm.xlu0 %2333, %v2331
      %v2335 = vpop.permute.xlu0 %2334
      %v2337 = vlaneseq
      %v2338 = vshrl.u32 %v2337, 7
      %v2339 = vsub.s32 0, %v2338
      %v2340 = vrot.slane %v2329, %v2339
      %v2341 = vmul.f32 %v2335, %v2340
      %2342 = vrot.lane.b32.xlu0 %v2326, 2
      %v2343 = vpop.permute.xlu0 %2342
      %v2344 = vsel %vm261, %v2343, 0.0
      %v2345 = vld [vmem:[%s1 + $0x4] sm:$0xf]
      %v2346 = vunpack.c.l.bf16 %v2345
      %2348 = vset.pattern.permute.xlu0 0
      %2349 = vperm.xlu0 %2348, %v2346
      %v2350 = vpop.permute.xlu0 %2349
      %v2352 = vlaneseq
      %v2353 = vshrl.u32 %v2352, 7
      %v2354 = vsub.s32 0, %v2353
      %v2355 = vrot.slane %v2344, %v2354
      %v2356 = vmul.f32 %v2350, %v2355
      %v2357 = vadd.f32 %v2341, %v2356
      %2358 = vrot.lane.b32.xlu0 %v2326, 1
      %v2359 = vpop.permute.xlu0 %2358
      %v2360 = vsel %vm278, %v2359, 0.0
      %v2361 = vld [vmem:[%s1 + $0x8] sm:$0xf]
      %v2362 = vunpack.c.l.bf16 %v2361
      %2364 = vset.pattern.permute.xlu0 0
      %2365 = vperm.xlu0 %2364, %v2362
      %v2366 = vpop.permute.xlu0 %2365
      %v2368 = vlaneseq
      %v2369 = vshrl.u32 %v2368, 7
      %v2370 = vsub.s32 0, %v2369
      %v2371 = vrot.slane %v2360, %v2370
      %v2372 = vmul.f32 %v2366, %v2371
      %v2373 = vadd.f32 %v2357, %v2372
      %v2374 = vld [vmem:[%s1 + $0xc] sm:$0xf]
      %v2375 = vunpack.c.l.bf16 %v2374
      %2377 = vset.pattern.permute.xlu0 0
      %2378 = vperm.xlu0 %2377, %v2375
      %v2379 = vpop.permute.xlu0 %2378
      %v2382 = vlaneseq
      %v2383 = vshrl.u32 %v2382, 7
      %v2384 = vsub.s32 0, %v2383
      %v2385 = vrot.slane %v2326, %v2384
      %v2387 = vmul.f32 %v2379, %v2385
      %v2388 = vadd.f32 %v2373, %v2387
      %2389 = vrot.lane.b32.xlu0 %v2326, 127
      %v2390 = vpop.permute.xlu0 %2389
      %v2391 = vsel %vm310, %v2390, 0.0
      %v2392 = vld [vmem:[%s1 + $0x10] sm:$0xf]
      %v2393 = vunpack.c.l.bf16 %v2392
      %2395 = vset.pattern.permute.xlu0 0
      %2396 = vperm.xlu0 %2395, %v2393
      %v2397 = vpop.permute.xlu0 %2396
      %v2399 = vlaneseq
      %v2400 = vshrl.u32 %v2399, 7
      %v2401 = vsub.s32 0, %v2400
      %v2402 = vrot.slane %v2391, %v2401
      %v2403 = vmul.f32 %v2397, %v2402
      %v2404 = vadd.f32 %v2388, %v2403
      %2405 = vrot.lane.b32.xlu0 %v2326, 126
      %v2406 = vpop.permute.xlu0 %2405
      %v2407 = vsel %vm327, %v2406, 0.0
      %v2408 = vld [vmem:[%s1 + $0x14] sm:$0xf]
      %v2409 = vunpack.c.l.bf16 %v2408
      %2411 = vset.pattern.permute.xlu0 0
      %2412 = vperm.xlu0 %2411, %v2409
      %v2413 = vpop.permute.xlu0 %2412
      %v2415 = vlaneseq
      %v2416 = vshrl.u32 %v2415, 7
      %v2417 = vsub.s32 0, %v2416
      %v2418 = vrot.slane %v2407, %v2417
      %v2419 = vmul.f32 %v2413, %v2418
      %v2420 = vadd.f32 %v2404, %v2419
      %2421 = vrot.lane.b32.xlu0 %v2326, 125
      %v2422 = vpop.permute.xlu0 %2421
      %v2423 = vsel %vm344, %v2422, 0.0
      %v2424 = vld [vmem:[%s1 + $0x18] sm:$0xf]
      %v2425 = vunpack.c.l.bf16 %v2424
      %2427 = vset.pattern.permute.xlu0 0
      %2428 = vperm.xlu0 %2427, %v2425
      %v2429 = vpop.permute.xlu0 %2428
      %v2431 = vlaneseq
      %v2432 = vshrl.u32 %v2431, 7
      %v2433 = vsub.s32 0, %v2432
      %v2434 = vrot.slane %v2423, %v2433
      %v2435 = vmul.f32 %v2429, %v2434
      %v2436 = vadd.f32 %v2420, %v2435
      %v2437 = vld [vmem:[%s2] sm:$0xff]
      %2439 = vset.pattern.permute.xlu0 0
      %2440 = vperm.xlu0 %2439, %v2437
      %v2441 = vpop.permute.xlu0 %2440
      %v2443 = vadd.f32 %v2436, %v2441
      %v2444 = vmax.f32 %v2443, 0.0
      %2445 = vrot.lane.b32.xlu0 %v2444, 127
      %v2446 = vpop.permute.xlu0 %2445
      %v2447 = vmax.f32 %v2444, %v2446
      %2448 = vmatprep.subr.mxu0 0.0
      %2449 = vmatpush1.msra.mxu0 %v202
      %2450 = vmatprep.subr.mxu0 0.0
      %2451 = vmatpush1.msra.mxu0 %v203
      %2452 = vmatprep.subr.mxu0 0.0
      %2453 = vmatpush1.msra.mxu0 %v204
      %2454 = vmatprep.subr.mxu0 0.0
      %2455 = vmatpush1.msra.mxu0 %v205
      %2456 = vmatprep.subr.mxu0 0.0
      %2457 = vmatpush1.msra.mxu0 %v206
      %2458 = vmatprep.subr.mxu0 0.0
      %2459 = vmatpush1.msra.mxu0 %v207
      %2460 = vmatprep.subr.mxu0 0.0
      %2461 = vmatpush1.msra.mxu0 %v208
      %2462 = vmatprep.subr.mxu0 0.0
      %2463 = vmatpush1.msra.mxu0 %v209
      %2464 = vmatprep.subr.mxu0 0.0
      %2465 = vmatpush1.msra.mxu0 %v210
      %2466 = vmatprep.subr.mxu0 0.0
      %2467 = vmatpush1.msra.mxu0 %v211
      %2468 = vmatprep.subr.mxu0 0.0
      %2469 = vmatpush1.msra.mxu0 %v212
      %2470 = vmatprep.subr.mxu0 0.0
      %2471 = vmatpush1.msra.mxu0 %v213
      %2472 = vmatprep.subr.mxu0 0.0
      %2473 = vmatpush1.msra.mxu0 %v214
      %2474 = vmatprep.subr.mxu0 0.0
      %2475 = vmatpush1.msra.mxu0 %v215
      %2476 = vmatprep.subr.mxu0 0.0
      %2477 = vmatpush1.msra.mxu0 %v216
      %2478 = vmatprep.subr.mxu0 0.0
      %2479 = vmatpush1.msra.mxu0 %v217
      %2480 = vmatprep.subr.mxu0 0.0
      %2481 = vmatpush1.msra.mxu0 0.0
      %2482 = vmatprep.subr.mxu0 0.0
      %2483 = vmatpush1.msra.mxu0 0.0
      %2484 = vmatprep.subr.mxu0 0.0
      %2485 = vmatpush1.msra.mxu0 0.0
      %2486 = vmatprep.subr.mxu0 0.0
      %2487 = vmatpush1.msra.mxu0 0.0
      %2488 = vmatprep.subr.mxu0 0.0
      %2489 = vmatpush1.msra.mxu0 0.0
      %2490 = vmatprep.subr.mxu0 0.0
      %2491 = vmatpush1.msra.mxu0 0.0
      %2492 = vmatprep.subr.mxu0 0.0
      %2493 = vmatpush1.msra.mxu0 0.0
      %2494 = vmatprep.subr.mxu0 0.0
      %2495 = vmatpush1.msra.mxu0 0.0
      %2496 = vmatprep.subr.mxu0 0.0
      %2497 = vmatpush1.msra.mxu0 0.0
      %2498 = vmatprep.subr.mxu0 0.0
      %2499 = vmatpush1.msra.mxu0 0.0
      %2500 = vmatprep.subr.mxu0 0.0
      %2501 = vmatpush1.msra.mxu0 0.0
      %2502 = vmatprep.subr.mxu0 0.0
      %2503 = vmatpush1.msra.mxu0 0.0
      %2504 = vmatprep.subr.mxu0 0.0
      %2505 = vmatpush1.msra.mxu0 0.0
      %2506 = vmatprep.subr.mxu0 0.0
      %2507 = vmatpush1.msra.mxu0 0.0
      %2508 = vmatprep.subr.mxu0 0.0
      %2509 = vmatpush1.msra.mxu0 0.0
      %2510 = vmatprep.subr.mxu0 0.0
      %2511 = vmatpush1.msra.mxu0 0.0
      %2512 = vmatprep.mubr.f32.mxu0 0.0
      %2513 = vmatmul.mubr.f32.gmra.mrb[0].mxu0 %v2447
      %v2514 = vpop.f32.mrb[0].mxu0
      %v2515 = vadd.f32 0.0, %v2514
      %v2516 = vpop.f32.mrb[0].mxu0
      %2517 = vdwg.mxu0
      %2518 = vrot.lane.b32.xlu0 %v2515, 2
      %v2519 = vpop.permute.xlu0 %2518
      %v2520 = vsel %vm443, %v2519, 0.0
      %v2521 = vld [vmem:[%s1 + $0x1c] sm:$0xf]
      %v2522 = vld [vmem:[%s1 + $0x20] sm:$0xf]
      %v2523 = vunpack.c.l.bf16 %v2521
      %v2524 = vunpack.c.l.bf16 %v2522
      %2525 = vrot.lane.b32.xlu0 %v2515, 1
      %v2526 = vpop.permute.xlu0 %2525
      %v2527 = vsel %vm452, %v2526, 0.0
      %v2528 = vld [vmem:[%s1 + $0x24] sm:$0xf]
      %v2529 = vld [vmem:[%s1 + $0x28] sm:$0xf]
      %v2530 = vunpack.c.l.bf16 %v2528
      %v2531 = vunpack.c.l.bf16 %v2529
      %v2533 = vsel %vm458, %v2530, 0
      %v2536 = vsel %vm458, %v2531, 0
      %2538 = vmatprep.subr.mxu0 0.0
      %2539 = vmatpush1.msra.mxu0 %v2527
      %2540 = vmatprep.subr.mxu0 0.0
      %2541 = vmatpush1.msra.mxu0 0.0
      %2542 = vmatprep.subr.mxu0 0.0
      %2543 = vmatpush1.msra.mxu0 0.0
      %2544 = vmatprep.subr.mxu0 0.0
      %2545 = vmatpush1.msra.mxu0 0.0
      %2546 = vmatprep.subr.mxu0 0.0
      %2547 = vmatpush1.msra.mxu0 0.0
      %2548 = vmatprep.subr.mxu0 0.0
      %2549 = vmatpush1.msra.mxu0 0.0
      %2550 = vmatprep.subr.mxu0 0.0
      %2551 = vmatpush1.msra.mxu0 0.0
      %2552 = vmatprep.subr.mxu0 0.0
      %2553 = vmatpush1.msra.mxu0 0.0
      %2554 = vmatprep.subr.mxu0 0.0
      %2555 = vmatpush1.msra.mxu0 0.0
      %2556 = vmatprep.subr.mxu0 0.0
      %2557 = vmatpush1.msra.mxu0 0.0
      %2558 = vmatprep.subr.mxu0 0.0
      %2559 = vmatpush1.msra.mxu0 0.0
      %2560 = vmatprep.subr.mxu0 0.0
      %2561 = vmatpush1.msra.mxu0 0.0
      %2562 = vmatprep.subr.mxu0 0.0
      %2563 = vmatpush1.msra.mxu0 0.0
      %2564 = vmatprep.subr.mxu0 0.0
      %2565 = vmatpush1.msra.mxu0 0.0
      %2566 = vmatprep.subr.mxu0 0.0
      %2567 = vmatpush1.msra.mxu0 0.0
      %2568 = vmatprep.subr.mxu0 0.0
      %2569 = vmatpush1.msra.mxu0 0.0
      %2570 = vmatprep.subr.mxu0 0.0
      %2571 = vmatpush1.msra.mxu0 0.0
      %2572 = vmatprep.subr.mxu0 0.0
      %2573 = vmatpush1.msra.mxu0 0.0
      %2574 = vmatprep.subr.mxu0 0.0
      %2575 = vmatpush1.msra.mxu0 0.0
      %2576 = vmatprep.subr.mxu0 0.0
      %2577 = vmatpush1.msra.mxu0 0.0
      %2578 = vmatprep.subr.mxu0 0.0
      %2579 = vmatpush1.msra.mxu0 0.0
      %2580 = vmatprep.subr.mxu0 0.0
      %2581 = vmatpush1.msra.mxu0 0.0
      %2582 = vmatprep.subr.mxu0 0.0
      %2583 = vmatpush1.msra.mxu0 0.0
      %2584 = vmatprep.subr.mxu0 0.0
      %2585 = vmatpush1.msra.mxu0 0.0
      %2586 = vmatprep.subr.mxu0 0.0
      %2587 = vmatpush1.msra.mxu0 0.0
      %2588 = vmatprep.subr.mxu0 0.0
      %2589 = vmatpush1.msra.mxu0 0.0
      %2590 = vmatprep.subr.mxu0 0.0
      %2591 = vmatpush1.msra.mxu0 0.0
      %2592 = vmatprep.subr.mxu0 0.0
      %2593 = vmatpush1.msra.mxu0 0.0
      %2594 = vmatprep.subr.mxu0 0.0
      %2595 = vmatpush1.msra.mxu0 0.0
      %2596 = vmatprep.subr.mxu0 0.0
      %2597 = vmatpush1.msra.mxu0 0.0
      %2598 = vmatprep.subr.mxu0 0.0
      %2599 = vmatpush1.msra.mxu0 0.0
      %2600 = vmatprep.subr.mxu0 0.0
      %2601 = vmatpush1.msra.mxu0 0.0
      %2602 = vmatprep.mubr.f32.mxu0 0.0
      %2603 = vmatmul.mubr.f32.gmra.mrb[0].mxu0 %v2533
      %v2604 = vpop.f32.mrb[0].mxu0
      %v2605 = vadd.f32 0.0, %v2604
      %v2606 = vpop.f32.mrb[0].mxu0
      %2607 = vmatprep.mubr.f32.mxu0 0.0
      %2608 = vmatmul.mubr.f32.gmra.mrb[0].mxu0 %v2536
      %v2609 = vpop.f32.mrb[0].mxu0
      %v2610 = vadd.f32 0.0, %v2609
      %v2611 = vpop.f32.mrb[0].mxu0
      %2612 = vdwg.mxu0
      %v2614 = vsel %vm458, %v2523, 0
      %v2617 = vsel %vm458, %v2524, 0
      %2619 = vmatprep.subr.mxu0 0.0
      %2620 = vmatpush1.msra.mxu0 %v2520
      %2621 = vmatprep.subr.mxu0 0.0
      %2622 = vmatpush1.msra.mxu0 0.0
      %2623 = vmatprep.subr.mxu0 0.0
      %2624 = vmatpush1.msra.mxu0 0.0
      %2625 = vmatprep.subr.mxu0 0.0
      %2626 = vmatpush1.msra.mxu0 0.0
      %2627 = vmatprep.subr.mxu0 0.0
      %2628 = vmatpush1.msra.mxu0 0.0
      %2629 = vmatprep.subr.mxu0 0.0
      %2630 = vmatpush1.msra.mxu0 0.0
      %2631 = vmatprep.subr.mxu0 0.0
      %2632 = vmatpush1.msra.mxu0 0.0
      %2633 = vmatprep.subr.mxu0 0.0
      %2634 = vmatpush1.msra.mxu0 0.0
      %2635 = vmatprep.subr.mxu0 0.0
      %2636 = vmatpush1.msra.mxu0 0.0
      %2637 = vmatprep.subr.mxu0 0.0
      %2638 = vmatpush1.msra.mxu0 0.0
      %2639 = vmatprep.subr.mxu0 0.0
      %2640 = vmatpush1.msra.mxu0 0.0
      %2641 = vmatprep.subr.mxu0 0.0
      %2642 = vmatpush1.msra.mxu0 0.0
      %2643 = vmatprep.subr.mxu0 0.0
      %2644 = vmatpush1.msra.mxu0 0.0
      %2645 = vmatprep.subr.mxu0 0.0
      %2646 = vmatpush1.msra.mxu0 0.0
      %2647 = vmatprep.subr.mxu0 0.0
      %2648 = vmatpush1.msra.mxu0 0.0
      %2649 = vmatprep.subr.mxu0 0.0
      %2650 = vmatpush1.msra.mxu0 0.0
      %2651 = vmatprep.subr.mxu0 0.0
      %2652 = vmatpush1.msra.mxu0 0.0
      %2653 = vmatprep.subr.mxu0 0.0
      %2654 = vmatpush1.msra.mxu0 0.0
      %2655 = vmatprep.subr.mxu0 0.0
      %2656 = vmatpush1.msra.mxu0 0.0
      %2657 = vmatprep.subr.mxu0 0.0
      %2658 = vmatpush1.msra.mxu0 0.0
      %2659 = vmatprep.subr.mxu0 0.0
      %2660 = vmatpush1.msra.mxu0 0.0
      %2661 = vmatprep.subr.mxu0 0.0
      %2662 = vmatpush1.msra.mxu0 0.0
      %2663 = vmatprep.subr.mxu0 0.0
      %2664 = vmatpush1.msra.mxu0 0.0
      %2665 = vmatprep.subr.mxu0 0.0
      %2666 = vmatpush1.msra.mxu0 0.0
      %2667 = vmatprep.subr.mxu0 0.0
      %2668 = vmatpush1.msra.mxu0 0.0
      %2669 = vmatprep.subr.mxu0 0.0
      %2670 = vmatpush1.msra.mxu0 0.0
      %2671 = vmatprep.subr.mxu0 0.0
      %2672 = vmatpush1.msra.mxu0 0.0
      %2673 = vmatprep.subr.mxu0 0.0
      %2674 = vmatpush1.msra.mxu0 0.0
      %2675 = vmatprep.subr.mxu0 0.0
      %2676 = vmatpush1.msra.mxu0 0.0
      %2677 = vmatprep.subr.mxu0 0.0
      %2678 = vmatpush1.msra.mxu0 0.0
      %2679 = vmatprep.subr.mxu0 0.0
      %2680 = vmatpush1.msra.mxu0 0.0
      %2681 = vmatprep.subr.mxu0 0.0
      %2682 = vmatpush1.msra.mxu0 0.0
      %2683 = vmatprep.mubr.f32.mxu0 0.0
      %2684 = vmatmul.mubr.f32.gmra.mrb[0].mxu0 %v2614
      %v2685 = vpop.f32.mrb[0].mxu0
      %v2686 = vadd.f32 %v2605, %v2685
      %v2687 = vpop.f32.mrb[0].mxu0
      %2688 = vmatprep.mubr.f32.mxu0 0.0
      %2689 = vmatmul.mubr.f32.gmra.mrb[0].mxu0 %v2617
      %v2690 = vpop.f32.mrb[0].mxu0
      %v2691 = vadd.f32 %v2610, %v2690
      %v2692 = vpop.f32.mrb[0].mxu0
      %2693 = vdwg.mxu0
      %v2694 = vld [vmem:[%s1 + $0x2c] sm:$0xf]
      %v2695 = vld [vmem:[%s1 + $0x30] sm:$0xf]
      %v2696 = vunpack.c.l.bf16 %v2694
      %v2697 = vunpack.c.l.bf16 %v2695
      %v2699 = vsel %vm458, %v2696, 0
      %v2702 = vsel %vm458, %v2697, 0
      %2704 = vmatprep.subr.mxu0 0.0
      %2705 = vmatpush1.msra.mxu0 %v2515
      %2706 = vmatprep.subr.mxu0 0.0
      %2707 = vmatpush1.msra.mxu0 0.0
      %2708 = vmatprep.subr.mxu0 0.0
      %2709 = vmatpush1.msra.mxu0 0.0
      %2710 = vmatprep.subr.mxu0 0.0
      %2711 = vmatpush1.msra.mxu0 0.0
      %2712 = vmatprep.subr.mxu0 0.0
      %2713 = vmatpush1.msra.mxu0 0.0
      %2714 = vmatprep.subr.mxu0 0.0
      %2715 = vmatpush1.msra.mxu0 0.0
      %2716 = vmatprep.subr.mxu0 0.0
      %2717 = vmatpush1.msra.mxu0 0.0
      %2718 = vmatprep.subr.mxu0 0.0
      %2719 = vmatpush1.msra.mxu0 0.0
      %2720 = vmatprep.subr.mxu0 0.0
      %2721 = vmatpush1.msra.mxu0 0.0
      %2722 = vmatprep.subr.mxu0 0.0
      %2723 = vmatpush1.msra.mxu0 0.0
      %2724 = vmatprep.subr.mxu0 0.0
      %2725 = vmatpush1.msra.mxu0 0.0
      %2726 = vmatprep.subr.mxu0 0.0
      %2727 = vmatpush1.msra.mxu0 0.0
      %2728 = vmatprep.subr.mxu0 0.0
      %2729 = vmatpush1.msra.mxu0 0.0
      %2730 = vmatprep.subr.mxu0 0.0
      %2731 = vmatpush1.msra.mxu0 0.0
      %2732 = vmatprep.subr.mxu0 0.0
      %2733 = vmatpush1.msra.mxu0 0.0
      %2734 = vmatprep.subr.mxu0 0.0
      %2735 = vmatpush1.msra.mxu0 0.0
      %2736 = vmatprep.subr.mxu0 0.0
      %2737 = vmatpush1.msra.mxu0 0.0
      %2738 = vmatprep.subr.mxu0 0.0
      %2739 = vmatpush1.msra.mxu0 0.0
      %2740 = vmatprep.subr.mxu0 0.0
      %2741 = vmatpush1.msra.mxu0 0.0
      %2742 = vmatprep.subr.mxu0 0.0
      %2743 = vmatpush1.msra.mxu0 0.0
      %2744 = vmatprep.subr.mxu0 0.0
      %2745 = vmatpush1.msra.mxu0 0.0
      %2746 = vmatprep.subr.mxu0 0.0
      %2747 = vmatpush1.msra.mxu0 0.0
      %2748 = vmatprep.subr.mxu0 0.0
      %2749 = vmatpush1.msra.mxu0 0.0
      %2750 = vmatprep.subr.mxu0 0.0
      %2751 = vmatpush1.msra.mxu0 0.0
      %2752 = vmatprep.subr.mxu0 0.0
      %2753 = vmatpush1.msra.mxu0 0.0
      %2754 = vmatprep.subr.mxu0 0.0
      %2755 = vmatpush1.msra.mxu0 0.0
      %2756 = vmatprep.subr.mxu0 0.0
      %2757 = vmatpush1.msra.mxu0 0.0
      %2758 = vmatprep.subr.mxu0 0.0
      %2759 = vmatpush1.msra.mxu0 0.0
      %2760 = vmatprep.subr.mxu0 0.0
      %2761 = vmatpush1.msra.mxu0 0.0
      %2762 = vmatprep.subr.mxu0 0.0
      %2763 = vmatpush1.msra.mxu0 0.0
      %2764 = vmatprep.subr.mxu0 0.0
      %2765 = vmatpush1.msra.mxu0 0.0
      %2766 = vmatprep.subr.mxu0 0.0
      %2767 = vmatpush1.msra.mxu0 0.0
      %2768 = vmatprep.mubr.f32.mxu0 0.0
      %2769 = vmatmul.mubr.f32.gmra.mrb[0].mxu0 %v2699
      %v2770 = vpop.f32.mrb[0].mxu0
      %v2771 = vadd.f32 0.0, %v2770
      %v2772 = vpop.f32.mrb[0].mxu0
      %2773 = vmatprep.mubr.f32.mxu0 0.0
      %2774 = vmatmul.mubr.f32.gmra.mrb[0].mxu0 %v2702
      %v2775 = vpop.f32.mrb[0].mxu0
      %v2776 = vadd.f32 0.0, %v2775
      %v2777 = vpop.f32.mrb[0].mxu0
      %2778 = vdwg.mxu0
      %v2779 = vadd.f32 %v2686, %v2771
      %v2780 = vadd.f32 %v2691, %v2776
      %2781 = vrot.lane.b32.xlu0 %v2515, 127
      %v2782 = vpop.permute.xlu0 %2781
      %v2783 = vsel %vm712, %v2782, 0.0
      %v2784 = vld [vmem:[%s1 + $0x34] sm:$0xf]
      %v2785 = vld [vmem:[%s1 + $0x38] sm:$0xf]
      %v2786 = vunpack.c.l.bf16 %v2784
      %v2787 = vunpack.c.l.bf16 %v2785
      %v2789 = vsel %vm458, %v2786, 0
      %v2792 = vsel %vm458, %v2787, 0
      %2794 = vmatprep.subr.mxu0 0.0
      %2795 = vmatpush1.msra.mxu0 %v2783
      %2796 = vmatprep.subr.mxu0 0.0
      %2797 = vmatpush1.msra.mxu0 0.0
      %2798 = vmatprep.subr.mxu0 0.0
      %2799 = vmatpush1.msra.mxu0 0.0
      %2800 = vmatprep.subr.mxu0 0.0
      %2801 = vmatpush1.msra.mxu0 0.0
      %2802 = vmatprep.subr.mxu0 0.0
      %2803 = vmatpush1.msra.mxu0 0.0
      %2804 = vmatprep.subr.mxu0 0.0
      %2805 = vmatpush1.msra.mxu0 0.0
      %2806 = vmatprep.subr.mxu0 0.0
      %2807 = vmatpush1.msra.mxu0 0.0
      %2808 = vmatprep.subr.mxu0 0.0
      %2809 = vmatpush1.msra.mxu0 0.0
      %2810 = vmatprep.subr.mxu0 0.0
      %2811 = vmatpush1.msra.mxu0 0.0
      %2812 = vmatprep.subr.mxu0 0.0
      %2813 = vmatpush1.msra.mxu0 0.0
      %2814 = vmatprep.subr.mxu0 0.0
      %2815 = vmatpush1.msra.mxu0 0.0
      %2816 = vmatprep.subr.mxu0 0.0
      %2817 = vmatpush1.msra.mxu0 0.0
      %2818 = vmatprep.subr.mxu0 0.0
      %2819 = vmatpush1.msra.mxu0 0.0
      %2820 = vmatprep.subr.mxu0 0.0
      %2821 = vmatpush1.msra.mxu0 0.0
      %2822 = vmatprep.subr.mxu0 0.0
      %2823 = vmatpush1.msra.mxu0 0.0
      %2824 = vmatprep.subr.mxu0 0.0
      %2825 = vmatpush1.msra.mxu0 0.0
      %2826 = vmatprep.subr.mxu0 0.0
      %2827 = vmatpush1.msra.mxu0 0.0
      %2828 = vmatprep.subr.mxu0 0.0
      %2829 = vmatpush1.msra.mxu0 0.0
      %2830 = vmatprep.subr.mxu0 0.0
      %2831 = vmatpush1.msra.mxu0 0.0
      %2832 = vmatprep.subr.mxu0 0.0
      %2833 = vmatpush1.msra.mxu0 0.0
      %2834 = vmatprep.subr.mxu0 0.0
      %2835 = vmatpush1.msra.mxu0 0.0
      %2836 = vmatprep.subr.mxu0 0.0
      %2837 = vmatpush1.msra.mxu0 0.0
      %2838 = vmatprep.subr.mxu0 0.0
      %2839 = vmatpush1.msra.mxu0 0.0
      %2840 = vmatprep.subr.mxu0 0.0
      %2841 = vmatpush1.msra.mxu0 0.0
      %2842 = vmatprep.subr.mxu0 0.0
      %2843 = vmatpush1.msra.mxu0 0.0
      %2844 = vmatprep.subr.mxu0 0.0
      %2845 = vmatpush1.msra.mxu0 0.0
      %2846 = vmatprep.subr.mxu0 0.0
      %2847 = vmatpush1.msra.mxu0 0.0
      %2848 = vmatprep.subr.mxu0 0.0
      %2849 = vmatpush1.msra.mxu0 0.0
      %2850 = vmatprep.subr.mxu0 0.0
      %2851 = vmatpush1.msra.mxu0 0.0
      %2852 = vmatprep.subr.mxu0 0.0
      %2853 = vmatpush1.msra.mxu0 0.0
      %2854 = vmatprep.subr.mxu0 0.0
      %2855 = vmatpush1.msra.mxu0 0.0
      %2856 = vmatprep.subr.mxu0 0.0
      %2857 = vmatpush1.msra.mxu0 0.0
      %2858 = vmatprep.mubr.f32.mxu0 0.0
      %2859 = vmatmul.mubr.f32.gmra.mrb[0].mxu0 %v2789
      %v2860 = vpop.f32.mrb[0].mxu0
      %v2861 = vadd.f32 0.0, %v2860
      %v2862 = vpop.f32.mrb[0].mxu0
      %2863 = vmatprep.mubr.f32.mxu0 0.0
      %2864 = vmatmul.mubr.f32.gmra.mrb[0].mxu0 %v2792
      %v2865 = vpop.f32.mrb[0].mxu0
      %v2866 = vadd.f32 0.0, %v2865
      %v2867 = vpop.f32.mrb[0].mxu0
      %2868 = vdwg.mxu0
      %v2869 = vadd.f32 %v2779, %v2861
      %v2870 = vadd.f32 %v2780, %v2866
      %2871 = vrot.lane.b32.xlu0 %v2515, 126
      %v2872 = vpop.permute.xlu0 %2871
      %v2873 = vsel %vm805, %v2872, 0.0
      %v2874 = vld [vmem:[%s1 + $0x3c] sm:$0xf]
      %v2875 = vld [vmem:[%s1 + $0x40] sm:$0xf]
      %v2876 = vunpack.c.l.bf16 %v2874
      %v2877 = vunpack.c.l.bf16 %v2875
      %v2879 = vsel %vm458, %v2876, 0
      %v2882 = vsel %vm458, %v2877, 0
      %2884 = vmatprep.subr.mxu0 0.0
      %2885 = vmatpush1.msra.mxu0 %v2873
      %2886 = vmatprep.subr.mxu0 0.0
      %2887 = vmatpush1.msra.mxu0 0.0
      %2888 = vmatprep.subr.mxu0 0.0
      %2889 = vmatpush1.msra.mxu0 0.0
      %2890 = vmatprep.subr.mxu0 0.0
      %2891 = vmatpush1.msra.mxu0 0.0
      %2892 = vmatprep.subr.mxu0 0.0
      %2893 = vmatpush1.msra.mxu0 0.0
      %2894 = vmatprep.subr.mxu0 0.0
      %2895 = vmatpush1.msra.mxu0 0.0
      %2896 = vmatprep.subr.mxu0 0.0
      %2897 = vmatpush1.msra.mxu0 0.0
      %2898 = vmatprep.subr.mxu0 0.0
      %2899 = vmatpush1.msra.mxu0 0.0
      %2900 = vmatprep.subr.mxu0 0.0
      %2901 = vmatpush1.msra.mxu0 0.0
      %2902 = vmatprep.subr.mxu0 0.0
      %2903 = vmatpush1.msra.mxu0 0.0
      %2904 = vmatprep.subr.mxu0 0.0
      %2905 = vmatpush1.msra.mxu0 0.0
      %2906 = vmatprep.subr.mxu0 0.0
      %2907 = vmatpush1.msra.mxu0 0.0
      %2908 = vmatprep.subr.mxu0 0.0
      %2909 = vmatpush1.msra.mxu0 0.0
      %2910 = vmatprep.subr.mxu0 0.0
      %2911 = vmatpush1.msra.mxu0 0.0
      %2912 = vmatprep.subr.mxu0 0.0
      %2913 = vmatpush1.msra.mxu0 0.0
      %2914 = vmatprep.subr.mxu0 0.0
      %2915 = vmatpush1.msra.mxu0 0.0
      %2916 = vmatprep.subr.mxu0 0.0
      %2917 = vmatpush1.msra.mxu0 0.0
      %2918 = vmatprep.subr.mxu0 0.0
      %2919 = vmatpush1.msra.mxu0 0.0
      %2920 = vmatprep.subr.mxu0 0.0
      %2921 = vmatpush1.msra.mxu0 0.0
      %2922 = vmatprep.subr.mxu0 0.0
      %2923 = vmatpush1.msra.mxu0 0.0
      %2924 = vmatprep.subr.mxu0 0.0
      %2925 = vmatpush1.msra.mxu0 0.0
      %2926 = vmatprep.subr.mxu0 0.0
      %2927 = vmatpush1.msra.mxu0 0.0
      %2928 = vmatprep.subr.mxu0 0.0
      %2929 = vmatpush1.msra.mxu0 0.0
      %2930 = vmatprep.subr.mxu0 0.0
      %2931 = vmatpush1.msra.mxu0 0.0
      %2932 = vmatprep.subr.mxu0 0.0
      %2933 = vmatpush1.msra.mxu0 0.0
      %2934 = vmatprep.subr.mxu0 0.0
      %2935 = vmatpush1.msra.mxu0 0.0
      %2936 = vmatprep.subr.mxu0 0.0
      %2937 = vmatpush1.msra.mxu0 0.0
      %2938 = vmatprep.subr.mxu0 0.0
      %2939 = vmatpush1.msra.mxu0 0.0
      %2940 = vmatprep.subr.mxu0 0.0
      %2941 = vmatpush1.msra.mxu0 0.0
      %2942 = vmatprep.subr.mxu0 0.0
      %2943 = vmatpush1.msra.mxu0 0.0
      %2944 = vmatprep.subr.mxu0 0.0
      %2945 = vmatpush1.msra.mxu0 0.0
      %2946 = vmatprep.subr.mxu0 0.0
      %2947 = vmatpush1.msra.mxu0 0.0
      %2948 = vmatprep.mubr.f32.mxu0 0.0
      %2949 = vmatmul.mubr.f32.gmra.mrb[0].mxu0 %v2879
      %v2950 = vpop.f32.mrb[0].mxu0
      %v2951 = vadd.f32 0.0, %v2950
      %v2952 = vpop.f32.mrb[0].mxu0
      %2953 = vmatprep.mubr.f32.mxu0 0.0
      %2954 = vmatmul.mubr.f32.gmra.mrb[0].mxu0 %v2882
      %v2955 = vpop.f32.mrb[0].mxu0
      %v2956 = vadd.f32 0.0, %v2955
      %v2957 = vpop.f32.mrb[0].mxu0
      %2958 = vdwg.mxu0
      %v2959 = vadd.f32 %v2869, %v2951
      %v2960 = vadd.f32 %v2870, %v2956
      %v2961 = vld [vmem:[%s2] sm:$0xff]
      %v2962 = vld [vmem:[%s2 + $0x8] sm:$0xff]
      %2964 = vset.pattern.permute.xlu0 1
      %2965 = vperm.xlu0 %2964, %v2961
      %v2966 = vpop.permute.xlu0 %2965
      %2969 = vset.pattern.permute.xlu0 1
      %2970 = vperm.xlu0 %2969, %v2962
      %v2971 = vpop.permute.xlu0 %2970
      %v2973 = vadd.f32 %v2959, %v2966
      %v2974 = vadd.f32 %v2960, %v2971
      %v2975 = vmax.f32 %v2973, 0.0
      %v2976 = vmax.f32 %v2974, 0.0
      %2977 = vrot.lane.b32.xlu0 %v2975, 127
      %v2978 = vpop.permute.xlu0 %2977
      %2979 = vrot.lane.b32.xlu0 %v2976, 127
      %v2980 = vpop.permute.xlu0 %2979
      %v2981 = vmax.f32 %v2975, %v2978
      %v2982 = vmax.f32 %v2976, %v2980
      %2983 = vmatprep.subr.mxu0 0.0
      %2984 = vmatpush1.msra.mxu0 %v202
      %2985 = vmatprep.subr.mxu0 0.0
      %2986 = vmatpush1.msra.mxu0 %v203
      %2987 = vmatprep.subr.mxu0 0.0
      %2988 = vmatpush1.msra.mxu0 %v204
      %2989 = vmatprep.subr.mxu0 0.0
      %2990 = vmatpush1.msra.mxu0 %v205
      %2991 = vmatprep.subr.mxu0 0.0
      %2992 = vmatpush1.msra.mxu0 %v206
      %2993 = vmatprep.subr.mxu0 0.0
      %2994 = vmatpush1.msra.mxu0 %v207
      %2995 = vmatprep.subr.mxu0 0.0
      %2996 = vmatpush1.msra.mxu0 %v208
      %2997 = vmatprep.subr.mxu0 0.0
      %2998 = vmatpush1.msra.mxu0 %v209
      %2999 = vmatprep.subr.mxu0 0.0
      %3000 = vmatpush1.msra.mxu0 %v210
      %3001 = vmatprep.subr.mxu0 0.0
      %3002 = vmatpush1.msra.mxu0 %v211
      %3003 = vmatprep.subr.mxu0 0.0
      %3004 = vmatpush1.msra.mxu0 %v212
      %3005 = vmatprep.subr.mxu0 0.0
      %3006 = vmatpush1.msra.mxu0 %v213
      %3007 = vmatprep.subr.mxu0 0.0
      %3008 = vmatpush1.msra.mxu0 %v214
      %3009 = vmatprep.subr.mxu0 0.0
      %3010 = vmatpush1.msra.mxu0 %v215
      %3011 = vmatprep.subr.mxu0 0.0
      %3012 = vmatpush1.msra.mxu0 %v216
      %3013 = vmatprep.subr.mxu0 0.0
      %3014 = vmatpush1.msra.mxu0 %v217
      %3015 = vmatprep.subr.mxu0 0.0
      %3016 = vmatpush1.msra.mxu0 0.0
      %3017 = vmatprep.subr.mxu0 0.0
      %3018 = vmatpush1.msra.mxu0 0.0
      %3019 = vmatprep.subr.mxu0 0.0
      %3020 = vmatpush1.msra.mxu0 0.0
      %3021 = vmatprep.subr.mxu0 0.0
      %3022 = vmatpush1.msra.mxu0 0.0
      %3023 = vmatprep.subr.mxu0 0.0
      %3024 = vmatpush1.msra.mxu0 0.0
      %3025 = vmatprep.subr.mxu0 0.0
      %3026 = vmatpush1.msra.mxu0 0.0
      %3027 = vmatprep.subr.mxu0 0.0
      %3028 = vmatpush1.msra.mxu0 0.0
      %3029 = vmatprep.subr.mxu0 0.0
      %3030 = vmatpush1.msra.mxu0 0.0
      %3031 = vmatprep.subr.mxu0 0.0
      %3032 = vmatpush1.msra.mxu0 0.0
      %3033 = vmatprep.subr.mxu0 0.0
      %3034 = vmatpush1.msra.mxu0 0.0
      %3035 = vmatprep.subr.mxu0 0.0
      %3036 = vmatpush1.msra.mxu0 0.0
      %3037 = vmatprep.subr.mxu0 0.0
      %3038 = vmatpush1.msra.mxu0 0.0
      %3039 = vmatprep.subr.mxu0 0.0
      %3040 = vmatpush1.msra.mxu0 0.0
      %3041 = vmatprep.subr.mxu0 0.0
      %3042 = vmatpush1.msra.mxu0 0.0
      %3043 = vmatprep.subr.mxu0 0.0
      %3044 = vmatpush1.msra.mxu0 0.0
      %3045 = vmatprep.subr.mxu0 0.0
      %3046 = vmatpush1.msra.mxu0 0.0
      %3047 = vmatprep.mubr.f32.mxu0 0.0
      %3048 = vmatmul.mubr.f32.gmra.mrb[0].mxu0 %v2981
      %v3049 = vpop.f32.mrb[0].mxu0
      %v3050 = vadd.f32 0.0, %v3049
      %v3051 = vpop.f32.mrb[0].mxu0
      %3052 = vmatprep.mubr.f32.mxu0 0.0
      %3053 = vmatmul.mubr.f32.gmra.mrb[0].mxu0 %v2982
      %v3054 = vpop.f32.mrb[0].mxu0
      %v3055 = vadd.f32 0.0, %v3054
      %v3056 = vpop.f32.mrb[0].mxu0
      %3057 = vdwg.mxu0
      %3058 = vrot.lane.b32.xlu0 %v3050, 1
      %v3059 = vpop.permute.xlu0 %3058
      %3060 = vrot.lane.b32.xlu0 %v3055, 1
      %v3061 = vpop.permute.xlu0 %3060
      %v3062 = vsel %vm452, %v3059, 0.0
      %v3063 = vsel %vm452, %v3061, 0.0
      %v3064 = vld [vmem:[%s1 + $0x44] sm:$0xf]
      %v3065 = vld [vmem:[%s1 + $0x48] sm:$0xf]
      %v3066 = vld [vmem:[%s1 + $0x4c] sm:$0xf]
      %v3067 = vld [vmem:[%s1 + $0x50] sm:$0xf]
      %v3068 = vunpack.c.l.bf16 %v3064
      %v3069 = vunpack.c.l.bf16 %v3065
      %v3070 = vunpack.c.l.bf16 %v3066
      %v3071 = vunpack.c.l.bf16 %v3067
      %v3072 = vld [vmem:[%s1 + $0x54] sm:$0xf]
      %v3073 = vld [vmem:[%s1 + $0x58] sm:$0xf]
      %v3074 = vld [vmem:[%s1 + $0x5c] sm:$0xf]
      %v3075 = vld [vmem:[%s1 + $0x60] sm:$0xf]
      %v3076 = vunpack.c.l.bf16 %v3072
      %v3077 = vunpack.c.l.bf16 %v3073
      %v3078 = vunpack.c.l.bf16 %v3074
      %v3079 = vunpack.c.l.bf16 %v3075
      %v3081 = vsel %vm1013, %v3076, 0
      %v3084 = vsel %vm1013, %v3077, 0
      %v3087 = vsel %vm1013, %v3078, 0
      %v3090 = vsel %vm1013, %v3079, 0
      %3092 = vmatprep.subr.mxu0 0.0
      %3093 = vmatpush1.msra.mxu0 %v3050
      %3094 = vmatprep.subr.mxu0 0.0
      %3095 = vmatpush1.msra.mxu0 %v3055
      %3096 = vmatprep.subr.mxu0 0.0
      %3097 = vmatpush1.msra.mxu0 0.0
      %3098 = vmatprep.subr.mxu0 0.0
      %3099 = vmatpush1.msra.mxu0 0.0
      %3100 = vmatprep.subr.mxu0 0.0
      %3101 = vmatpush1.msra.mxu0 0.0
      %3102 = vmatprep.subr.mxu0 0.0
      %3103 = vmatpush1.msra.mxu0 0.0
      %3104 = vmatprep.subr.mxu0 0.0
      %3105 = vmatpush1.msra.mxu0 0.0
      %3106 = vmatprep.subr.mxu0 0.0
      %3107 = vmatpush1.msra.mxu0 0.0
      %3108 = vmatprep.subr.mxu0 0.0
      %3109 = vmatpush1.msra.mxu0 0.0
      %3110 = vmatprep.subr.mxu0 0.0
      %3111 = vmatpush1.msra.mxu0 0.0
      %3112 = vmatprep.subr.mxu0 0.0
      %3113 = vmatpush1.msra.mxu0 0.0
      %3114 = vmatprep.subr.mxu0 0.0
      %3115 = vmatpush1.msra.mxu0 0.0
      %3116 = vmatprep.subr.mxu0 0.0
      %3117 = vmatpush1.msra.mxu0 0.0
      %3118 = vmatprep.subr.mxu0 0.0
      %3119 = vmatpush1.msra.mxu0 0.0
      %3120 = vmatprep.subr.mxu0 0.0
      %3121 = vmatpush1.msra.mxu0 0.0
      %3122 = vmatprep.subr.mxu0 0.0
      %3123 = vmatpush1.msra.mxu0 0.0
      %3124 = vmatprep.subr.mxu0 0.0
      %3125 = vmatpush1.msra.mxu0 0.0
      %3126 = vmatprep.subr.mxu0 0.0
      %3127 = vmatpush1.msra.mxu0 0.0
      %3128 = vmatprep.subr.mxu0 0.0
      %3129 = vmatpush1.msra.mxu0 0.0
      %3130 = vmatprep.subr.mxu0 0.0
      %3131 = vmatpush1.msra.mxu0 0.0
      %3132 = vmatprep.subr.mxu0 0.0
      %3133 = vmatpush1.msra.mxu0 0.0
      %3134 = vmatprep.subr.mxu0 0.0
      %3135 = vmatpush1.msra.mxu0 0.0
      %3136 = vmatprep.subr.mxu0 0.0
      %3137 = vmatpush1.msra.mxu0 0.0
      %3138 = vmatprep.subr.mxu0 0.0
      %3139 = vmatpush1.msra.mxu0 0.0
      %3140 = vmatprep.subr.mxu0 0.0
      %3141 = vmatpush1.msra.mxu0 0.0
      %3142 = vmatprep.subr.mxu0 0.0
      %3143 = vmatpush1.msra.mxu0 0.0
      %3144 = vmatprep.subr.mxu0 0.0
      %3145 = vmatpush1.msra.mxu0 0.0
      %3146 = vmatprep.subr.mxu0 0.0
      %3147 = vmatpush1.msra.mxu0 0.0
      %3148 = vmatprep.subr.mxu0 0.0
      %3149 = vmatpush1.msra.mxu0 0.0
      %3150 = vmatprep.subr.mxu0 0.0
      %3151 = vmatpush1.msra.mxu0 0.0
      %3152 = vmatprep.subr.mxu0 0.0
      %3153 = vmatpush1.msra.mxu0 0.0
      %3154 = vmatprep.subr.mxu0 0.0
      %3155 = vmatpush1.msra.mxu0 0.0
      %3156 = vmatprep.mubr.f32.mxu0 0.0
      %3157 = vmatmul.mubr.f32.gmra.mrb[0].mxu0 %v3081
      %v3158 = vpop.f32.mrb[0].mxu0
      %v3159 = vadd.f32 0.0, %v3158
      %v3160 = vpop.f32.mrb[0].mxu0
      %3161 = vmatprep.mubr.f32.mxu0 0.0
      %3162 = vmatmul.mubr.f32.gmra.mrb[0].mxu0 %v3084
      %v3163 = vpop.f32.mrb[0].mxu0
      %v3164 = vadd.f32 0.0, %v3163
      %v3165 = vpop.f32.mrb[0].mxu0
      %3166 = vmatprep.mubr.f32.mxu0 0.0
      %3167 = vmatmul.mubr.f32.gmra.mrb[0].mxu0 %v3087
      %v3168 = vpop.f32.mrb[0].mxu0
      %v3169 = vadd.f32 0.0, %v3168
      %v3170 = vpop.f32.mrb[0].mxu0
      %3171 = vmatprep.mubr.f32.mxu0 0.0
      %3172 = vmatmul.mubr.f32.gmra.mrb[0].mxu0 %v3090
      %v3173 = vpop.f32.mrb[0].mxu0
      %v3174 = vadd.f32 0.0, %v3173
      %v3175 = vpop.f32.mrb[0].mxu0
      %3176 = vdwg.mxu0
      %v3178 = vsel %vm1013, %v3068, 0
      %v3181 = vsel %vm1013, %v3069, 0
      %v3184 = vsel %vm1013, %v3070, 0
      %v3187 = vsel %vm1013, %v3071, 0
      %3189 = vmatprep.subr.mxu0 0.0
      %3190 = vmatpush1.msra.mxu0 %v3062
      %3191 = vmatprep.subr.mxu0 0.0
      %3192 = vmatpush1.msra.mxu0 %v3063
      %3193 = vmatprep.subr.mxu0 0.0
      %3194 = vmatpush1.msra.mxu0 0.0
      %3195 = vmatprep.subr.mxu0 0.0
      %3196 = vmatpush1.msra.mxu0 0.0
      %3197 = vmatprep.subr.mxu0 0.0
      %3198 = vmatpush1.msra.mxu0 0.0
      %3199 = vmatprep.subr.mxu0 0.0
      %3200 = vmatpush1.msra.mxu0 0.0
      %3201 = vmatprep.subr.mxu0 0.0
      %3202 = vmatpush1.msra.mxu0 0.0
      %3203 = vmatprep.subr.mxu0 0.0
      %3204 = vmatpush1.msra.mxu0 0.0
      %3205 = vmatprep.subr.mxu0 0.0
      %3206 = vmatpush1.msra.mxu0 0.0
      %3207 = vmatprep.subr.mxu0 0.0
      %3208 = vmatpush1.msra.mxu0 0.0
      %3209 = vmatprep.subr.mxu0 0.0
      %3210 = vmatpush1.msra.mxu0 0.0
      %3211 = vmatprep.subr.mxu0 0.0
      %3212 = vmatpush1.msra.mxu0 0.0
      %3213 = vmatprep.subr.mxu0 0.0
      %3214 = vmatpush1.msra.mxu0 0.0
      %3215 = vmatprep.subr.mxu0 0.0
      %3216 = vmatpush1.msra.mxu0 0.0
      %3217 = vmatprep.subr.mxu0 0.0
      %3218 = vmatpush1.msra.mxu0 0.0
      %3219 = vmatprep.subr.mxu0 0.0
      %3220 = vmatpush1.msra.mxu0 0.0
      %3221 = vmatprep.subr.mxu0 0.0
      %3222 = vmatpush1.msra.mxu0 0.0
      %3223 = vmatprep.subr.mxu0 0.0
      %3224 = vmatpush1.msra.mxu0 0.0
      %3225 = vmatprep.subr.mxu0 0.0
      %3226 = vmatpush1.msra.mxu0 0.0
      %3227 = vmatprep.subr.mxu0 0.0
      %3228 = vmatpush1.msra.mxu0 0.0
      %3229 = vmatprep.subr.mxu0 0.0
      %3230 = vmatpush1.msra.mxu0 0.0
      %3231 = vmatprep.subr.mxu0 0.0
      %3232 = vmatpush1.msra.mxu0 0.0
      %3233 = vmatprep.subr.mxu0 0.0
      %3234 = vmatpush1.msra.mxu0 0.0
      %3235 = vmatprep.subr.mxu0 0.0
      %3236 = vmatpush1.msra.mxu0 0.0
      %3237 = vmatprep.subr.mxu0 0.0
      %3238 = vmatpush1.msra.mxu0 0.0
      %3239 = vmatprep.subr.mxu0 0.0
      %3240 = vmatpush1.msra.mxu0 0.0
      %3241 = vmatprep.subr.mxu0 0.0
      %3242 = vmatpush1.msra.mxu0 0.0
      %3243 = vmatprep.subr.mxu0 0.0
      %3244 = vmatpush1.msra.mxu0 0.0
      %3245 = vmatprep.subr.mxu0 0.0
      %3246 = vmatpush1.msra.mxu0 0.0
      %3247 = vmatprep.subr.mxu0 0.0
      %3248 = vmatpush1.msra.mxu0 0.0
      %3249 = vmatprep.subr.mxu0 0.0
      %3250 = vmatpush1.msra.mxu0 0.0
      %3251 = vmatprep.subr.mxu0 0.0
      %3252 = vmatpush1.msra.mxu0 0.0
      %3253 = vmatprep.mubr.f32.mxu0 0.0
      %3254 = vmatmul.mubr.f32.gmra.mrb[0].mxu0 %v3178
      %v3255 = vpop.f32.mrb[0].mxu0
      %v3256 = vadd.f32 %v3159, %v3255
      %v3257 = vpop.f32.mrb[0].mxu0
      %3258 = vmatprep.mubr.f32.mxu0 0.0
      %3259 = vmatmul.mubr.f32.gmra.mrb[0].mxu0 %v3181
      %v3260 = vpop.f32.mrb[0].mxu0
      %v3261 = vadd.f32 %v3164, %v3260
      %v3262 = vpop.f32.mrb[0].mxu0
      %3263 = vmatprep.mubr.f32.mxu0 0.0
      %3264 = vmatmul.mubr.f32.gmra.mrb[0].mxu0 %v3184
      %v3265 = vpop.f32.mrb[0].mxu0
      %v3266 = vadd.f32 %v3169, %v3265
      %v3267 = vpop.f32.mrb[0].mxu0
      %3268 = vmatprep.mubr.f32.mxu0 0.0
      %3269 = vmatmul.mubr.f32.gmra.mrb[0].mxu0 %v3187
      %v3270 = vpop.f32.mrb[0].mxu0
      %v3271 = vadd.f32 %v3174, %v3270
      %v3272 = vpop.f32.mrb[0].mxu0
      %3273 = vdwg.mxu0
      %3274 = vrot.lane.b32.xlu0 %v3050, 127
      %v3275 = vpop.permute.xlu0 %3274
      %3276 = vrot.lane.b32.xlu0 %v3055, 127
      %v3277 = vpop.permute.xlu0 %3276
      %v3278 = vsel %vm1214, %v3275, 0.0
      %v3279 = vsel %vm1214, %v3277, 0.0
      %v3280 = vld [vmem:[%s1 + $0x64] sm:$0xf]
      %v3281 = vld [vmem:[%s1 + $0x68] sm:$0xf]
      %v3282 = vld [vmem:[%s1 + $0x6c] sm:$0xf]
      %v3283 = vld [vmem:[%s1 + $0x70] sm:$0xf]
      %v3284 = vunpack.c.l.bf16 %v3280
      %v3285 = vunpack.c.l.bf16 %v3281
      %v3286 = vunpack.c.l.bf16 %v3282
      %v3287 = vunpack.c.l.bf16 %v3283
      %v3289 = vsel %vm1013, %v3284, 0
      %v3292 = vsel %vm1013, %v3285, 0
      %v3295 = vsel %vm1013, %v3286, 0
      %v3298 = vsel %vm1013, %v3287, 0
      %3300 = vmatprep.subr.mxu0 0.0
      %3301 = vmatpush1.msra.mxu0 %v3278
      %3302 = vmatprep.subr.mxu0 0.0
      %3303 = vmatpush1.msra.mxu0 %v3279
      %3304 = vmatprep.subr.mxu0 0.0
      %3305 = vmatpush1.msra.mxu0 0.0
      %3306 = vmatprep.subr.mxu0 0.0
      %3307 = vmatpush1.msra.mxu0 0.0
      %3308 = vmatprep.subr.mxu0 0.0
      %3309 = vmatpush1.msra.mxu0 0.0
      %3310 = vmatprep.subr.mxu0 0.0
      %3311 = vmatpush1.msra.mxu0 0.0
      %3312 = vmatprep.subr.mxu0 0.0
      %3313 = vmatpush1.msra.mxu0 0.0
      %3314 = vmatprep.subr.mxu0 0.0
      %3315 = vmatpush1.msra.mxu0 0.0
      %3316 = vmatprep.subr.mxu0 0.0
      %3317 = vmatpush1.msra.mxu0 0.0
      %3318 = vmatprep.subr.mxu0 0.0
      %3319 = vmatpush1.msra.mxu0 0.0
      %3320 = vmatprep.subr.mxu0 0.0
      %3321 = vmatpush1.msra.mxu0 0.0
      %3322 = vmatprep.subr.mxu0 0.0
      %3323 = vmatpush1.msra.mxu0 0.0
      %3324 = vmatprep.subr.mxu0 0.0
      %3325 = vmatpush1.msra.mxu0 0.0
      %3326 = vmatprep.subr.mxu0 0.0
      %3327 = vmatpush1.msra.mxu0 0.0
      %3328 = vmatprep.subr.mxu0 0.0
      %3329 = vmatpush1.msra.mxu0 0.0
      %3330 = vmatprep.subr.mxu0 0.0
      %3331 = vmatpush1.msra.mxu0 0.0
      %3332 = vmatprep.subr.mxu0 0.0
      %3333 = vmatpush1.msra.mxu0 0.0
      %3334 = vmatprep.subr.mxu0 0.0
      %3335 = vmatpush1.msra.mxu0 0.0
      %3336 = vmatprep.subr.mxu0 0.0
      %3337 = vmatpush1.msra.mxu0 0.0
      %3338 = vmatprep.subr.mxu0 0.0
      %3339 = vmatpush1.msra.mxu0 0.0
      %3340 = vmatprep.subr.mxu0 0.0
      %3341 = vmatpush1.msra.mxu0 0.0
      %3342 = vmatprep.subr.mxu0 0.0
      %3343 = vmatpush1.msra.mxu0 0.0
      %3344 = vmatprep.subr.mxu0 0.0
      %3345 = vmatpush1.msra.mxu0 0.0
      %3346 = vmatprep.subr.mxu0 0.0
      %3347 = vmatpush1.msra.mxu0 0.0
      %3348 = vmatprep.subr.mxu0 0.0
      %3349 = vmatpush1.msra.mxu0 0.0
      %3350 = vmatprep.subr.mxu0 0.0
      %3351 = vmatpush1.msra.mxu0 0.0
      %3352 = vmatprep.subr.mxu0 0.0
      %3353 = vmatpush1.msra.mxu0 0.0
      %3354 = vmatprep.subr.mxu0 0.0
      %3355 = vmatpush1.msra.mxu0 0.0
      %3356 = vmatprep.subr.mxu0 0.0
      %3357 = vmatpush1.msra.mxu0 0.0
      %3358 = vmatprep.subr.mxu0 0.0
      %3359 = vmatpush1.msra.mxu0 0.0
      %3360 = vmatprep.subr.mxu0 0.0
      %3361 = vmatpush1.msra.mxu0 0.0
      %3362 = vmatprep.subr.mxu0 0.0
      %3363 = vmatpush1.msra.mxu0 0.0
      %3364 = vmatprep.mubr.f32.mxu0 0.0
      %3365 = vmatmul.mubr.f32.gmra.mrb[0].mxu0 %v3289
      %v3366 = vpop.f32.mrb[0].mxu0
      %v3367 = vadd.f32 0.0, %v3366
      %v3368 = vpop.f32.mrb[0].mxu0
      %3369 = vmatprep.mubr.f32.mxu0 0.0
      %3370 = vmatmul.mubr.f32.gmra.mrb[0].mxu0 %v3292
      %v3371 = vpop.f32.mrb[0].mxu0
      %v3372 = vadd.f32 0.0, %v3371
      %v3373 = vpop.f32.mrb[0].mxu0
      %3374 = vmatprep.mubr.f32.mxu0 0.0
      %3375 = vmatmul.mubr.f32.gmra.mrb[0].mxu0 %v3295
      %v3376 = vpop.f32.mrb[0].mxu0
      %v3377 = vadd.f32 0.0, %v3376
      %v3378 = vpop.f32.mrb[0].mxu0
      %3379 = vmatprep.mubr.f32.mxu0 0.0
      %3380 = vmatmul.mubr.f32.gmra.mrb[0].mxu0 %v3298
      %v3381 = vpop.f32.mrb[0].mxu0
      %v3382 = vadd.f32 0.0, %v3381
      %v3383 = vpop.f32.mrb[0].mxu0
      %3384 = vdwg.mxu0
      %v3385 = vadd.f32 %v3256, %v3367
      %v3386 = vadd.f32 %v3261, %v3372
      %v3387 = vadd.f32 %v3266, %v3377
      %v3388 = vadd.f32 %v3271, %v3382
      %v3389 = vld [vmem:[%s2] sm:$0xff]
      %v3390 = vld [vmem:[%s2 + $0x8] sm:$0xff]
      %v3391 = vld [vmem:[%s2 + $0x10] sm:$0xff]
      %v3392 = vld [vmem:[%s2 + $0x18] sm:$0xff]
      %3394 = vset.pattern.permute.xlu0 2
      %3395 = vperm.xlu0 %3394, %v3389
      %v3396 = vpop.permute.xlu0 %3395
      %3399 = vset.pattern.permute.xlu0 2
      %3400 = vperm.xlu0 %3399, %v3390
      %v3401 = vpop.permute.xlu0 %3400
      %3404 = vset.pattern.permute.xlu0 2
      %3405 = vperm.xlu0 %3404, %v3391
      %v3406 = vpop.permute.xlu0 %3405
      %3409 = vset.pattern.permute.xlu0 2
      %3410 = vperm.xlu0 %3409, %v3392
      %v3411 = vpop.permute.xlu0 %3410
      %v3413 = vadd.f32 %v3385, %v3396
      %v3414 = vadd.f32 %v3386, %v3401
      %v3415 = vadd.f32 %v3387, %v3406
      %v3416 = vadd.f32 %v3388, %v3411
      %v3417 = vmax.f32 %v3413, 0.0
      %v3418 = vmax.f32 %v3414, 0.0
      %v3419 = vmax.f32 %v3415, 0.0
      %v3420 = vmax.f32 %v3416, 0.0
      %3421 = vrot.lane.b32.xlu0 %v3417, 127
      %v3422 = vpop.permute.xlu0 %3421
      %3423 = vrot.lane.b32.xlu0 %v3418, 127
      %v3424 = vpop.permute.xlu0 %3423
      %3425 = vrot.lane.b32.xlu0 %v3419, 127
      %v3426 = vpop.permute.xlu0 %3425
      %3427 = vrot.lane.b32.xlu0 %v3420, 127
      %v3428 = vpop.permute.xlu0 %3427
      %v3429 = vmax.f32 %v3417, %v3422
      %v3430 = vmax.f32 %v3418, %v3424
      %v3431 = vmax.f32 %v3419, %v3426
      %v3432 = vmax.f32 %v3420, %v3428
      %3433 = vmatprep.subr.mxu0 0.0
      %3434 = vmatpush1.msra.mxu0 %v202
      %3435 = vmatprep.subr.mxu0 0.0
      %3436 = vmatpush1.msra.mxu0 %v203
      %3437 = vmatprep.subr.mxu0 0.0
      %3438 = vmatpush1.msra.mxu0 %v204
      %3439 = vmatprep.subr.mxu0 0.0
      %3440 = vmatpush1.msra.mxu0 %v205
      %3441 = vmatprep.subr.mxu0 0.0
      %3442 = vmatpush1.msra.mxu0 %v206
      %3443 = vmatprep.subr.mxu0 0.0
      %3444 = vmatpush1.msra.mxu0 %v207
      %3445 = vmatprep.subr.mxu0 0.0
      %3446 = vmatpush1.msra.mxu0 %v208
      %3447 = vmatprep.subr.mxu0 0.0
      %3448 = vmatpush1.msra.mxu0 %v209
      %3449 = vmatprep.subr.mxu0 0.0
      %3450 = vmatpush1.msra.mxu0 %v210
      %3451 = vmatprep.subr.mxu0 0.0
      %3452 = vmatpush1.msra.mxu0 %v211
      %3453 = vmatprep.subr.mxu0 0.0
      %3454 = vmatpush1.msra.mxu0 %v212
      %3455 = vmatprep.subr.mxu0 0.0
      %3456 = vmatpush1.msra.mxu0 %v213
      %3457 = vmatprep.subr.mxu0 0.0
      %3458 = vmatpush1.msra.mxu0 %v214
      %3459 = vmatprep.subr.mxu0 0.0
      %3460 = vmatpush1.msra.mxu0 %v215
      %3461 = vmatprep.subr.mxu0 0.0
      %3462 = vmatpush1.msra.mxu0 %v216
      %3463 = vmatprep.subr.mxu0 0.0
      %3464 = vmatpush1.msra.mxu0 %v217
      %3465 = vmatprep.subr.mxu0 0.0
      %3466 = vmatpush1.msra.mxu0 0.0
      %3467 = vmatprep.subr.mxu0 0.0
      %3468 = vmatpush1.msra.mxu0 0.0
      %3469 = vmatprep.subr.mxu0 0.0
      %3470 = vmatpush1.msra.mxu0 0.0
      %3471 = vmatprep.subr.mxu0 0.0
      %3472 = vmatpush1.msra.mxu0 0.0
      %3473 = vmatprep.subr.mxu0 0.0
      %3474 = vmatpush1.msra.mxu0 0.0
      %3475 = vmatprep.subr.mxu0 0.0
      %3476 = vmatpush1.msra.mxu0 0.0
      %3477 = vmatprep.subr.mxu0 0.0
      %3478 = vmatpush1.msra.mxu0 0.0
      %3479 = vmatprep.subr.mxu0 0.0
      %3480 = vmatpush1.msra.mxu0 0.0
      %3481 = vmatprep.subr.mxu0 0.0
      %3482 = vmatpush1.msra.mxu0 0.0
      %3483 = vmatprep.subr.mxu0 0.0
      %3484 = vmatpush1.msra.mxu0 0.0
      %3485 = vmatprep.subr.mxu0 0.0
      %3486 = vmatpush1.msra.mxu0 0.0
      %3487 = vmatprep.subr.mxu0 0.0
      %3488 = vmatpush1.msra.mxu0 0.0
      %3489 = vmatprep.subr.mxu0 0.0
      %3490 = vmatpush1.msra.mxu0 0.0
      %3491 = vmatprep.subr.mxu0 0.0
      %3492 = vmatpush1.msra.mxu0 0.0
      %3493 = vmatprep.subr.mxu0 0.0
      %3494 = vmatpush1.msra.mxu0 0.0
      %3495 = vmatprep.subr.mxu0 0.0
      %3496 = vmatpush1.msra.mxu0 0.0
      %3497 = vmatprep.mubr.f32.mxu0 0.0
      %3498 = vmatmul.mubr.f32.gmra.mrb[0].mxu0 %v3429
      %v3499 = vpop.f32.mrb[0].mxu0
      %v3500 = vadd.f32 0.0, %v3499
      %v3501 = vpop.f32.mrb[0].mxu0
      %3502 = vmatprep.mubr.f32.mxu0 0.0
      %3503 = vmatmul.mubr.f32.gmra.mrb[0].mxu0 %v3430
      %v3504 = vpop.f32.mrb[0].mxu0
      %v3505 = vadd.f32 0.0, %v3504
      %v3506 = vpop.f32.mrb[0].mxu0
      %3507 = vmatprep.mubr.f32.mxu0 0.0
      %3508 = vmatmul.mubr.f32.gmra.mrb[0].mxu0 %v3431
      %v3509 = vpop.f32.mrb[0].mxu0
      %v3510 = vadd.f32 0.0, %v3509
      %v3511 = vpop.f32.mrb[0].mxu0
      %3512 = vmatprep.mubr.f32.mxu0 0.0
      %3513 = vmatmul.mubr.f32.gmra.mrb[0].mxu0 %v3432
      %v3514 = vpop.f32.mrb[0].mxu0
      %v3515 = vadd.f32 0.0, %v3514
      %v3516 = vpop.f32.mrb[0].mxu0
      %3517 = vdwg.mxu0
      %3518 = vrot.lane.b32.xlu0 %v3500, 1
      %v3519 = vpop.permute.xlu0 %3518
      %3520 = vrot.lane.b32.xlu0 %v3505, 1
      %v3521 = vpop.permute.xlu0 %3520
      %3522 = vrot.lane.b32.xlu0 %v3510, 1
      %v3523 = vpop.permute.xlu0 %3522
      %3524 = vrot.lane.b32.xlu0 %v3515, 1
      %v3525 = vpop.permute.xlu0 %3524
      %v3526 = vsel %vm452, %v3519, 0.0
      %v3527 = vsel %vm452, %v3521, 0.0
      %v3528 = vsel %vm452, %v3523, 0.0
      %v3529 = vsel %vm452, %v3525, 0.0
      %v3530 = vld [vmem:[%s1 + $0x74] sm:$0xf]
      %v3531 = vld [vmem:[%s1 + $0x78] sm:$0xf]
      %v3532 = vld [vmem:[%s1 + $0x7c] sm:$0xf]
      %v3533 = vld [vmem:[%s1 + $0x80] sm:$0xf]
      %v3534 = vld [vmem:[%s1 + $0x84] sm:$0xf]
      %v3535 = vld [vmem:[%s1 + $0x88] sm:$0xf]
      %v3536 = vld [vmem:[%s1 + $0x8c] sm:$0xf]
      %v3537 = vld [vmem:[%s1 + $0x90] sm:$0xf]
      %v3538 = vunpack.c.l.bf16 %v3530
      %v3539 = vunpack.c.l.bf16 %v3531
      %v3540 = vunpack.c.l.bf16 %v3532
      %v3541 = vunpack.c.l.bf16 %v3533
      %v3542 = vunpack.c.l.bf16 %v3534
      %v3543 = vunpack.c.l.bf16 %v3535
      %v3544 = vunpack.c.l.bf16 %v3536
      %v3545 = vunpack.c.l.bf16 %v3537
      %v3546 = vld [vmem:[%s1 + $0x94] sm:$0xf]
      %v3547 = vld [vmem:[%s1 + $0x98] sm:$0xf]
      %v3548 = vld [vmem:[%s1 + $0x9c] sm:$0xf]
      %v3549 = vld [vmem:[%s1 + $0xa0] sm:$0xf]
      %v3550 = vld [vmem:[%s1 + $0xa4] sm:$0xf]
      %v3551 = vld [vmem:[%s1 + $0xa8] sm:$0xf]
      %v3552 = vld [vmem:[%s1 + $0xac] sm:$0xf]
      %v3553 = vld [vmem:[%s1 + $0xb0] sm:$0xf]
      %v3554 = vunpack.c.l.bf16 %v3546
      %v3555 = vunpack.c.l.bf16 %v3547
      %v3556 = vunpack.c.l.bf16 %v3548
      %v3557 = vunpack.c.l.bf16 %v3549
      %v3558 = vunpack.c.l.bf16 %v3550
      %v3559 = vunpack.c.l.bf16 %v3551
      %v3560 = vunpack.c.l.bf16 %v3552
      %v3561 = vunpack.c.l.bf16 %v3553
      %v3563 = vsel %vm1499, %v3554, 0
      %v3566 = vsel %vm1499, %v3555, 0
      %v3569 = vsel %vm1499, %v3556, 0
      %v3572 = vsel %vm1499, %v3557, 0
      %v3575 = vsel %vm1499, %v3558, 0
      %v3578 = vsel %vm1499, %v3559, 0
      %v3581 = vsel %vm1499, %v3560, 0
      %v3584 = vsel %vm1499, %v3561, 0
      %3586 = vmatprep.subr.mxu0 0.0
      %3587 = vmatpush1.msra.mxu0 %v3500
      %3588 = vmatprep.subr.mxu0 0.0
      %3589 = vmatpush1.msra.mxu0 %v3505
      %3590 = vmatprep.subr.mxu0 0.0
      %3591 = vmatpush1.msra.mxu0 %v3510
      %3592 = vmatprep.subr.mxu0 0.0
      %3593 = vmatpush1.msra.mxu0 %v3515
      %3594 = vmatprep.subr.mxu0 0.0
      %3595 = vmatpush1.msra.mxu0 0.0
      %3596 = vmatprep.subr.mxu0 0.0
      %3597 = vmatpush1.msra.mxu0 0.0
      %3598 = vmatprep.subr.mxu0 0.0
      %3599 = vmatpush1.msra.mxu0 0.0
      %3600 = vmatprep.subr.mxu0 0.0
      %3601 = vmatpush1.msra.mxu0 0.0
      %3602 = vmatprep.subr.mxu0 0.0
      %3603 = vmatpush1.msra.mxu0 0.0
      %3604 = vmatprep.subr.mxu0 0.0
      %3605 = vmatpush1.msra.mxu0 0.0
      %3606 = vmatprep.subr.mxu0 0.0
      %3607 = vmatpush1.msra.mxu0 0.0
      %3608 = vmatprep.subr.mxu0 0.0
      %3609 = vmatpush1.msra.mxu0 0.0
      %3610 = vmatprep.subr.mxu0 0.0
      %3611 = vmatpush1.msra.mxu0 0.0
      %3612 = vmatprep.subr.mxu0 0.0
      %3613 = vmatpush1.msra.mxu0 0.0
      %3614 = vmatprep.subr.mxu0 0.0
      %3615 = vmatpush1.msra.mxu0 0.0
      %3616 = vmatprep.subr.mxu0 0.0
      %3617 = vmatpush1.msra.mxu0 0.0
      %3618 = vmatprep.subr.mxu0 0.0
      %3619 = vmatpush1.msra.mxu0 0.0
      %3620 = vmatprep.subr.mxu0 0.0
      %3621 = vmatpush1.msra.mxu0 0.0
      %3622 = vmatprep.subr.mxu0 0.0
      %3623 = vmatpush1.msra.mxu0 0.0
      %3624 = vmatprep.subr.mxu0 0.0
      %3625 = vmatpush1.msra.mxu0 0.0
      %3626 = vmatprep.subr.mxu0 0.0
      %3627 = vmatpush1.msra.mxu0 0.0
      %3628 = vmatprep.subr.mxu0 0.0
      %3629 = vmatpush1.msra.mxu0 0.0
      %3630 = vmatprep.subr.mxu0 0.0
      %3631 = vmatpush1.msra.mxu0 0.0
      %3632 = vmatprep.subr.mxu0 0.0
      %3633 = vmatpush1.msra.mxu0 0.0
      %3634 = vmatprep.subr.mxu0 0.0
      %3635 = vmatpush1.msra.mxu0 0.0
      %3636 = vmatprep.subr.mxu0 0.0
      %3637 = vmatpush1.msra.mxu0 0.0
      %3638 = vmatprep.subr.mxu0 0.0
      %3639 = vmatpush1.msra.mxu0 0.0
      %3640 = vmatprep.subr.mxu0 0.0
      %3641 = vmatpush1.msra.mxu0 0.0
      %3642 = vmatprep.subr.mxu0 0.0
      %3643 = vmatpush1.msra.mxu0 0.0
      %3644 = vmatprep.subr.mxu0 0.0
      %3645 = vmatpush1.msra.mxu0 0.0
      %3646 = vmatprep.subr.mxu0 0.0
      %3647 = vmatpush1.msra.mxu0 0.0
      %3648 = vmatprep.subr.mxu0 0.0
      %3649 = vmatpush1.msra.mxu0 0.0
      %3650 = vmatprep.mubr.f32.mxu0 0.0
      %3651 = vmatmul.mubr.f32.gmra.mrb[0].mxu0 %v3563
      %v3652 = vpop.f32.mrb[0].mxu0
      %v3653 = vadd.f32 0.0, %v3652
      %v3654 = vpop.f32.mrb[0].mxu0
      %3655 = vmatprep.mubr.f32.mxu0 0.0
      %3656 = vmatmul.mubr.f32.gmra.mrb[0].mxu0 %v3566
      %v3657 = vpop.f32.mrb[0].mxu0
      %v3658 = vadd.f32 0.0, %v3657
      %v3659 = vpop.f32.mrb[0].mxu0
      %3660 = vmatprep.mubr.f32.mxu0 0.0
      %3661 = vmatmul.mubr.f32.gmra.mrb[0].mxu0 %v3569
      %v3662 = vpop.f32.mrb[0].mxu0
      %v3663 = vadd.f32 0.0, %v3662
      %v3664 = vpop.f32.mrb[0].mxu0
      %3665 = vmatprep.mubr.f32.mxu0 0.0
      %3666 = vmatmul.mubr.f32.gmra.mrb[0].mxu0 %v3572
      %v3667 = vpop.f32.mrb[0].mxu0
      %v3668 = vadd.f32 0.0, %v3667
      %v3669 = vpop.f32.mrb[0].mxu0
      %3670 = vmatprep.mubr.f32.mxu0 0.0
      %3671 = vmatmul.mubr.f32.gmra.mrb[0].mxu0 %v3575
      %v3672 = vpop.f32.mrb[0].mxu0
      %v3673 = vadd.f32 0.0, %v3672
      %v3674 = vpop.f32.mrb[0].mxu0
      %3675 = vmatprep.mubr.f32.mxu0 0.0
      %3676 = vmatmul.mubr.f32.gmra.mrb[0].mxu0 %v3578
      %v3677 = vpop.f32.mrb[0].mxu0
      %v3678 = vadd.f32 0.0, %v3677
      %v3679 = vpop.f32.mrb[0].mxu0
      %3680 = vmatprep.mubr.f32.mxu0 0.0
      %3681 = vmatmul.mubr.f32.gmra.mrb[0].mxu0 %v3581
      %v3682 = vpop.f32.mrb[0].mxu0
      %v3683 = vadd.f32 0.0, %v3682
      %v3684 = vpop.f32.mrb[0].mxu0
      %3685 = vmatprep.mubr.f32.mxu0 0.0
      %3686 = vmatmul.mubr.f32.gmra.mrb[0].mxu0 %v3584
      %v3687 = vpop.f32.mrb[0].mxu0
      %v3688 = vadd.f32 0.0, %v3687
      %v3689 = vpop.f32.mrb[0].mxu0
      %3690 = vdwg.mxu0
      %v3692 = vsel %vm1499, %v3538, 0
      %v3695 = vsel %vm1499, %v3539, 0
      %v3698 = vsel %vm1499, %v3540, 0
      %v3701 = vsel %vm1499, %v3541, 0
      %v3704 = vsel %vm1499, %v3542, 0
      %v3707 = vsel %vm1499, %v3543, 0
      %v3710 = vsel %vm1499, %v3544, 0
      %v3713 = vsel %vm1499, %v3545, 0
      %3715 = vmatprep.subr.mxu0 0.0
      %3716 = vmatpush1.msra.mxu0 %v3526
      %3717 = vmatprep.subr.mxu0 0.0
      %3718 = vmatpush1.msra.mxu0 %v3527
      %3719 = vmatprep.subr.mxu0 0.0
      %3720 = vmatpush1.msra.mxu0 %v3528
      %3721 = vmatprep.subr.mxu0 0.0
      %3722 = vmatpush1.msra.mxu0 %v3529
      %3723 = vmatprep.subr.mxu0 0.0
      %3724 = vmatpush1.msra.mxu0 0.0
      %3725 = vmatprep.subr.mxu0 0.0
      %3726 = vmatpush1.msra.mxu0 0.0
      %3727 = vmatprep.subr.mxu0 0.0
      %3728 = vmatpush1.msra.mxu0 0.0
      %3729 = vmatprep.subr.mxu0 0.0
      %3730 = vmatpush1.msra.mxu0 0.0
      %3731 = vmatprep.subr.mxu0 0.0
      %3732 = vmatpush1.msra.mxu0 0.0
      %3733 = vmatprep.subr.mxu0 0.0
      %3734 = vmatpush1.msra.mxu0 0.0
      %3735 = vmatprep.subr.mxu0 0.0
      %3736 = vmatpush1.msra.mxu0 0.0
      %3737 = vmatprep.subr.mxu0 0.0
      %3738 = vmatpush1.msra.mxu0 0.0
      %3739 = vmatprep.subr.mxu0 0.0
      %3740 = vmatpush1.msra.mxu0 0.0
      %3741 = vmatprep.subr.mxu0 0.0
      %3742 = vmatpush1.msra.mxu0 0.0
      %3743 = vmatprep.subr.mxu0 0.0
      %3744 = vmatpush1.msra.mxu0 0.0
      %3745 = vmatprep.subr.mxu0 0.0
      %3746 = vmatpush1.msra.mxu0 0.0
      %3747 = vmatprep.subr.mxu0 0.0
      %3748 = vmatpush1.msra.mxu0 0.0
      %3749 = vmatprep.subr.mxu0 0.0
      %3750 = vmatpush1.msra.mxu0 0.0
      %3751 = vmatprep.subr.mxu0 0.0
      %3752 = vmatpush1.msra.mxu0 0.0
      %3753 = vmatprep.subr.mxu0 0.0
      %3754 = vmatpush1.msra.mxu0 0.0
      %3755 = vmatprep.subr.mxu0 0.0
      %3756 = vmatpush1.msra.mxu0 0.0
      %3757 = vmatprep.subr.mxu0 0.0
      %3758 = vmatpush1.msra.mxu0 0.0
      %3759 = vmatprep.subr.mxu0 0.0
      %3760 = vmatpush1.msra.mxu0 0.0
      %3761 = vmatprep.subr.mxu0 0.0
      %3762 = vmatpush1.msra.mxu0 0.0
      %3763 = vmatprep.subr.mxu0 0.0
      %3764 = vmatpush1.msra.mxu0 0.0
      %3765 = vmatprep.subr.mxu0 0.0
      %3766 = vmatpush1.msra.mxu0 0.0
      %3767 = vmatprep.subr.mxu0 0.0
      %3768 = vmatpush1.msra.mxu0 0.0
      %3769 = vmatprep.subr.mxu0 0.0
      %3770 = vmatpush1.msra.mxu0 0.0
      %3771 = vmatprep.subr.mxu0 0.0
      %3772 = vmatpush1.msra.mxu0 0.0
      %3773 = vmatprep.subr.mxu0 0.0
      %3774 = vmatpush1.msra.mxu0 0.0
      %3775 = vmatprep.subr.mxu0 0.0
      %3776 = vmatpush1.msra.mxu0 0.0
      %3777 = vmatprep.subr.mxu0 0.0
      %3778 = vmatpush1.msra.mxu0 0.0
      %3779 = vmatprep.mubr.f32.mxu0 0.0
      %3780 = vmatmul.mubr.f32.gmra.mrb[0].mxu0 %v3692
      %v3781 = vpop.f32.mrb[0].mxu0
      %v3782 = vadd.f32 %v3653, %v3781
      %v3783 = vpop.f32.mrb[0].mxu0
      %3784 = vmatprep.mubr.f32.mxu0 0.0
      %3785 = vmatmul.mubr.f32.gmra.mrb[0].mxu0 %v3695
      %v3786 = vpop.f32.mrb[0].mxu0
      %v3787 = vadd.f32 %v3658, %v3786
      %v3788 = vpop.f32.mrb[0].mxu0
      %3789 = vmatprep.mubr.f32.mxu0 0.0
      %3790 = vmatmul.mubr.f32.gmra.mrb[0].mxu0 %v3698
      %v3791 = vpop.f32.mrb[0].mxu0
      %v3792 = vadd.f32 %v3663, %v3791
      %v3793 = vpop.f32.mrb[0].mxu0
      %3794 = vmatprep.mubr.f32.mxu0 0.0
      %3795 = vmatmul.mubr.f32.gmra.mrb[0].mxu0 %v3701
      %v3796 = vpop.f32.mrb[0].mxu0
      %v3797 = vadd.f32 %v3668, %v3796
      %v3798 = vpop.f32.mrb[0].mxu0
      %3799 = vmatprep.mubr.f32.mxu0 0.0
      %3800 = vmatmul.mubr.f32.gmra.mrb[0].mxu0 %v3704
      %v3801 = vpop.f32.mrb[0].mxu0
      %v3802 = vadd.f32 %v3673, %v3801
      %v3803 = vpop.f32.mrb[0].mxu0
      %3804 = vmatprep.mubr.f32.mxu0 0.0
      %3805 = vmatmul.mubr.f32.gmra.mrb[0].mxu0 %v3707
      %v3806 = vpop.f32.mrb[0].mxu0
      %v3807 = vadd.f32 %v3678, %v3806
      %v3808 = vpop.f32.mrb[0].mxu0
      %3809 = vmatprep.mubr.f32.mxu0 0.0
      %3810 = vmatmul.mubr.f32.gmra.mrb[0].mxu0 %v3710
      %v3811 = vpop.f32.mrb[0].mxu0
      %v3812 = vadd.f32 %v3683, %v3811
      %v3813 = vpop.f32.mrb[0].mxu0
      %3814 = vmatprep.mubr.f32.mxu0 0.0
      %3815 = vmatmul.mubr.f32.gmra.mrb[0].mxu0 %v3713
      %v3816 = vpop.f32.mrb[0].mxu0
      %v3817 = vadd.f32 %v3688, %v3816
      %v3818 = vpop.f32.mrb[0].mxu0
      %3819 = vdwg.mxu0
      %3820 = vrot.lane.b32.xlu0 %v3500, 127
      %v3821 = vpop.permute.xlu0 %3820
      %3822 = vrot.lane.b32.xlu0 %v3505, 127
      %v3823 = vpop.permute.xlu0 %3822
      %3824 = vrot.lane.b32.xlu0 %v3510, 127
      %v3825 = vpop.permute.xlu0 %3824
      %3826 = vrot.lane.b32.xlu0 %v3515, 127
      %v3827 = vpop.permute.xlu0 %3826
      %v3828 = vsel %vm1768, %v3821, 0.0
      %v3829 = vsel %vm1768, %v3823, 0.0
      %v3830 = vsel %vm1768, %v3825, 0.0
      %v3831 = vsel %vm1768, %v3827, 0.0
      %v3832 = vld [vmem:[%s1 + $0xb4] sm:$0xf]
      %v3833 = vld [vmem:[%s1 + $0xb8] sm:$0xf]
      %v3834 = vld [vmem:[%s1 + $0xbc] sm:$0xf]
      %v3835 = vld [vmem:[%s1 + $0xc0] sm:$0xf]
      %v3836 = vld [vmem:[%s1 + $0xc4] sm:$0xf]
      %v3837 = vld [vmem:[%s1 + $0xc8] sm:$0xf]
      %v3838 = vld [vmem:[%s1 + $0xcc] sm:$0xf]
      %v3839 = vld [vmem:[%s1 + $0xd0] sm:$0xf]
      %v3840 = vunpack.c.l.bf16 %v3832
      %v3841 = vunpack.c.l.bf16 %v3833
      %v3842 = vunpack.c.l.bf16 %v3834
      %v3843 = vunpack.c.l.bf16 %v3835
      %v3844 = vunpack.c.l.bf16 %v3836
      %v3845 = vunpack.c.l.bf16 %v3837
      %v3846 = vunpack.c.l.bf16 %v3838
      %v3847 = vunpack.c.l.bf16 %v3839
      %v3849 = vsel %vm1499, %v3840, 0
      %v3852 = vsel %vm1499, %v3841, 0
      %v3855 = vsel %vm1499, %v3842, 0
      %v3858 = vsel %vm1499, %v3843, 0
      %v3861 = vsel %vm1499, %v3844, 0
      %v3864 = vsel %vm1499, %v3845, 0
      %v3867 = vsel %vm1499, %v3846, 0
      %v3870 = vsel %vm1499, %v3847, 0
      %3872 = vmatprep.subr.mxu0 0.0
      %3873 = vmatpush1.msra.mxu0 %v3828
      %3874 = vmatprep.subr.mxu0 0.0
      %3875 = vmatpush1.msra.mxu0 %v3829
      %3876 = vmatprep.subr.mxu0 0.0
      %3877 = vmatpush1.msra.mxu0 %v3830
      %3878 = vmatprep.subr.mxu0 0.0
      %3879 = vmatpush1.msra.mxu0 %v3831
      %3880 = vmatprep.subr.mxu0 0.0
      %3881 = vmatpush1.msra.mxu0 0.0
      %3882 = vmatprep.subr.mxu0 0.0
      %3883 = vmatpush1.msra.mxu0 0.0
      %3884 = vmatprep.subr.mxu0 0.0
      %3885 = vmatpush1.msra.mxu0 0.0
      %3886 = vmatprep.subr.mxu0 0.0
      %3887 = vmatpush1.msra.mxu0 0.0
      %3888 = vmatprep.subr.mxu0 0.0
      %3889 = vmatpush1.msra.mxu0 0.0
      %3890 = vmatprep.subr.mxu0 0.0
      %3891 = vmatpush1.msra.mxu0 0.0
      %3892 = vmatprep.subr.mxu0 0.0
      %3893 = vmatpush1.msra.mxu0 0.0
      %3894 = vmatprep.subr.mxu0 0.0
      %3895 = vmatpush1.msra.mxu0 0.0
      %3896 = vmatprep.subr.mxu0 0.0
      %3897 = vmatpush1.msra.mxu0 0.0
      %3898 = vmatprep.subr.mxu0 0.0
      %3899 = vmatpush1.msra.mxu0 0.0
      %3900 = vmatprep.subr.mxu0 0.0
      %3901 = vmatpush1.msra.mxu0 0.0
      %3902 = vmatprep.subr.mxu0 0.0
      %3903 = vmatpush1.msra.mxu0 0.0
      %3904 = vmatprep.subr.mxu0 0.0
      %3905 = vmatpush1.msra.mxu0 0.0
      %3906 = vmatprep.subr.mxu0 0.0
      %3907 = vmatpush1.msra.mxu0 0.0
      %3908 = vmatprep.subr.mxu0 0.0
      %3909 = vmatpush1.msra.mxu0 0.0
      %3910 = vmatprep.subr.mxu0 0.0
      %3911 = vmatpush1.msra.mxu0 0.0
      %3912 = vmatprep.subr.mxu0 0.0
      %3913 = vmatpush1.msra.mxu0 0.0
      %3914 = vmatprep.subr.mxu0 0.0
      %3915 = vmatpush1.msra.mxu0 0.0
      %3916 = vmatprep.subr.mxu0 0.0
      %3917 = vmatpush1.msra.mxu0 0.0
      %3918 = vmatprep.subr.mxu0 0.0
      %3919 = vmatpush1.msra.mxu0 0.0
      %3920 = vmatprep.subr.mxu0 0.0
      %3921 = vmatpush1.msra.mxu0 0.0
      %3922 = vmatprep.subr.mxu0 0.0
      %3923 = vmatpush1.msra.mxu0 0.0
      %3924 = vmatprep.subr.mxu0 0.0
      %3925 = vmatpush1.msra.mxu0 0.0
      %3926 = vmatprep.subr.mxu0 0.0
      %3927 = vmatpush1.msra.mxu0 0.0
      %3928 = vmatprep.subr.mxu0 0.0
      %3929 = vmatpush1.msra.mxu0 0.0
      %3930 = vmatprep.subr.mxu0 0.0
      %3931 = vmatpush1.msra.mxu0 0.0
      %3932 = vmatprep.subr.mxu0 0.0
      %3933 = vmatpush1.msra.mxu0 0.0
      %3934 = vmatprep.subr.mxu0 0.0
      %3935 = vmatpush1.msra.mxu0 0.0
      %3936 = vmatprep.mubr.f32.mxu0 0.0
      %3937 = vmatmul.mubr.f32.gmra.mrb[0].mxu0 %v3849
      %v3938 = vpop.f32.mrb[0].mxu0
      %v3939 = vadd.f32 0.0, %v3938
      %v3940 = vpop.f32.mrb[0].mxu0
      %3941 = vmatprep.mubr.f32.mxu0 0.0
      %3942 = vmatmul.mubr.f32.gmra.mrb[0].mxu0 %v3852
      %v3943 = vpop.f32.mrb[0].mxu0
      %v3944 = vadd.f32 0.0, %v3943
      %v3945 = vpop.f32.mrb[0].mxu0
      %3946 = vmatprep.mubr.f32.mxu0 0.0
      %3947 = vmatmul.mubr.f32.gmra.mrb[0].mxu0 %v3855
      %v3948 = vpop.f32.mrb[0].mxu0
      %v3949 = vadd.f32 0.0, %v3948
      %v3950 = vpop.f32.mrb[0].mxu0
      %3951 = vmatprep.mubr.f32.mxu0 0.0
      %3952 = vmatmul.mubr.f32.gmra.mrb[0].mxu0 %v3858
      %v3953 = vpop.f32.mrb[0].mxu0
      %v3954 = vadd.f32 0.0, %v3953
      %v3955 = vpop.f32.mrb[0].mxu0
      %3956 = vmatprep.mubr.f32.mxu0 0.0
      %3957 = vmatmul.mubr.f32.gmra.mrb[0].mxu0 %v3861
      %v3958 = vpop.f32.mrb[0].mxu0
      %v3959 = vadd.f32 0.0, %v3958
      %v3960 = vpop.f32.mrb[0].mxu0
      %3961 = vmatprep.mubr.f32.mxu0 0.0
      %3962 = vmatmul.mubr.f32.gmra.mrb[0].mxu0 %v3864
      %v3963 = vpop.f32.mrb[0].mxu0
      %v3964 = vadd.f32 0.0, %v3963
      %v3965 = vpop.f32.mrb[0].mxu0
      %3966 = vmatprep.mubr.f32.mxu0 0.0
      %3967 = vmatmul.mubr.f32.gmra.mrb[0].mxu0 %v3867
      %v3968 = vpop.f32.mrb[0].mxu0
      %v3969 = vadd.f32 0.0, %v3968
      %v3970 = vpop.f32.mrb[0].mxu0
      %3971 = vmatprep.mubr.f32.mxu0 0.0
      %3972 = vmatmul.mubr.f32.gmra.mrb[0].mxu0 %v3870
      %v3973 = vpop.f32.mrb[0].mxu0
      %v3974 = vadd.f32 0.0, %v3973
      %v3975 = vpop.f32.mrb[0].mxu0
      %3976 = vdwg.mxu0
      %v3977 = vadd.f32 %v3782, %v3939
      %v3978 = vadd.f32 %v3787, %v3944
      %v3979 = vadd.f32 %v3792, %v3949
      %v3980 = vadd.f32 %v3797, %v3954
      %v3981 = vadd.f32 %v3802, %v3959
      %v3982 = vadd.f32 %v3807, %v3964
      %v3983 = vadd.f32 %v3812, %v3969
      %v3984 = vadd.f32 %v3817, %v3974
      %v3985 = vld [vmem:[%s2] sm:$0xff]
      %v3986 = vld [vmem:[%s2 + $0x8] sm:$0xff]
      %v3987 = vld [vmem:[%s2 + $0x10] sm:$0xff]
      %v3988 = vld [vmem:[%s2 + $0x18] sm:$0xff]
      %v3989 = vld [vmem:[%s2 + $0x20] sm:$0xff]
      %v3990 = vld [vmem:[%s2 + $0x28] sm:$0xff]
      %v3991 = vld [vmem:[%s2 + $0x30] sm:$0xff]
      %v3992 = vld [vmem:[%s2 + $0x38] sm:$0xff]
      %3994 = vset.pattern.permute.xlu0 3
      %3995 = vperm.xlu0 %3994, %v3985
      %v3996 = vpop.permute.xlu0 %3995
      %3999 = vset.pattern.permute.xlu0 3
      %4000 = vperm.xlu0 %3999, %v3986
      %v4001 = vpop.permute.xlu0 %4000
      %4004 = vset.pattern.permute.xlu0 3
      %4005 = vperm.xlu0 %4004, %v3987
      %v4006 = vpop.permute.xlu0 %4005
      %4009 = vset.pattern.permute.xlu0 3
      %4010 = vperm.xlu0 %4009, %v3988
      %v4011 = vpop.permute.xlu0 %4010
      %4014 = vset.pattern.permute.xlu0 3
      %4015 = vperm.xlu0 %4014, %v3989
      %v4016 = vpop.permute.xlu0 %4015
      %4019 = vset.pattern.permute.xlu0 3
      %4020 = vperm.xlu0 %4019, %v3990
      %v4021 = vpop.permute.xlu0 %4020
      %4024 = vset.pattern.permute.xlu0 3
      %4025 = vperm.xlu0 %4024, %v3991
      %v4026 = vpop.permute.xlu0 %4025
      %4029 = vset.pattern.permute.xlu0 3
      %4030 = vperm.xlu0 %4029, %v3992
      %v4031 = vpop.permute.xlu0 %4030
      %v4033 = vadd.f32 %v3977, %v3996
      %v4034 = vadd.f32 %v3978, %v4001
      %v4035 = vadd.f32 %v3979, %v4006
      %v4036 = vadd.f32 %v3980, %v4011
      %v4037 = vadd.f32 %v3981, %v4016
      %v4038 = vadd.f32 %v3982, %v4021
      %v4039 = vadd.f32 %v3983, %v4026
      %v4040 = vadd.f32 %v3984, %v4031
      %v4041 = vmax.f32 %v4033, 0.0
      %v4042 = vmax.f32 %v4034, 0.0
      %v4043 = vmax.f32 %v4035, 0.0
      %v4044 = vmax.f32 %v4036, 0.0
      %v4045 = vmax.f32 %v4037, 0.0
      %v4046 = vmax.f32 %v4038, 0.0
      %v4047 = vmax.f32 %v4039, 0.0
      %v4048 = vmax.f32 %v4040, 0.0
      %4049 = vrot.lane.b32.xlu0 %v4041, 127
      %v4050 = vpop.permute.xlu0 %4049
      %4051 = vrot.lane.b32.xlu0 %v4042, 127
      %v4052 = vpop.permute.xlu0 %4051
      %4053 = vrot.lane.b32.xlu0 %v4043, 127
      %v4054 = vpop.permute.xlu0 %4053
      %4055 = vrot.lane.b32.xlu0 %v4044, 127
      %v4056 = vpop.permute.xlu0 %4055
      %4057 = vrot.lane.b32.xlu0 %v4045, 127
      %v4058 = vpop.permute.xlu0 %4057
      %4059 = vrot.lane.b32.xlu0 %v4046, 127
      %v4060 = vpop.permute.xlu0 %4059
      %4061 = vrot.lane.b32.xlu0 %v4047, 127
      %v4062 = vpop.permute.xlu0 %4061
      %4063 = vrot.lane.b32.xlu0 %v4048, 127
      %v4064 = vpop.permute.xlu0 %4063
      %v4065 = vmax.f32 %v4041, %v4050
      %v4066 = vmax.f32 %v4042, %v4052
      %v4067 = vmax.f32 %v4043, %v4054
      %v4068 = vmax.f32 %v4044, %v4056
      %v4069 = vmax.f32 %v4045, %v4058
      %v4070 = vmax.f32 %v4046, %v4060
      %v4071 = vmax.f32 %v4047, %v4062
      %v4072 = vmax.f32 %v4048, %v4064
      %4073 = vmatprep.subr.mxu0 0.0
      %4074 = vmatpush1.msra.mxu0 %v202
      %4075 = vmatprep.subr.mxu0 0.0
      %4076 = vmatpush1.msra.mxu0 %v203
      %4077 = vmatprep.subr.mxu0 0.0
      %4078 = vmatpush1.msra.mxu0 %v204
      %4079 = vmatprep.subr.mxu0 0.0
      %4080 = vmatpush1.msra.mxu0 %v205
      %4081 = vmatprep.subr.mxu0 0.0
      %4082 = vmatpush1.msra.mxu0 %v206
      %4083 = vmatprep.subr.mxu0 0.0
      %4084 = vmatpush1.msra.mxu0 %v207
      %4085 = vmatprep.subr.mxu0 0.0
      %4086 = vmatpush1.msra.mxu0 %v208
      %4087 = vmatprep.subr.mxu0 0.0
      %4088 = vmatpush1.msra.mxu0 %v209
      %4089 = vmatprep.subr.mxu0 0.0
      %4090 = vmatpush1.msra.mxu0 %v210
      %4091 = vmatprep.subr.mxu0 0.0
      %4092 = vmatpush1.msra.mxu0 %v211
      %4093 = vmatprep.subr.mxu0 0.0
      %4094 = vmatpush1.msra.mxu0 %v212
      %4095 = vmatprep.subr.mxu0 0.0
      %4096 = vmatpush1.msra.mxu0 %v213
      %4097 = vmatprep.subr.mxu0 0.0
      %4098 = vmatpush1.msra.mxu0 %v214
      %4099 = vmatprep.subr.mxu0 0.0
      %4100 = vmatpush1.msra.mxu0 %v215
      %4101 = vmatprep.subr.mxu0 0.0
      %4102 = vmatpush1.msra.mxu0 %v216
      %4103 = vmatprep.subr.mxu0 0.0
      %4104 = vmatpush1.msra.mxu0 %v217
      %4105 = vmatprep.subr.mxu0 0.0
      %4106 = vmatpush1.msra.mxu0 0.0
      %4107 = vmatprep.subr.mxu0 0.0
      %4108 = vmatpush1.msra.mxu0 0.0
      %4109 = vmatprep.subr.mxu0 0.0
      %4110 = vmatpush1.msra.mxu0 0.0
      %4111 = vmatprep.subr.mxu0 0.0
      %4112 = vmatpush1.msra.mxu0 0.0
      %4113 = vmatprep.subr.mxu0 0.0
      %4114 = vmatpush1.msra.mxu0 0.0
      %4115 = vmatprep.subr.mxu0 0.0
      %4116 = vmatpush1.msra.mxu0 0.0
      %4117 = vmatprep.subr.mxu0 0.0
      %4118 = vmatpush1.msra.mxu0 0.0
      %4119 = vmatprep.subr.mxu0 0.0
      %4120 = vmatpush1.msra.mxu0 0.0
      %4121 = vmatprep.subr.mxu0 0.0
      %4122 = vmatpush1.msra.mxu0 0.0
      %4123 = vmatprep.subr.mxu0 0.0
      %4124 = vmatpush1.msra.mxu0 0.0
      %4125 = vmatprep.subr.mxu0 0.0
      %4126 = vmatpush1.msra.mxu0 0.0
      %4127 = vmatprep.subr.mxu0 0.0
      %4128 = vmatpush1.msra.mxu0 0.0
      %4129 = vmatprep.subr.mxu0 0.0
      %4130 = vmatpush1.msra.mxu0 0.0
      %4131 = vmatprep.subr.mxu0 0.0
      %4132 = vmatpush1.msra.mxu0 0.0
      %4133 = vmatprep.subr.mxu0 0.0
      %4134 = vmatpush1.msra.mxu0 0.0
      %4135 = vmatprep.subr.mxu0 0.0
      %4136 = vmatpush1.msra.mxu0 0.0
      %4137 = vmatprep.mubr.f32.mxu0 0.0
      %4138 = vmatmul.mubr.f32.gmra.mrb[0].mxu0 %v4065
      %v4139 = vpop.f32.mrb[0].mxu0
      %v4140 = vadd.f32 0.0, %v4139
      %v4141 = vpop.f32.mrb[0].mxu0
      %4142 = vmatprep.mubr.f32.mxu0 0.0
      %4143 = vmatmul.mubr.f32.gmra.mrb[0].mxu0 %v4066
      %v4144 = vpop.f32.mrb[0].mxu0
      %v4145 = vadd.f32 0.0, %v4144
      %v4146 = vpop.f32.mrb[0].mxu0
      %4147 = vmatprep.mubr.f32.mxu0 0.0
      %4148 = vmatmul.mubr.f32.gmra.mrb[0].mxu0 %v4067
      %v4149 = vpop.f32.mrb[0].mxu0
      %v4150 = vadd.f32 0.0, %v4149
      %v4151 = vpop.f32.mrb[0].mxu0
      %4152 = vmatprep.mubr.f32.mxu0 0.0
      %4153 = vmatmul.mubr.f32.gmra.mrb[0].mxu0 %v4068
      %v4154 = vpop.f32.mrb[0].mxu0
      %v4155 = vadd.f32 0.0, %v4154
      %v4156 = vpop.f32.mrb[0].mxu0
      %4157 = vmatprep.mubr.f32.mxu0 0.0
      %4158 = vmatmul.mubr.f32.gmra.mrb[0].mxu0 %v4069
      %v4159 = vpop.f32.mrb[0].mxu0
      %v4160 = vadd.f32 0.0, %v4159
      %v4161 = vpop.f32.mrb[0].mxu0
      %4162 = vmatprep.mubr.f32.mxu0 0.0
      %4163 = vmatmul.mubr.f32.gmra.mrb[0].mxu0 %v4070
      %v4164 = vpop.f32.mrb[0].mxu0
      %v4165 = vadd.f32 0.0, %v4164
      %v4166 = vpop.f32.mrb[0].mxu0
      %4167 = vmatprep.mubr.f32.mxu0 0.0
      %4168 = vmatmul.mubr.f32.gmra.mrb[0].mxu0 %v4071
      %v4169 = vpop.f32.mrb[0].mxu0
      %v4170 = vadd.f32 0.0, %v4169
      %v4171 = vpop.f32.mrb[0].mxu0
      %4172 = vmatprep.mubr.f32.mxu0 0.0
      %4173 = vmatmul.mubr.f32.gmra.mrb[0].mxu0 %v4072
      %v4174 = vpop.f32.mrb[0].mxu0
      %v4175 = vadd.f32 0.0, %v4174
      %v4176 = vpop.f32.mrb[0].mxu0
      %4177 = vdwg.mxu0
      %v4178 = vsel %vm2113, %v4140, 0.0
      %v4179 = vsel %vm2113, %v4145, 0.0
      %v4180 = vsel %vm2113, %v4150, 0.0
      %v4181 = vsel %vm2113, %v4155, 0.0
      %v4182 = vsel %vm2113, %v4160, 0.0
      %v4183 = vsel %vm2113, %v4165, 0.0
      %v4184 = vsel %vm2113, %v4170, 0.0
      %v4185 = vsel %vm2113, %v4175, 0.0
      %4186 = vmatprep.subr.mxu0 0.0
      %4187 = vmatpush1.msra.mxu0 %v4178
      %4188 = vmatprep.subr.mxu0 0.0
      %4189 = vmatpush1.msra.mxu0 %v4179
      %4190 = vmatprep.subr.mxu0 0.0
      %4191 = vmatpush1.msra.mxu0 %v4180
      %4192 = vmatprep.subr.mxu0 0.0
      %4193 = vmatpush1.msra.mxu0 %v4181
      %4194 = vmatprep.subr.mxu0 0.0
      %4195 = vmatpush1.msra.mxu0 %v4182
      %4196 = vmatprep.subr.mxu0 0.0
      %4197 = vmatpush1.msra.mxu0 %v4183
      %4198 = vmatprep.subr.mxu0 0.0
      %4199 = vmatpush1.msra.mxu0 %v4184
      %4200 = vmatprep.subr.mxu0 0.0
      %4201 = vmatpush1.msra.mxu0 %v4185
      %4202 = vmatprep.subr.mxu0 0.0
      %4203 = vmatpush1.msra.mxu0 0.0
      %4204 = vmatprep.subr.mxu0 0.0
      %4205 = vmatpush1.msra.mxu0 0.0
      %4206 = vmatprep.subr.mxu0 0.0
      %4207 = vmatpush1.msra.mxu0 0.0
      %4208 = vmatprep.subr.mxu0 0.0
      %4209 = vmatpush1.msra.mxu0 0.0
      %4210 = vmatprep.subr.mxu0 0.0
      %4211 = vmatpush1.msra.mxu0 0.0
      %4212 = vmatprep.subr.mxu0 0.0
      %4213 = vmatpush1.msra.mxu0 0.0
      %4214 = vmatprep.subr.mxu0 0.0
      %4215 = vmatpush1.msra.mxu0 0.0
      %4216 = vmatprep.subr.mxu0 0.0
      %4217 = vmatpush1.msra.mxu0 0.0
      %4218 = vmatprep.subr.mxu0 0.0
      %4219 = vmatpush1.msra.mxu0 0.0
      %4220 = vmatprep.subr.mxu0 0.0
      %4221 = vmatpush1.msra.mxu0 0.0
      %4222 = vmatprep.subr.mxu0 0.0
      %4223 = vmatpush1.msra.mxu0 0.0
      %4224 = vmatprep.subr.mxu0 0.0
      %4225 = vmatpush1.msra.mxu0 0.0
      %4226 = vmatprep.subr.mxu0 0.0
      %4227 = vmatpush1.msra.mxu0 0.0
      %4228 = vmatprep.subr.mxu0 0.0
      %4229 = vmatpush1.msra.mxu0 0.0
      %4230 = vmatprep.subr.mxu0 0.0
      %4231 = vmatpush1.msra.mxu0 0.0
      %4232 = vmatprep.subr.mxu0 0.0
      %4233 = vmatpush1.msra.mxu0 0.0
      %4234 = vmatprep.subr.mxu0 0.0
      %4235 = vmatpush1.msra.mxu0 0.0
      %4236 = vmatprep.subr.mxu0 0.0
      %4237 = vmatpush1.msra.mxu0 0.0
      %4238 = vmatprep.subr.mxu0 0.0
      %4239 = vmatpush1.msra.mxu0 0.0
      %4240 = vmatprep.subr.mxu0 0.0
      %4241 = vmatpush1.msra.mxu0 0.0
      %4242 = vmatprep.subr.mxu0 0.0
      %4243 = vmatpush1.msra.mxu0 0.0
      %4244 = vmatprep.subr.mxu0 0.0
      %4245 = vmatpush1.msra.mxu0 0.0
      %4246 = vmatprep.subr.mxu0 0.0
      %4247 = vmatpush1.msra.mxu0 0.0
      %4248 = vmatprep.subr.mxu0 0.0
      %4249 = vmatpush1.msra.mxu0 0.0
      %4250 = vmatprep.mubr.f32.mxu0 0.0
      %4251 = vmatmul.mubr.f32.gmra.mrb[0].mxu0 %v2124
      %v4252 = vpop.f32.mrb[0].mxu0
      %v4253 = vadd.f32 0.0, %v4252
      %v4254 = vpop.f32.mrb[0].mxu0
      %4255 = vmatprep.mubr.f32.mxu0 0.0
      %4256 = vmatmul.mubr.f32.gmra.mrb[0].mxu0 %v2127
      %v4257 = vpop.f32.mrb[0].mxu0
      %v4258 = vadd.f32 0.0, %v4257
      %v4259 = vpop.f32.mrb[0].mxu0
      %4260 = vmatprep.mubr.f32.mxu0 0.0
      %4261 = vmatmul.mubr.f32.gmra.mrb[0].mxu0 %v2130
      %v4262 = vpop.f32.mrb[0].mxu0
      %v4263 = vadd.f32 0.0, %v4262
      %v4264 = vpop.f32.mrb[0].mxu0
      %4265 = vmatprep.mubr.f32.mxu0 0.0
      %4266 = vmatmul.mubr.f32.gmra.mrb[0].mxu0 %v2133
      %v4267 = vpop.f32.mrb[0].mxu0
      %v4268 = vadd.f32 0.0, %v4267
      %v4269 = vpop.f32.mrb[0].mxu0
      %4270 = vmatprep.mubr.f32.mxu0 0.0
      %4271 = vmatmul.mubr.f32.gmra.mrb[0].mxu0 %v2136
      %v4272 = vpop.f32.mrb[0].mxu0
      %v4273 = vadd.f32 0.0, %v4272
      %v4274 = vpop.f32.mrb[0].mxu0
      %4275 = vmatprep.mubr.f32.mxu0 0.0
      %4276 = vmatmul.mubr.f32.gmra.mrb[0].mxu0 %v2139
      %v4277 = vpop.f32.mrb[0].mxu0
      %v4278 = vadd.f32 0.0, %v4277
      %v4279 = vpop.f32.mrb[0].mxu0
      %4280 = vmatprep.mubr.f32.mxu0 0.0
      %4281 = vmatmul.mubr.f32.gmra.mrb[0].mxu0 %v2142
      %v4282 = vpop.f32.mrb[0].mxu0
      %v4283 = vadd.f32 0.0, %v4282
      %v4284 = vpop.f32.mrb[0].mxu0
      %4285 = vmatprep.mubr.f32.mxu0 0.0
      %4286 = vmatmul.mubr.f32.gmra.mrb[0].mxu0 %v2145
      %v4287 = vpop.f32.mrb[0].mxu0
      %v4288 = vadd.f32 0.0, %v4287
      %v4289 = vpop.f32.mrb[0].mxu0
      %4290 = vdwg.mxu0
      %4291 = vadd.xlane.f32.xlu0 %v4253
      %v4292 = vpop.xlane.xlu0 %4291
      %4293 = vadd.xlane.f32.xlu0 %v4258
      %v4294 = vpop.xlane.xlu0 %4293
      %4295 = vadd.xlane.f32.xlu0 %v4263
      %v4296 = vpop.xlane.xlu0 %4295
      %4297 = vadd.xlane.f32.xlu0 %v4268
      %v4298 = vpop.xlane.xlu0 %4297
      %4299 = vadd.xlane.f32.xlu0 %v4273
      %v4300 = vpop.xlane.xlu0 %4299
      %4301 = vadd.xlane.f32.xlu0 %v4278
      %v4302 = vpop.xlane.xlu0 %4301
      %4303 = vadd.xlane.f32.xlu0 %v4283
      %v4304 = vpop.xlane.xlu0 %4303
      %4305 = vadd.xlane.f32.xlu0 %v4288
      %v4306 = vpop.xlane.xlu0 %4305
      %v4307 = vmul.f32 %v4292, 0.125
      %v4308 = vmul.f32 %v4294, 0.125
      %v4309 = vmul.f32 %v4296, 0.125
      %v4310 = vmul.f32 %v4298, 0.125
      %v4311 = vmul.f32 %v4300, 0.125
      %v4312 = vmul.f32 %v4302, 0.125
      %v4313 = vmul.f32 %v4304, 0.125
      %v4314 = vmul.f32 %v4306, 0.125
      %v4315 = vadd.f32 %v4307, %v234
      %v4316 = vadd.f32 %v4308, %v235
      %v4317 = vadd.f32 %v4309, %v236
      %v4318 = vadd.f32 %v4310, %v237
      %v4319 = vadd.f32 %v4311, %v238
      %v4320 = vadd.f32 %v4312, %v239
      %v4321 = vadd.f32 %v4313, %v240
      %v4322 = vadd.f32 %v4314, %v241
      %4331 = vrot.lane.b32.xlu0 %v4315, 124
      %v4332 = vpop.permute.xlu0 %4331
      %4333 = vrot.lane.b32.xlu0 %v4316, 124
      %v4334 = vpop.permute.xlu0 %4333
      %4335 = vrot.lane.b32.xlu0 %v4317, 124
      %v4336 = vpop.permute.xlu0 %4335
      %4337 = vrot.lane.b32.xlu0 %v4318, 124
      %v4338 = vpop.permute.xlu0 %4337
      %4339 = vrot.lane.b32.xlu0 %v4319, 124
      %v4340 = vpop.permute.xlu0 %4339
      %4341 = vrot.lane.b32.xlu0 %v4320, 124
      %v4342 = vpop.permute.xlu0 %4341
      %4343 = vrot.lane.b32.xlu0 %v4321, 124
      %v4344 = vpop.permute.xlu0 %4343
      %4345 = vrot.lane.b32.xlu0 %v4322, 124
      %v4346 = vpop.permute.xlu0 %4345
      %s4355 = scalar_lea.vmem %s198, 64
      %4356 = vst.msk [vmem:[%s4355] sm:$0xff] %vm2316, %v4332
      %4357 = vst.msk [vmem:[%s4355 + $0x8] sm:$0xff] %vm2316, %v4334
      %4358 = vst.msk [vmem:[%s4355 + $0x10] sm:$0xff] %vm2316, %v4336
      %4359 = vst.msk [vmem:[%s4355 + $0x18] sm:$0xff] %vm2316, %v4338
      %4360 = vst.msk [vmem:[%s4355 + $0x20] sm:$0xff] %vm2316, %v4340
      %4361 = vst.msk [vmem:[%s4355 + $0x28] sm:$0xff] %vm2316, %v4342
      %4362 = vst.msk [vmem:[%s4355 + $0x30] sm:$0xff] %vm2316, %v4344
      %4363 = vst.msk [vmem:[%s4355 + $0x38] sm:$0xff] %vm2316, %v4346
      %s4364 = smul.u32 2, %s15
      %p4365 = scmp.lt.s32.totalorder %s4364, 3
      %s4366 = scalar_select %p4365, %s4364, 3
      %s4367 = smul.addr %s4366, 8
      %s4368 = smul.addr %s4367, 8
      %s4369 = scalar_lea.vmem %s4, %s4368
      // Predicated region
      $region37: #{tpu_custom_call.1} parent=35 // pred_check
        %p4370 = pneg %p122
      $region38: #{tpu_custom_call.1} parent=35 // pred_check_branch
        %4372 = sbr.rel (%p4370) target = $region40
      $region39: #{tpu_custom_call.1} parent=35 // pred_region
        %s4373 = smul.u32 2, %s15
      $region40: #{tpu_custom_call.1} parent=35 // pred_fallthru
        _
    $region36: #{tpu_custom_call.1} parent=5 // pred_fallthru
      _
    %p4374 = scmp.le.s32.totalorder 2, %s10
    // Predicated region
    $region41: #{tpu_custom_call.1} parent=5 // pred_check
      %p4375 = pneg %p4374
    $region42: #{tpu_custom_call.1} parent=5 // pred_check_branch
      %4377 = sbr.rel (%p4375) target = $region44
    $region43: #{tpu_custom_call.1} parent=5 // pred_region
      %s4378 = ssub.s32 %s10, 2
      // Predicated region
      $region45: #{tpu_custom_call.1} parent=43 // pred_check
        %p4379 = pneg %p128
      $region46: #{tpu_custom_call.1} parent=43 // pred_check_branch
        %4381 = sbr.rel (%p4379) target = $region48
      $region47: #{tpu_custom_call.1} parent=43 // pred_region
        %s4382 = smul.u32 2, %s16
        %p4383 = scmp.lt.s32.totalorder %s4382, 3
        %s4384 = scalar_select %p4383, %s4382, 3
        %s4385 = smul.addr %s4384, 8
        %s4386 = smul.addr %s4385, 8
        %s4387 = scalar_lea.vmem %s4, %s4386
      $region48: #{tpu_custom_call.1} parent=43 // pred_fallthru
        _
    $region44: #{tpu_custom_call.1} parent=5 // pred_fallthru
      _
  $region6: #{tpu_custom_call.1} parent=0 // loop_footer
    %s14 = sadd.s32 1, %s10
  $region7: #{tpu_custom_call.1} parent=0 // loop_footer_branch
    %9 = sbr.rel target = $region3
  $region8: #{tpu_custom_call.1} parent=0 // loop_exit
    _

</llo_original>
